<compile_context>
chip_gen: v5e
topology: v5e:2x2
jax: 0.10.0
libtpu: 0.0.40
codegen_flags: <defaults>
</compile_context>

<pallas_src>
import functools

import jax
import jax.numpy as jnp
from jax.experimental import pallas as pl
from jax.experimental.pallas import tpu as pltpu

# ----------------------------- config ("args") -------------------------------
NUM_POINT = 128
NUM_HEADS = 2
NUM_FEATURES = 16            # C = channels_per_head * heads
NUM_LAYERS = 2
HIDDEN = 32
NUM_CLASS = 40
CH_PER_HEAD = NUM_FEATURES // NUM_HEADS
VN_NEG_SLOPE = 0.2           # vector-neuron LeakyReLU slope (vnn default)
MLP_NEG_SLOPE = 0.01         # nn.LeakyReLU default
VN_EPS = 1e-6
BATCH_BLOCK = 2              # batch elements fused into one grid step
OUT_PAD = ((NUM_CLASS + 127) // 128) * 128   # lane-dense (unmasked) logit store


# ------------------------- in-kernel helper functions -------------------------
def _vn_lrelu_lanes(feat, d, slope, n, nblk):
    """VN-LeakyReLU on lane-concatenated activations.

    feat, d: [R, nblk*3*n] f32; each 3*n lane group is one batch element's xyz
    blocks.  All math stays on the VPU/EUP in f32; every slice is vreg-aligned.
    """
    outs = []
    for b in range(nblk):
        o = b * 3 * n
        fx, dx = feat[:, o:o + 3 * n], d[:, o:o + 3 * n]
        dotfd = (fx[:, :n] * dx[:, :n] + fx[:, n:2 * n] * dx[:, n:2 * n]
                 + fx[:, 2 * n:] * dx[:, 2 * n:])
        dsq = (dx[:, :n] * dx[:, :n] + dx[:, n:2 * n] * dx[:, n:2 * n]
               + dx[:, 2 * n:] * dx[:, 2 * n:])
        coeff = dotfd * pl.reciprocal(dsq + VN_EPS, approx=True)
        adj = jnp.where(dotfd >= 0.0, 0.0, coeff)                 # [R, n]
        adj3 = jnp.concatenate([adj, adj, adj], axis=1)           # [R, 3n]
        # slope*x + (1-slope)*(x - coeff*d)  ==  x - (1-slope)*adj*d
        outs.append(fx - (1.0 - slope) * adj3 * dx)
    return jnp.concatenate(outs, axis=1) if nblk > 1 else outs[0]


# ------------------------------ fused kernel ----------------------------------
def _fused_vn_transformer_kernel(pts_ref, w_tok_ref, w_qkv_ref, w_o_ref,
                                 w_ffn_ref, w_ffn2_ref, w_inv_ref, w_invd_ref,
                                 w1m_ref, b1_ref, w2_ref, b2_ref, out_ref,
                                 *, n, bb):
    C, H, Ch = NUM_FEATURES, NUM_HEADS, CH_PER_HEAD
    L = w_qkv_ref.shape[0]
    n3 = 3 * n
    bf16 = jnp.bfloat16
    ones_row = jnp.ones((1, n), jnp.float32)       # hoisted softmax-denominator row

    # ---- tokenizer: VNLinear(1 -> C) == outer-product broadcast (VPU) --------
    x = w_tok_ref[...] * pts_ref[0]                 # [C,1] * [1, bb*3n] -> [C, bb*3n]

    # ---- transformer encoder layers (weights & activations VMEM resident) ----
    for l in range(L):
        w_qkv, w_o = w_qkv_ref[l], w_o_ref[l]        # bf16 [3C,C], [C,C]
        w_ffn, w_ffn2 = w_ffn_ref[l], w_ffn2_ref[l]  # bf16 [2C,C], [C,C]

        # One matmul yields q|k|v for every head and every fused batch element.
        qkv = jnp.dot(w_qkv, x.astype(bf16), preferred_element_type=jnp.float32)

        att_blocks = []
        for b in range(bb):
            o = b * n3
            head_o = []
            for h in range(H):
                rq, rk, rv = h * Ch, C + h * Ch, 2 * C + h * Ch
                q_s = jnp.concatenate(
                    [qkv[rq:rq + Ch, o + p * n:o + (p + 1) * n] for p in range(3)],
                    axis=0).astype(bf16)                         # [3Ch, n]
                k_s = jnp.concatenate(
                    [qkv[rk:rk + Ch, o + p * n:o + (p + 1) * n] for p in range(3)],
                    axis=0).astype(bf16)
                v_s = jnp.concatenate(
                    [qkv[rv:rv + Ch, o + p * n:o + (p + 1) * n] for p in range(3)]
                    + [ones_row], axis=0).astype(bf16)           # [3Ch+1, n]

                # Frobenius scores (1/sqrt(3*Ch) already folded into Q weights).
                s = jax.lax.dot_general(q_s, k_s, (((0,), (0,)), ((), ())),
                                        preferred_element_type=jnp.float32)
                s = s - jnp.max(s, axis=-1, keepdims=True)
                e = jnp.exp(s)                                   # [n, n] f32
                # One matmul -> unnormalized context rows AND denominator row.
                r = jax.lax.dot_general(v_s, e.astype(bf16),
                                        (((1,), (1,)), ((), ())),
                                        preferred_element_type=jnp.float32)
                inv_den = pl.reciprocal(r[3 * Ch:3 * Ch + 1, :], approx=True)
                head_o.append(r[:3 * Ch, :] * inv_den)           # [3Ch, n] f32

            # back to the lane-concatenated [C, 3n] layout for this element
            att_blocks.append(jnp.concatenate(
                [jnp.concatenate([head_o[h][p * Ch:(p + 1) * Ch, :]
                                  for h in range(H)], axis=0)
                 for p in range(3)], axis=1))

        att = jnp.concatenate(att_blocks, axis=1) if bb > 1 else att_blocks[0]
        x = x + jnp.dot(w_o, att.astype(bf16), preferred_element_type=jnp.float32)

        # VN feed-forward (feat|dir stacked -> one matmul)
        ffn = jnp.dot(w_ffn, x.astype(bf16), preferred_element_type=jnp.float32)
        hh = _vn_lrelu_lanes(ffn[:C, :], ffn[C:, :], VN_NEG_SLOPE, n, bb)
        x = x + jnp.dot(w_ffn2, hh.astype(bf16), preferred_element_type=jnp.float32)

    # ---- invariant head + pooling + MLP (collapsed) ---------------------------
    xb = x.astype(bf16)
    f = jnp.dot(w_inv_ref[...], xb, preferred_element_type=jnp.float32)   # [3, bb*3n]
    d = jnp.dot(w_invd_ref[...], xb, preferred_element_type=jnp.float32)
    inv_act = _vn_lrelu_lanes(f, d, VN_NEG_SLOPE, n, bb).astype(bf16)

    inv_n = 1.0 / float(n)
    rows = []
    for b in range(bb):
        o = b * n3
        # vm[m, c] = sum_{p,n} inv[m, p, n] * x[c, p, n]   (pooled Gram features)
        vm = jax.lax.dot_general(inv_act[:, o:o + n3], xb[:, o:o + n3],
                                 (((1,), (1,)), ((), ())),
                                 preferred_element_type=jnp.float32) * inv_n  # [3, C]
        hid = b1_ref[...]
        for m in range(3):
            hid = hid + jnp.dot(vm[m:m + 1, :], w1m_ref[m],
                                preferred_element_type=jnp.float32)           # [1, hidden]
        hid = jnp.where(hid >= 0.0, hid, MLP_NEG_SLOPE * hid)                 # nn.LeakyReLU
        rows.append(jnp.dot(hid, w2_ref[...],
                            preferred_element_type=jnp.float32) + b2_ref[...])
    out_ref[0] = jnp.concatenate(rows, axis=0) if bb > 1 else rows[0]         # [bb, 128]


# ------------------------------- wrapper ---------------------------------------
def model_forward(x, pp, batch_block=BATCH_BLOCK):
    """x: [B, 1, 3, N] point cloud. pp: packed params. Returns (logits, None)."""
    B, N = x.shape[0], x.shape[-1]
    bb = batch_block if B % batch_block == 0 else 1
    G = B // bb
    width = bb * 3 * N
    # contiguous flatten: lanes ordered (element | xyz component | point)
    pts = x.reshape(G, 1, width)

    def wspec(arr):
        zeros = (0,) * arr.ndim
        return pl.BlockSpec(arr.shape, lambda g, _z=zeros: _z)

    weight_names = ["w_tok", "w_qkv", "w_o", "w_ffn", "w_ffn2", "w_inv",
                    "w_inv_dir", "w1_by_m", "b1", "w2", "b2"]
    weights = [pp[k] for k in weight_names]

    out = pl.pallas_call(
        functools.partial(_fused_vn_transformer_kernel, n=N, bb=bb),
        out_shape=jax.ShapeDtypeStruct((G, bb, OUT_PAD), jnp.float32),
        grid=(G,),
        in_specs=[pl.BlockSpec((1, 1, width), lambda g: (g, 0, 0))]
                 + [wspec(w) for w in weights],
        out_specs=pl.BlockSpec((1, bb, OUT_PAD), lambda g: (g, 0, 0)),
        compiler_params=pltpu.CompilerParams(dimension_semantics=("parallel",)),
    )(pts, *weights)

    logits = out.reshape(B, OUT_PAD)[:, :NUM_CLASS]
    trans_feat = None
    return logits, trans_feat


# ----------------------------- parameter init ----------------------------------
def _linear_w(key, out_dim, in_dim):
    bound = 1.0 / (in_dim ** 0.5)
    return jax.random.uniform(key, (out_dim, in_dim), jnp.float32, -bound, bound)


def init_params(key):
    keys = jax.random.split(key, 8 + 7 * NUM_LAYERS)
    it = iter(keys)
    C = NUM_FEATURES
    params = {"w_tok": _linear_w(next(it), C, 1)}
    layers = []
    for _ in range(NUM_LAYERS):
        layers.append({
            "wq": _linear_w(next(it), C, C),
            "wk": _linear_w(next(it), C, C),
            "wv": _linear_w(next(it), C, C),
            "wo": _linear_w(next(it), C, C),
            "w_ffn1": _linear_w(next(it), C, C),
            "w_ffn1_dir": _linear_w(next(it), C, C),
            "w_ffn2": _linear_w(next(it), C, C),
        })
    params["layers"] = layers
    params["w_inv"] = _linear_w(next(it), 3, C)
    params["w_inv_dir"] = _linear_w(next(it), 3, C)
    in_mlp = C * 3
    b1 = 1.0 / (in_mlp ** 0.5)
    params["w1"] = jax.random.uniform(next(it), (in_mlp, HIDDEN), jnp.float32, -b1, b1)
    params["b1"] = jax.random.uniform(next(it), (HIDDEN,), jnp.float32, -b1, b1)
    b2 = 1.0 / (HIDDEN ** 0.5)
    params["w2"] = jax.random.uniform(next(it), (HIDDEN, NUM_CLASS), jnp.float32, -b2, b2)
    params["b2"] = jax.random.uniform(next(it), (NUM_CLASS,), jnp.float32, -b2, b2)
    return params


def pack_params(params):
    """One-time packing (outside jit): stack QKV / feat+dir, fold the attention
    scale into Q, pre-cast MXU weights to bf16, pad the classifier to 128 lanes."""
    C = NUM_FEATURES
    bf16 = jnp.bfloat16
    scale = 1.0 / float(3 * CH_PER_HEAD) ** 0.5
    w_qkv = jnp.stack([jnp.concatenate([lp["wq"] * scale, lp["wk"], lp["wv"]], axis=0)
                       for lp in params["layers"]])                      # [L, 3C, C]
    w_o = jnp.stack([lp["wo"] for lp in params["layers"]])               # [L, C, C]
    w_ffn = jnp.stack([jnp.concatenate([lp["w_ffn1"], lp["w_ffn1_dir"]], axis=0)
                       for lp in params["layers"]])                      # [L, 2C, C]
    w_ffn2 = jnp.stack([lp["w_ffn2"] for lp in params["layers"]])        # [L, C, C]
    # w1[c*3+m, j] -> w1_by_m[m, c, j]   (matches torch.flatten(c, m) ordering)
    w1_by_m = params["w1"].reshape(C, 3, HIDDEN).transpose(1, 0, 2)
    pad = OUT_PAD - NUM_CLASS
    return {
        "w_tok": params["w_tok"],                               # [C, 1]  f32 (VPU)
        "w_qkv": w_qkv.astype(bf16),
        "w_o": w_o.astype(bf16),
        "w_ffn": w_ffn.astype(bf16),
        "w_ffn2": w_ffn2.astype(bf16),
        "w_inv": params["w_inv"].astype(bf16),                  # [3, C]
        "w_inv_dir": params["w_inv_dir"].astype(bf16),          # [3, C]
        "w1_by_m": w1_by_m,                                     # [3, C, hidden] f32
        "b1": params["b1"].reshape(1, HIDDEN),
        "w2": jnp.pad(params["w2"], ((0, 0), (0, pad))),        # [hidden, 128]
        "b2": jnp.pad(params["b2"].reshape(1, NUM_CLASS), ((0, 0), (0, pad))),
    }


# --------------------------- pure-JAX f32 reference -----------------------------
def _ref_vn_lrelu(feat, d, slope):
    dotfd = jnp.sum(feat * d, axis=2, keepdims=True)
    dsq = jnp.sum(d * d, axis=2, keepdims=True)
    x_dir = jnp.where(dotfd >= 0.0, feat, feat - (dotfd / (dsq + VN_EPS)) * d)
    return slope * feat + (1.0 - slope) * x_dir


def reference_forward(x, params):
    """Pure-JAX f32 reference of the same forward pass (validation only)."""
    C, H, Ch, N = NUM_FEATURES, NUM_HEADS, CH_PER_HEAD, x.shape[-1]
    scale = 1.0 / float(3 * Ch) ** 0.5
    xc = jnp.einsum('ci,bipn->bcpn', params["w_tok"], x)        # [B, C, 3, N]
    for lp in params["layers"]:
        q = jnp.einsum('oc,bcpn->bopn', lp["wq"], xc)
        k = jnp.einsum('oc,bcpn->bopn', lp["wk"], xc)
        v = jnp.einsum('oc,bcpn->bopn', lp["wv"], xc)
        heads = []
        for h in range(H):
            sl = slice(h * Ch, (h + 1) * Ch)
            s = jnp.einsum('bcpi,bcpj->bij', q[:, sl], k[:, sl]) * scale
            a = jax.nn.softmax(s, axis=-1)
            heads.append(jnp.einsum('bcpj,bij->bcpi', v[:, sl], a))
        att = jnp.concatenate(heads, axis=1)
        xc = xc + jnp.einsum('oc,bcpn->bopn', lp["wo"], att)
        f1 = jnp.einsum('oc,bcpn->bopn', lp["w_ffn1"], xc)
        d1 = jnp.einsum('oc,bcpn->bopn', lp["w_ffn1_dir"], xc)
        hh = _ref_vn_lrelu(f1, d1, VN_NEG_SLOPE)
        xc = xc + jnp.einsum('oc,bcpn->bopn', lp["w_ffn2"], hh)
    f = jnp.einsum('mc,bcpn->bmpn', params["w_inv"], xc)
    d = jnp.einsum('mc,bcpn->bmpn', params["w_inv_dir"], xc)
    inv = _ref_vn_lrelu(f, d, VN_NEG_SLOPE)
    feat = jnp.einsum('bcpn,bmpn->bcm', xc, inv) / N            # mean over points
    flat = feat.reshape(x.shape[0], C * 3)
    hid = flat @ params["w1"] + params["b1"]
    hid = jnp.where(hid >= 0.0, hid, MLP_NEG_SLOPE * hid)
    return hid @ params["w2"] + params["b2"]


# ---------------------------------- main ----------------------------------------
if __name__ == "__main__":
    key = jax.random.PRNGKey(0)
    k_x, k_p = jax.random.split(key)
    B = 4
    x = jax.random.normal(k_x, (B, 1, 3, NUM_POINT), jnp.float32)
    params = init_params(k_p)
    packed = pack_params(params)

    fwd = jax.jit(model_forward)
    logits, trans_feat = fwd(x, packed)
    jax.block_until_ready(logits)
    assert logits.shape == (B, NUM_CLASS)
    assert trans_feat is None

    # validate the bf16-MXU / approx-reciprocal kernel against a pure-JAX f32 ref
    ref = reference_forward(x, params)
    err = float(jnp.max(jnp.abs(logits - ref)))
    tol = 0.1 + 0.1 * float(jnp.max(jnp.abs(ref)))
    assert err <= tol, f"kernel/reference mismatch: max_abs_err={err} tol={tol}"
    print("KERNEL_OK")
</pallas_src>

<mosaic_0001>
module attributes {stable_mosaic.version = 11 : i64} {
  func.func @_fused_vn_transformer_kernel(%arg0: i32, %arg1: memref<1x1x768xf32, #tpu.memory_space<vmem>>, %arg2: memref<16x1xf32, #tpu.memory_space<vmem>>, %arg3: memref<2x48x16xbf16, #tpu.memory_space<vmem>>, %arg4: memref<2x16x16xbf16, #tpu.memory_space<vmem>>, %arg5: memref<2x32x16xbf16, #tpu.memory_space<vmem>>, %arg6: memref<2x16x16xbf16, #tpu.memory_space<vmem>>, %arg7: memref<3x16xbf16, #tpu.memory_space<vmem>>, %arg8: memref<3x16xbf16, #tpu.memory_space<vmem>>, %arg9: memref<3x16x32xf32, #tpu.memory_space<vmem>>, %arg10: memref<1x32xf32, #tpu.memory_space<vmem>>, %arg11: memref<32x128xf32, #tpu.memory_space<vmem>>, %arg12: memref<1x128xf32, #tpu.memory_space<vmem>>, %arg13: memref<1x2x128xf32, #tpu.memory_space<vmem>>) attributes {dimension_semantics = [#tpu.dimension_semantics<parallel>], iteration_bounds = array<i64: 2>, scalar_prefetch = 0 : i64, scratch_operands = 0 : i64, tpu.core_type = #tpu.core_type<tc>, window_params = [{transform_indices = @transform_0, window_bounds = array<i64: 1, 1, 768>}, {pipeline_mode = #tpu.pipeline_mode<synchronous>, transform_indices = @transform_1, window_bounds = array<i64: 16, 1>}, {pipeline_mode = #tpu.pipeline_mode<synchronous>, transform_indices = @transform_2, window_bounds = array<i64: 2, 48, 16>}, {pipeline_mode = #tpu.pipeline_mode<synchronous>, transform_indices = @transform_3, window_bounds = array<i64: 2, 16, 16>}, {pipeline_mode = #tpu.pipeline_mode<synchronous>, transform_indices = @transform_4, window_bounds = array<i64: 2, 32, 16>}, {pipeline_mode = #tpu.pipeline_mode<synchronous>, transform_indices = @transform_5, window_bounds = array<i64: 2, 16, 16>}, {pipeline_mode = #tpu.pipeline_mode<synchronous>, transform_indices = @transform_6, window_bounds = array<i64: 3, 16>}, {pipeline_mode = #tpu.pipeline_mode<synchronous>, transform_indices = @transform_7, window_bounds = array<i64: 3, 16>}, {pipeline_mode = #tpu.pipeline_mode<synchronous>, transform_indices = @transform_8, window_bounds = array<i64: 3, 16, 32>}, {pipeline_mode = #tpu.pipeline_mode<synchronous>, transform_indices = @transform_9, window_bounds = array<i64: 1, 32>}, {pipeline_mode = #tpu.pipeline_mode<synchronous>, transform_indices = @transform_10, window_bounds = array<i64: 32, 128>}, {pipeline_mode = #tpu.pipeline_mode<synchronous>, transform_indices = @transform_11, window_bounds = array<i64: 1, 128>}, {transform_indices = @transform_12, window_bounds = array<i64: 1, 2, 128>}]} {
    %cst = arith.constant 1.000000e+00 : f32
    %0 = vector.broadcast %cst : f32 to vector<1x128xf32>
    %c0 = arith.constant 0 : index
    %c0_0 = arith.constant 0 : index
    %1 = vector.load %arg2[%c0, %c0_0] : memref<16x1xf32, #tpu.memory_space<vmem>>, vector<16x1xf32>
    %c0_1 = arith.constant 0 : index
    %c0_2 = arith.constant 0 : index
    %c0_3 = arith.constant 0 : index
    %2 = vector.load %arg1[%c0_1, %c0_2, %c0_3] : memref<1x1x768xf32, #tpu.memory_space<vmem>>, vector<1x1x768xf32>
    %3 = vector.shape_cast %2 : vector<1x1x768xf32> to vector<1x768xf32>
    %4 = vector.broadcast %1 : vector<16x1xf32> to vector<16x768xf32>
    %5 = vector.broadcast %3 : vector<1x768xf32> to vector<16x768xf32>
    %6 = arith.mulf %4, %5 : vector<16x768xf32>
    %c0_4 = arith.constant 0 : index
    %c0_5 = arith.constant 0 : index
    %c0_6 = arith.constant 0 : index
    %7 = vector.load %arg3[%c0_4, %c0_5, %c0_6] : memref<2x48x16xbf16, #tpu.memory_space<vmem>>, vector<1x48x16xbf16>
    %8 = vector.shape_cast %7 : vector<1x48x16xbf16> to vector<48x16xbf16>
    %c0_7 = arith.constant 0 : index
    %c0_8 = arith.constant 0 : index
    %c0_9 = arith.constant 0 : index
    %9 = vector.load %arg4[%c0_7, %c0_8, %c0_9] : memref<2x16x16xbf16, #tpu.memory_space<vmem>>, vector<1x16x16xbf16>
    %10 = vector.shape_cast %9 : vector<1x16x16xbf16> to vector<16x16xbf16>
    %c0_10 = arith.constant 0 : index
    %c0_11 = arith.constant 0 : index
    %c0_12 = arith.constant 0 : index
    %11 = vector.load %arg5[%c0_10, %c0_11, %c0_12] : memref<2x32x16xbf16, #tpu.memory_space<vmem>>, vector<1x32x16xbf16>
    %12 = vector.shape_cast %11 : vector<1x32x16xbf16> to vector<32x16xbf16>
    %c0_13 = arith.constant 0 : index
    %c0_14 = arith.constant 0 : index
    %c0_15 = arith.constant 0 : index
    %13 = vector.load %arg6[%c0_13, %c0_14, %c0_15] : memref<2x16x16xbf16, #tpu.memory_space<vmem>>, vector<1x16x16xbf16>
    %14 = vector.shape_cast %13 : vector<1x16x16xbf16> to vector<16x16xbf16>
    %15 = arith.truncf %6 : vector<16x768xf32> to vector<16x768xbf16>
    %cst_16 = arith.constant dense<0.000000e+00> : vector<48x768xf32>
    %16 = tpu.matmul %8, %15, %cst_16 {dimension_numbers = #tpu.dot_dimension_numbers<[1], [0], [0], [1], [0, 0, 1, 1], [], []>} : vector<48x16xbf16>, vector<16x768xbf16>, vector<48x768xf32> -> vector<48x768xf32>
    %17 = vector.extract_strided_slice %16 {offsets = [0, 0], sizes = [8, 128], strides = [1, 1]} : vector<48x768xf32> to vector<8x128xf32>
    %18 = vector.extract_strided_slice %16 {offsets = [0, 128], sizes = [8, 128], strides = [1, 1]} : vector<48x768xf32> to vector<8x128xf32>
    %19 = vector.extract_strided_slice %16 {offsets = [0, 256], sizes = [8, 128], strides = [1, 1]} : vector<48x768xf32> to vector<8x128xf32>
    %20 = tpu.concatenate %17, %18, %19 in 0 : vector<8x128xf32>, vector<8x128xf32>, vector<8x128xf32> -> vector<24x128xf32>
    %21 = arith.truncf %20 : vector<24x128xf32> to vector<24x128xbf16>
    %22 = vector.extract_strided_slice %16 {offsets = [16, 0], sizes = [8, 128], strides = [1, 1]} : vector<48x768xf32> to vector<8x128xf32>
    %23 = vector.extract_strided_slice %16 {offsets = [16, 128], sizes = [8, 128], strides = [1, 1]} : vector<48x768xf32> to vector<8x128xf32>
    %24 = vector.extract_strided_slice %16 {offsets = [16, 256], sizes = [8, 128], strides = [1, 1]} : vector<48x768xf32> to vector<8x128xf32>
    %25 = tpu.concatenate %22, %23, %24 in 0 : vector<8x128xf32>, vector<8x128xf32>, vector<8x128xf32> -> vector<24x128xf32>
    %26 = arith.truncf %25 : vector<24x128xf32> to vector<24x128xbf16>
    %27 = vector.extract_strided_slice %16 {offsets = [32, 0], sizes = [8, 128], strides = [1, 1]} : vector<48x768xf32> to vector<8x128xf32>
    %28 = vector.extract_strided_slice %16 {offsets = [32, 128], sizes = [8, 128], strides = [1, 1]} : vector<48x768xf32> to vector<8x128xf32>
    %29 = vector.extract_strided_slice %16 {offsets = [32, 256], sizes = [8, 128], strides = [1, 1]} : vector<48x768xf32> to vector<8x128xf32>
    %30 = tpu.concatenate %27, %28, %29, %0 in 0 : vector<8x128xf32>, vector<8x128xf32>, vector<8x128xf32>, vector<1x128xf32> -> vector<25x128xf32>
    %31 = arith.truncf %30 : vector<25x128xf32> to vector<25x128xbf16>
    %cst_17 = arith.constant dense<0.000000e+00> : vector<128x128xf32>
    %32 = tpu.matmul %21, %26, %cst_17 {dimension_numbers = #tpu.dot_dimension_numbers<[0], [0], [1], [1], [0, 1, 1, 1], [], []>} : vector<24x128xbf16>, vector<24x128xbf16>, vector<128x128xf32> -> vector<128x128xf32>
    %cst_18 = arith.constant dense<0xFF800000> : vector<128xf32>
    %33 = vector.multi_reduction <maximumf>, %32, %cst_18 [1] : vector<128x128xf32> to vector<128xf32>
    %34 = vector.shape_cast %33 : vector<128xf32> to vector<128x1xf32>
    %35 = vector.broadcast %34 : vector<128x1xf32> to vector<128x128xf32>
    %36 = arith.subf %32, %35 : vector<128x128xf32>
    %37 = math.exp %36 : vector<128x128xf32>
    %38 = arith.truncf %37 : vector<128x128xf32> to vector<128x128xbf16>
    %cst_19 = arith.constant dense<0.000000e+00> : vector<25x128xf32>
    %39 = tpu.matmul %31, %38, %cst_19 {dimension_numbers = #tpu.dot_dimension_numbers<[1], [1], [0], [0], [0, 0, 1, 0], [], []>} : vector<25x128xbf16>, vector<128x128xbf16>, vector<25x128xf32> -> vector<25x128xf32>
    %40 = vector.extract_strided_slice %39 {offsets = [24, 0], sizes = [1, 128], strides = [1, 1]} : vector<25x128xf32> to vector<1x128xf32>
    %41 = tpu.reciprocal %40 {approx = true} : vector<1x128xf32> -> vector<1x128xf32>
    %42 = vector.extract_strided_slice %39 {offsets = [0, 0], sizes = [24, 128], strides = [1, 1]} : vector<25x128xf32> to vector<24x128xf32>
    %43 = vector.broadcast %41 : vector<1x128xf32> to vector<24x128xf32>
    %44 = arith.mulf %42, %43 : vector<24x128xf32>
    %45 = vector.extract_strided_slice %16 {offsets = [8, 0], sizes = [8, 128], strides = [1, 1]} : vector<48x768xf32> to vector<8x128xf32>
    %46 = vector.extract_strided_slice %16 {offsets = [8, 128], sizes = [8, 128], strides = [1, 1]} : vector<48x768xf32> to vector<8x128xf32>
    %47 = vector.extract_strided_slice %16 {offsets = [8, 256], sizes = [8, 128], strides = [1, 1]} : vector<48x768xf32> to vector<8x128xf32>
    %48 = tpu.concatenate %45, %46, %47 in 0 : vector<8x128xf32>, vector<8x128xf32>, vector<8x128xf32> -> vector<24x128xf32>
    %49 = arith.truncf %48 : vector<24x128xf32> to vector<24x128xbf16>
    %50 = vector.extract_strided_slice %16 {offsets = [24, 0], sizes = [8, 128], strides = [1, 1]} : vector<48x768xf32> to vector<8x128xf32>
    %51 = vector.extract_strided_slice %16 {offsets = [24, 128], sizes = [8, 128], strides = [1, 1]} : vector<48x768xf32> to vector<8x128xf32>
    %52 = vector.extract_strided_slice %16 {offsets = [24, 256], sizes = [8, 128], strides = [1, 1]} : vector<48x768xf32> to vector<8x128xf32>
    %53 = tpu.concatenate %50, %51, %52 in 0 : vector<8x128xf32>, vector<8x128xf32>, vector<8x128xf32> -> vector<24x128xf32>
    %54 = arith.truncf %53 : vector<24x128xf32> to vector<24x128xbf16>
    %55 = vector.extract_strided_slice %16 {offsets = [40, 0], sizes = [8, 128], strides = [1, 1]} : vector<48x768xf32> to vector<8x128xf32>
    %56 = vector.extract_strided_slice %16 {offsets = [40, 128], sizes = [8, 128], strides = [1, 1]} : vector<48x768xf32> to vector<8x128xf32>
    %57 = vector.extract_strided_slice %16 {offsets = [40, 256], sizes = [8, 128], strides = [1, 1]} : vector<48x768xf32> to vector<8x128xf32>
    %58 = tpu.concatenate %55, %56, %57, %0 in 0 : vector<8x128xf32>, vector<8x128xf32>, vector<8x128xf32>, vector<1x128xf32> -> vector<25x128xf32>
    %59 = arith.truncf %58 : vector<25x128xf32> to vector<25x128xbf16>
    %cst_20 = arith.constant dense<0.000000e+00> : vector<128x128xf32>
    %60 = tpu.matmul %49, %54, %cst_20 {dimension_numbers = #tpu.dot_dimension_numbers<[0], [0], [1], [1], [0, 1, 1, 1], [], []>} : vector<24x128xbf16>, vector<24x128xbf16>, vector<128x128xf32> -> vector<128x128xf32>
    %cst_21 = arith.constant dense<0xFF800000> : vector<128xf32>
    %61 = vector.multi_reduction <maximumf>, %60, %cst_21 [1] : vector<128x128xf32> to vector<128xf32>
    %62 = vector.shape_cast %61 : vector<128xf32> to vector<128x1xf32>
    %63 = vector.broadcast %62 : vector<128x1xf32> to vector<128x128xf32>
    %64 = arith.subf %60, %63 : vector<128x128xf32>
    %65 = math.exp %64 : vector<128x128xf32>
    %66 = arith.truncf %65 : vector<128x128xf32> to vector<128x128xbf16>
    %cst_22 = arith.constant dense<0.000000e+00> : vector<25x128xf32>
    %67 = tpu.matmul %59, %66, %cst_22 {dimension_numbers = #tpu.dot_dimension_numbers<[1], [1], [0], [0], [0, 0, 1, 0], [], []>} : vector<25x128xbf16>, vector<128x128xbf16>, vector<25x128xf32> -> vector<25x128xf32>
    %68 = vector.extract_strided_slice %67 {offsets = [24, 0], sizes = [1, 128], strides = [1, 1]} : vector<25x128xf32> to vector<1x128xf32>
    %69 = tpu.reciprocal %68 {approx = true} : vector<1x128xf32> -> vector<1x128xf32>
    %70 = vector.extract_strided_slice %67 {offsets = [0, 0], sizes = [24, 128], strides = [1, 1]} : vector<25x128xf32> to vector<24x128xf32>
    %71 = vector.broadcast %69 : vector<1x128xf32> to vector<24x128xf32>
    %72 = arith.mulf %70, %71 : vector<24x128xf32>
    %73 = vector.extract_strided_slice %44 {offsets = [0, 0], sizes = [8, 128], strides = [1, 1]} : vector<24x128xf32> to vector<8x128xf32>
    %74 = vector.extract_strided_slice %72 {offsets = [0, 0], sizes = [8, 128], strides = [1, 1]} : vector<24x128xf32> to vector<8x128xf32>
    %75 = tpu.concatenate %73, %74 in 0 : vector<8x128xf32>, vector<8x128xf32> -> vector<16x128xf32>
    %76 = vector.extract_strided_slice %44 {offsets = [8, 0], sizes = [8, 128], strides = [1, 1]} : vector<24x128xf32> to vector<8x128xf32>
    %77 = vector.extract_strided_slice %72 {offsets = [8, 0], sizes = [8, 128], strides = [1, 1]} : vector<24x128xf32> to vector<8x128xf32>
    %78 = tpu.concatenate %76, %77 in 0 : vector<8x128xf32>, vector<8x128xf32> -> vector<16x128xf32>
    %79 = vector.extract_strided_slice %44 {offsets = [16, 0], sizes = [8, 128], strides = [1, 1]} : vector<24x128xf32> to vector<8x128xf32>
    %80 = vector.extract_strided_slice %72 {offsets = [16, 0], sizes = [8, 128], strides = [1, 1]} : vector<24x128xf32> to vector<8x128xf32>
    %81 = tpu.concatenate %79, %80 in 0 : vector<8x128xf32>, vector<8x128xf32> -> vector<16x128xf32>
    %82 = tpu.concatenate %75, %78, %81 in 1 : vector<16x128xf32>, vector<16x128xf32>, vector<16x128xf32> -> vector<16x384xf32>
    %83 = vector.extract_strided_slice %16 {offsets = [0, 384], sizes = [8, 128], strides = [1, 1]} : vector<48x768xf32> to vector<8x128xf32>
    %84 = vector.extract_strided_slice %16 {offsets = [0, 512], sizes = [8, 128], strides = [1, 1]} : vector<48x768xf32> to vector<8x128xf32>
    %85 = vector.extract_strided_slice %16 {offsets = [0, 640], sizes = [8, 128], strides = [1, 1]} : vector<48x768xf32> to vector<8x128xf32>
    %86 = tpu.concatenate %83, %84, %85 in 0 : vector<8x128xf32>, vector<8x128xf32>, vector<8x128xf32> -> vector<24x128xf32>
    %87 = arith.truncf %86 : vector<24x128xf32> to vector<24x128xbf16>
    %88 = vector.extract_strided_slice %16 {offsets = [16, 384], sizes = [8, 128], strides = [1, 1]} : vector<48x768xf32> to vector<8x128xf32>
    %89 = vector.extract_strided_slice %16 {offsets = [16, 512], sizes = [8, 128], strides = [1, 1]} : vector<48x768xf32> to vector<8x128xf32>
    %90 = vector.extract_strided_slice %16 {offsets = [16, 640], sizes = [8, 128], strides = [1, 1]} : vector<48x768xf32> to vector<8x128xf32>
    %91 = tpu.concatenate %88, %89, %90 in 0 : vector<8x128xf32>, vector<8x128xf32>, vector<8x128xf32> -> vector<24x128xf32>
    %92 = arith.truncf %91 : vector<24x128xf32> to vector<24x128xbf16>
    %93 = vector.extract_strided_slice %16 {offsets = [32, 384], sizes = [8, 128], strides = [1, 1]} : vector<48x768xf32> to vector<8x128xf32>
    %94 = vector.extract_strided_slice %16 {offsets = [32, 512], sizes = [8, 128], strides = [1, 1]} : vector<48x768xf32> to vector<8x128xf32>
    %95 = vector.extract_strided_slice %16 {offsets = [32, 640], sizes = [8, 128], strides = [1, 1]} : vector<48x768xf32> to vector<8x128xf32>
    %96 = tpu.concatenate %93, %94, %95, %0 in 0 : vector<8x128xf32>, vector<8x128xf32>, vector<8x128xf32>, vector<1x128xf32> -> vector<25x128xf32>
    %97 = arith.truncf %96 : vector<25x128xf32> to vector<25x128xbf16>
    %cst_23 = arith.constant dense<0.000000e+00> : vector<128x128xf32>
    %98 = tpu.matmul %87, %92, %cst_23 {dimension_numbers = #tpu.dot_dimension_numbers<[0], [0], [1], [1], [0, 1, 1, 1], [], []>} : vector<24x128xbf16>, vector<24x128xbf16>, vector<128x128xf32> -> vector<128x128xf32>
    %cst_24 = arith.constant dense<0xFF800000> : vector<128xf32>
    %99 = vector.multi_reduction <maximumf>, %98, %cst_24 [1] : vector<128x128xf32> to vector<128xf32>
    %100 = vector.shape_cast %99 : vector<128xf32> to vector<128x1xf32>
    %101 = vector.broadcast %100 : vector<128x1xf32> to vector<128x128xf32>
    %102 = arith.subf %98, %101 : vector<128x128xf32>
    %103 = math.exp %102 : vector<128x128xf32>
    %104 = arith.truncf %103 : vector<128x128xf32> to vector<128x128xbf16>
    %cst_25 = arith.constant dense<0.000000e+00> : vector<25x128xf32>
    %105 = tpu.matmul %97, %104, %cst_25 {dimension_numbers = #tpu.dot_dimension_numbers<[1], [1], [0], [0], [0, 0, 1, 0], [], []>} : vector<25x128xbf16>, vector<128x128xbf16>, vector<25x128xf32> -> vector<25x128xf32>
    %106 = vector.extract_strided_slice %105 {offsets = [24, 0], sizes = [1, 128], strides = [1, 1]} : vector<25x128xf32> to vector<1x128xf32>
    %107 = tpu.reciprocal %106 {approx = true} : vector<1x128xf32> -> vector<1x128xf32>
    %108 = vector.extract_strided_slice %105 {offsets = [0, 0], sizes = [24, 128], strides = [1, 1]} : vector<25x128xf32> to vector<24x128xf32>
    %109 = vector.broadcast %107 : vector<1x128xf32> to vector<24x128xf32>
    %110 = arith.mulf %108, %109 : vector<24x128xf32>
    %111 = vector.extract_strided_slice %16 {offsets = [8, 384], sizes = [8, 128], strides = [1, 1]} : vector<48x768xf32> to vector<8x128xf32>
    %112 = vector.extract_strided_slice %16 {offsets = [8, 512], sizes = [8, 128], strides = [1, 1]} : vector<48x768xf32> to vector<8x128xf32>
    %113 = vector.extract_strided_slice %16 {offsets = [8, 640], sizes = [8, 128], strides = [1, 1]} : vector<48x768xf32> to vector<8x128xf32>
    %114 = tpu.concatenate %111, %112, %113 in 0 : vector<8x128xf32>, vector<8x128xf32>, vector<8x128xf32> -> vector<24x128xf32>
    %115 = arith.truncf %114 : vector<24x128xf32> to vector<24x128xbf16>
    %116 = vector.extract_strided_slice %16 {offsets = [24, 384], sizes = [8, 128], strides = [1, 1]} : vector<48x768xf32> to vector<8x128xf32>
    %117 = vector.extract_strided_slice %16 {offsets = [24, 512], sizes = [8, 128], strides = [1, 1]} : vector<48x768xf32> to vector<8x128xf32>
    %118 = vector.extract_strided_slice %16 {offsets = [24, 640], sizes = [8, 128], strides = [1, 1]} : vector<48x768xf32> to vector<8x128xf32>
    %119 = tpu.concatenate %116, %117, %118 in 0 : vector<8x128xf32>, vector<8x128xf32>, vector<8x128xf32> -> vector<24x128xf32>
    %120 = arith.truncf %119 : vector<24x128xf32> to vector<24x128xbf16>
    %121 = vector.extract_strided_slice %16 {offsets = [40, 384], sizes = [8, 128], strides = [1, 1]} : vector<48x768xf32> to vector<8x128xf32>
    %122 = vector.extract_strided_slice %16 {offsets = [40, 512], sizes = [8, 128], strides = [1, 1]} : vector<48x768xf32> to vector<8x128xf32>
    %123 = vector.extract_strided_slice %16 {offsets = [40, 640], sizes = [8, 128], strides = [1, 1]} : vector<48x768xf32> to vector<8x128xf32>
    %124 = tpu.concatenate %121, %122, %123, %0 in 0 : vector<8x128xf32>, vector<8x128xf32>, vector<8x128xf32>, vector<1x128xf32> -> vector<25x128xf32>
    %125 = arith.truncf %124 : vector<25x128xf32> to vector<25x128xbf16>
    %cst_26 = arith.constant dense<0.000000e+00> : vector<128x128xf32>
    %126 = tpu.matmul %115, %120, %cst_26 {dimension_numbers = #tpu.dot_dimension_numbers<[0], [0], [1], [1], [0, 1, 1, 1], [], []>} : vector<24x128xbf16>, vector<24x128xbf16>, vector<128x128xf32> -> vector<128x128xf32>
    %cst_27 = arith.constant dense<0xFF800000> : vector<128xf32>
    %127 = vector.multi_reduction <maximumf>, %126, %cst_27 [1] : vector<128x128xf32> to vector<128xf32>
    %128 = vector.shape_cast %127 : vector<128xf32> to vector<128x1xf32>
    %129 = vector.broadcast %128 : vector<128x1xf32> to vector<128x128xf32>
    %130 = arith.subf %126, %129 : vector<128x128xf32>
    %131 = math.exp %130 : vector<128x128xf32>
    %132 = arith.truncf %131 : vector<128x128xf32> to vector<128x128xbf16>
    %cst_28 = arith.constant dense<0.000000e+00> : vector<25x128xf32>
    %133 = tpu.matmul %125, %132, %cst_28 {dimension_numbers = #tpu.dot_dimension_numbers<[1], [1], [0], [0], [0, 0, 1, 0], [], []>} : vector<25x128xbf16>, vector<128x128xbf16>, vector<25x128xf32> -> vector<25x128xf32>
    %134 = vector.extract_strided_slice %133 {offsets = [24, 0], sizes = [1, 128], strides = [1, 1]} : vector<25x128xf32> to vector<1x128xf32>
    %135 = tpu.reciprocal %134 {approx = true} : vector<1x128xf32> -> vector<1x128xf32>
    %136 = vector.extract_strided_slice %133 {offsets = [0, 0], sizes = [24, 128], strides = [1, 1]} : vector<25x128xf32> to vector<24x128xf32>
    %137 = vector.broadcast %135 : vector<1x128xf32> to vector<24x128xf32>
    %138 = arith.mulf %136, %137 : vector<24x128xf32>
    %139 = vector.extract_strided_slice %110 {offsets = [0, 0], sizes = [8, 128], strides = [1, 1]} : vector<24x128xf32> to vector<8x128xf32>
    %140 = vector.extract_strided_slice %138 {offsets = [0, 0], sizes = [8, 128], strides = [1, 1]} : vector<24x128xf32> to vector<8x128xf32>
    %141 = tpu.concatenate %139, %140 in 0 : vector<8x128xf32>, vector<8x128xf32> -> vector<16x128xf32>
    %142 = vector.extract_strided_slice %110 {offsets = [8, 0], sizes = [8, 128], strides = [1, 1]} : vector<24x128xf32> to vector<8x128xf32>
    %143 = vector.extract_strided_slice %138 {offsets = [8, 0], sizes = [8, 128], strides = [1, 1]} : vector<24x128xf32> to vector<8x128xf32>
    %144 = tpu.concatenate %142, %143 in 0 : vector<8x128xf32>, vector<8x128xf32> -> vector<16x128xf32>
    %145 = vector.extract_strided_slice %110 {offsets = [16, 0], sizes = [8, 128], strides = [1, 1]} : vector<24x128xf32> to vector<8x128xf32>
    %146 = vector.extract_strided_slice %138 {offsets = [16, 0], sizes = [8, 128], strides = [1, 1]} : vector<24x128xf32> to vector<8x128xf32>
    %147 = tpu.concatenate %145, %146 in 0 : vector<8x128xf32>, vector<8x128xf32> -> vector<16x128xf32>
    %148 = tpu.concatenate %141, %144, %147 in 1 : vector<16x128xf32>, vector<16x128xf32>, vector<16x128xf32> -> vector<16x384xf32>
    %149 = tpu.concatenate %82, %148 in 1 : vector<16x384xf32>, vector<16x384xf32> -> vector<16x768xf32>
    %150 = arith.truncf %149 : vector<16x768xf32> to vector<16x768xbf16>
    %cst_29 = arith.constant dense<0.000000e+00> : vector<16x768xf32>
    %151 = tpu.matmul %10, %150, %cst_29 {dimension_numbers = #tpu.dot_dimension_numbers<[1], [0], [0], [1], [0, 0, 1, 1], [], []>} : vector<16x16xbf16>, vector<16x768xbf16>, vector<16x768xf32> -> vector<16x768xf32>
    %152 = arith.addf %6, %151 : vector<16x768xf32>
    %153 = arith.truncf %152 : vector<16x768xf32> to vector<16x768xbf16>
    %cst_30 = arith.constant dense<0.000000e+00> : vector<32x768xf32>
    %154 = tpu.matmul %12, %153, %cst_30 {dimension_numbers = #tpu.dot_dimension_numbers<[1], [0], [0], [1], [0, 0, 1, 1], [], []>} : vector<32x16xbf16>, vector<16x768xbf16>, vector<32x768xf32> -> vector<32x768xf32>
    %155 = vector.extract_strided_slice %154 {offsets = [0, 0], sizes = [16, 768], strides = [1, 1]} : vector<32x768xf32> to vector<16x768xf32>
    %156 = vector.extract_strided_slice %154 {offsets = [16, 0], sizes = [16, 768], strides = [1, 1]} : vector<32x768xf32> to vector<16x768xf32>
    %157 = vector.extract_strided_slice %155 {offsets = [0, 0], sizes = [16, 384], strides = [1, 1]} : vector<16x768xf32> to vector<16x384xf32>
    %158 = vector.extract_strided_slice %156 {offsets = [0, 0], sizes = [16, 384], strides = [1, 1]} : vector<16x768xf32> to vector<16x384xf32>
    %159 = vector.extract_strided_slice %157 {offsets = [0, 0], sizes = [16, 128], strides = [1, 1]} : vector<16x384xf32> to vector<16x128xf32>
    %160 = vector.extract_strided_slice %158 {offsets = [0, 0], sizes = [16, 128], strides = [1, 1]} : vector<16x384xf32> to vector<16x128xf32>
    %161 = arith.mulf %159, %160 : vector<16x128xf32>
    %162 = vector.extract_strided_slice %157 {offsets = [0, 128], sizes = [16, 128], strides = [1, 1]} : vector<16x384xf32> to vector<16x128xf32>
    %163 = vector.extract_strided_slice %158 {offsets = [0, 128], sizes = [16, 128], strides = [1, 1]} : vector<16x384xf32> to vector<16x128xf32>
    %164 = arith.mulf %162, %163 : vector<16x128xf32>
    %165 = arith.addf %161, %164 : vector<16x128xf32>
    %166 = vector.extract_strided_slice %157 {offsets = [0, 256], sizes = [16, 128], strides = [1, 1]} : vector<16x384xf32> to vector<16x128xf32>
    %167 = vector.extract_strided_slice %158 {offsets = [0, 256], sizes = [16, 128], strides = [1, 1]} : vector<16x384xf32> to vector<16x128xf32>
    %168 = arith.mulf %166, %167 : vector<16x128xf32>
    %169 = arith.addf %165, %168 : vector<16x128xf32>
    %170 = vector.extract_strided_slice %158 {offsets = [0, 0], sizes = [16, 128], strides = [1, 1]} : vector<16x384xf32> to vector<16x128xf32>
    %171 = vector.extract_strided_slice %158 {offsets = [0, 0], sizes = [16, 128], strides = [1, 1]} : vector<16x384xf32> to vector<16x128xf32>
    %172 = arith.mulf %170, %171 : vector<16x128xf32>
    %173 = vector.extract_strided_slice %158 {offsets = [0, 128], sizes = [16, 128], strides = [1, 1]} : vector<16x384xf32> to vector<16x128xf32>
    %174 = vector.extract_strided_slice %158 {offsets = [0, 128], sizes = [16, 128], strides = [1, 1]} : vector<16x384xf32> to vector<16x128xf32>
    %175 = arith.mulf %173, %174 : vector<16x128xf32>
    %176 = arith.addf %172, %175 : vector<16x128xf32>
    %177 = vector.extract_strided_slice %158 {offsets = [0, 256], sizes = [16, 128], strides = [1, 1]} : vector<16x384xf32> to vector<16x128xf32>
    %178 = vector.extract_strided_slice %158 {offsets = [0, 256], sizes = [16, 128], strides = [1, 1]} : vector<16x384xf32> to vector<16x128xf32>
    %179 = arith.mulf %177, %178 : vector<16x128xf32>
    %180 = arith.addf %176, %179 : vector<16x128xf32>
    %cst_31 = arith.constant 9.99999997E-7 : f32
    %181 = vector.broadcast %cst_31 : f32 to vector<16x128xf32>
    %182 = arith.addf %180, %181 : vector<16x128xf32>
    %183 = tpu.reciprocal %182 {approx = true} : vector<16x128xf32> -> vector<16x128xf32>
    %184 = arith.mulf %169, %183 : vector<16x128xf32>
    %cst_32 = arith.constant 0.000000e+00 : f32
    %185 = vector.broadcast %cst_32 : f32 to vector<16x128xf32>
    %186 = arith.cmpf oge, %169, %185 : vector<16x128xf32>
    %cst_33 = arith.constant 0.000000e+00 : f32
    %187 = vector.broadcast %cst_33 : f32 to vector<16x128xf32>
    %188 = arith.select %186, %187, %184 : vector<16x128xi1>, vector<16x128xf32>
    %189 = tpu.concatenate %188, %188, %188 in 1 : vector<16x128xf32>, vector<16x128xf32>, vector<16x128xf32> -> vector<16x384xf32>
    %cst_34 = arith.constant 8.000000e-01 : f32
    %190 = vector.broadcast %cst_34 : f32 to vector<16x384xf32>
    %191 = arith.mulf %190, %189 : vector<16x384xf32>
    %192 = arith.mulf %191, %158 : vector<16x384xf32>
    %193 = arith.subf %157, %192 : vector<16x384xf32>
    %194 = vector.extract_strided_slice %155 {offsets = [0, 384], sizes = [16, 384], strides = [1, 1]} : vector<16x768xf32> to vector<16x384xf32>
    %195 = vector.extract_strided_slice %156 {offsets = [0, 384], sizes = [16, 384], strides = [1, 1]} : vector<16x768xf32> to vector<16x384xf32>
    %196 = vector.extract_strided_slice %194 {offsets = [0, 0], sizes = [16, 128], strides = [1, 1]} : vector<16x384xf32> to vector<16x128xf32>
    %197 = vector.extract_strided_slice %195 {offsets = [0, 0], sizes = [16, 128], strides = [1, 1]} : vector<16x384xf32> to vector<16x128xf32>
    %198 = arith.mulf %196, %197 : vector<16x128xf32>
    %199 = vector.extract_strided_slice %194 {offsets = [0, 128], sizes = [16, 128], strides = [1, 1]} : vector<16x384xf32> to vector<16x128xf32>
    %200 = vector.extract_strided_slice %195 {offsets = [0, 128], sizes = [16, 128], strides = [1, 1]} : vector<16x384xf32> to vector<16x128xf32>
    %201 = arith.mulf %199, %200 : vector<16x128xf32>
    %202 = arith.addf %198, %201 : vector<16x128xf32>
    %203 = vector.extract_strided_slice %194 {offsets = [0, 256], sizes = [16, 128], strides = [1, 1]} : vector<16x384xf32> to vector<16x128xf32>
    %204 = vector.extract_strided_slice %195 {offsets = [0, 256], sizes = [16, 128], strides = [1, 1]} : vector<16x384xf32> to vector<16x128xf32>
    %205 = arith.mulf %203, %204 : vector<16x128xf32>
    %206 = arith.addf %202, %205 : vector<16x128xf32>
    %207 = vector.extract_strided_slice %195 {offsets = [0, 0], sizes = [16, 128], strides = [1, 1]} : vector<16x384xf32> to vector<16x128xf32>
    %208 = vector.extract_strided_slice %195 {offsets = [0, 0], sizes = [16, 128], strides = [1, 1]} : vector<16x384xf32> to vector<16x128xf32>
    %209 = arith.mulf %207, %208 : vector<16x128xf32>
    %210 = vector.extract_strided_slice %195 {offsets = [0, 128], sizes = [16, 128], strides = [1, 1]} : vector<16x384xf32> to vector<16x128xf32>
    %211 = vector.extract_strided_slice %195 {offsets = [0, 128], sizes = [16, 128], strides = [1, 1]} : vector<16x384xf32> to vector<16x128xf32>
    %212 = arith.mulf %210, %211 : vector<16x128xf32>
    %213 = arith.addf %209, %212 : vector<16x128xf32>
    %214 = vector.extract_strided_slice %195 {offsets = [0, 256], sizes = [16, 128], strides = [1, 1]} : vector<16x384xf32> to vector<16x128xf32>
    %215 = vector.extract_strided_slice %195 {offsets = [0, 256], sizes = [16, 128], strides = [1, 1]} : vector<16x384xf32> to vector<16x128xf32>
    %216 = arith.mulf %214, %215 : vector<16x128xf32>
    %217 = arith.addf %213, %216 : vector<16x128xf32>
    %cst_35 = arith.constant 9.99999997E-7 : f32
    %218 = vector.broadcast %cst_35 : f32 to vector<16x128xf32>
    %219 = arith.addf %217, %218 : vector<16x128xf32>
    %220 = tpu.reciprocal %219 {approx = true} : vector<16x128xf32> -> vector<16x128xf32>
    %221 = arith.mulf %206, %220 : vector<16x128xf32>
    %cst_36 = arith.constant 0.000000e+00 : f32
    %222 = vector.broadcast %cst_36 : f32 to vector<16x128xf32>
    %223 = arith.cmpf oge, %206, %222 : vector<16x128xf32>
    %cst_37 = arith.constant 0.000000e+00 : f32
    %224 = vector.broadcast %cst_37 : f32 to vector<16x128xf32>
    %225 = arith.select %223, %224, %221 : vector<16x128xi1>, vector<16x128xf32>
    %226 = tpu.concatenate %225, %225, %225 in 1 : vector<16x128xf32>, vector<16x128xf32>, vector<16x128xf32> -> vector<16x384xf32>
    %cst_38 = arith.constant 8.000000e-01 : f32
    %227 = vector.broadcast %cst_38 : f32 to vector<16x384xf32>
    %228 = arith.mulf %227, %226 : vector<16x384xf32>
    %229 = arith.mulf %228, %195 : vector<16x384xf32>
    %230 = arith.subf %194, %229 : vector<16x384xf32>
    %231 = tpu.concatenate %193, %230 in 1 : vector<16x384xf32>, vector<16x384xf32> -> vector<16x768xf32>
    %232 = arith.truncf %231 : vector<16x768xf32> to vector<16x768xbf16>
    %cst_39 = arith.constant dense<0.000000e+00> : vector<16x768xf32>
    %233 = tpu.matmul %14, %232, %cst_39 {dimension_numbers = #tpu.dot_dimension_numbers<[1], [0], [0], [1], [0, 0, 1, 1], [], []>} : vector<16x16xbf16>, vector<16x768xbf16>, vector<16x768xf32> -> vector<16x768xf32>
    %234 = arith.addf %152, %233 : vector<16x768xf32>
    %c1 = arith.constant 1 : index
    %c0_40 = arith.constant 0 : index
    %c0_41 = arith.constant 0 : index
    %235 = vector.load %arg3[%c1, %c0_40, %c0_41] : memref<2x48x16xbf16, #tpu.memory_space<vmem>>, vector<1x48x16xbf16>
    %236 = vector.shape_cast %235 : vector<1x48x16xbf16> to vector<48x16xbf16>
    %c1_42 = arith.constant 1 : index
    %c0_43 = arith.constant 0 : index
    %c0_44 = arith.constant 0 : index
    %237 = vector.load %arg4[%c1_42, %c0_43, %c0_44] : memref<2x16x16xbf16, #tpu.memory_space<vmem>>, vector<1x16x16xbf16>
    %238 = vector.shape_cast %237 : vector<1x16x16xbf16> to vector<16x16xbf16>
    %c1_45 = arith.constant 1 : index
    %c0_46 = arith.constant 0 : index
    %c0_47 = arith.constant 0 : index
    %239 = vector.load %arg5[%c1_45, %c0_46, %c0_47] : memref<2x32x16xbf16, #tpu.memory_space<vmem>>, vector<1x32x16xbf16>
    %240 = vector.shape_cast %239 : vector<1x32x16xbf16> to vector<32x16xbf16>
    %c1_48 = arith.constant 1 : index
    %c0_49 = arith.constant 0 : index
    %c0_50 = arith.constant 0 : index
    %241 = vector.load %arg6[%c1_48, %c0_49, %c0_50] : memref<2x16x16xbf16, #tpu.memory_space<vmem>>, vector<1x16x16xbf16>
    %242 = vector.shape_cast %241 : vector<1x16x16xbf16> to vector<16x16xbf16>
    %243 = arith.truncf %234 : vector<16x768xf32> to vector<16x768xbf16>
    %cst_51 = arith.constant dense<0.000000e+00> : vector<48x768xf32>
    %244 = tpu.matmul %236, %243, %cst_51 {dimension_numbers = #tpu.dot_dimension_numbers<[1], [0], [0], [1], [0, 0, 1, 1], [], []>} : vector<48x16xbf16>, vector<16x768xbf16>, vector<48x768xf32> -> vector<48x768xf32>
    %245 = vector.extract_strided_slice %244 {offsets = [0, 0], sizes = [8, 128], strides = [1, 1]} : vector<48x768xf32> to vector<8x128xf32>
    %246 = vector.extract_strided_slice %244 {offsets = [0, 128], sizes = [8, 128], strides = [1, 1]} : vector<48x768xf32> to vector<8x128xf32>
    %247 = vector.extract_strided_slice %244 {offsets = [0, 256], sizes = [8, 128], strides = [1, 1]} : vector<48x768xf32> to vector<8x128xf32>
    %248 = tpu.concatenate %245, %246, %247 in 0 : vector<8x128xf32>, vector<8x128xf32>, vector<8x128xf32> -> vector<24x128xf32>
    %249 = arith.truncf %248 : vector<24x128xf32> to vector<24x128xbf16>
    %250 = vector.extract_strided_slice %244 {offsets = [16, 0], sizes = [8, 128], strides = [1, 1]} : vector<48x768xf32> to vector<8x128xf32>
    %251 = vector.extract_strided_slice %244 {offsets = [16, 128], sizes = [8, 128], strides = [1, 1]} : vector<48x768xf32> to vector<8x128xf32>
    %252 = vector.extract_strided_slice %244 {offsets = [16, 256], sizes = [8, 128], strides = [1, 1]} : vector<48x768xf32> to vector<8x128xf32>
    %253 = tpu.concatenate %250, %251, %252 in 0 : vector<8x128xf32>, vector<8x128xf32>, vector<8x128xf32> -> vector<24x128xf32>
    %254 = arith.truncf %253 : vector<24x128xf32> to vector<24x128xbf16>
    %255 = vector.extract_strided_slice %244 {offsets = [32, 0], sizes = [8, 128], strides = [1, 1]} : vector<48x768xf32> to vector<8x128xf32>
    %256 = vector.extract_strided_slice %244 {offsets = [32, 128], sizes = [8, 128], strides = [1, 1]} : vector<48x768xf32> to vector<8x128xf32>
    %257 = vector.extract_strided_slice %244 {offsets = [32, 256], sizes = [8, 128], strides = [1, 1]} : vector<48x768xf32> to vector<8x128xf32>
    %258 = tpu.concatenate %255, %256, %257, %0 in 0 : vector<8x128xf32>, vector<8x128xf32>, vector<8x128xf32>, vector<1x128xf32> -> vector<25x128xf32>
    %259 = arith.truncf %258 : vector<25x128xf32> to vector<25x128xbf16>
    %cst_52 = arith.constant dense<0.000000e+00> : vector<128x128xf32>
    %260 = tpu.matmul %249, %254, %cst_52 {dimension_numbers = #tpu.dot_dimension_numbers<[0], [0], [1], [1], [0, 1, 1, 1], [], []>} : vector<24x128xbf16>, vector<24x128xbf16>, vector<128x128xf32> -> vector<128x128xf32>
    %cst_53 = arith.constant dense<0xFF800000> : vector<128xf32>
    %261 = vector.multi_reduction <maximumf>, %260, %cst_53 [1] : vector<128x128xf32> to vector<128xf32>
    %262 = vector.shape_cast %261 : vector<128xf32> to vector<128x1xf32>
    %263 = vector.broadcast %262 : vector<128x1xf32> to vector<128x128xf32>
    %264 = arith.subf %260, %263 : vector<128x128xf32>
    %265 = math.exp %264 : vector<128x128xf32>
    %266 = arith.truncf %265 : vector<128x128xf32> to vector<128x128xbf16>
    %cst_54 = arith.constant dense<0.000000e+00> : vector<25x128xf32>
    %267 = tpu.matmul %259, %266, %cst_54 {dimension_numbers = #tpu.dot_dimension_numbers<[1], [1], [0], [0], [0, 0, 1, 0], [], []>} : vector<25x128xbf16>, vector<128x128xbf16>, vector<25x128xf32> -> vector<25x128xf32>
    %268 = vector.extract_strided_slice %267 {offsets = [24, 0], sizes = [1, 128], strides = [1, 1]} : vector<25x128xf32> to vector<1x128xf32>
    %269 = tpu.reciprocal %268 {approx = true} : vector<1x128xf32> -> vector<1x128xf32>
    %270 = vector.extract_strided_slice %267 {offsets = [0, 0], sizes = [24, 128], strides = [1, 1]} : vector<25x128xf32> to vector<24x128xf32>
    %271 = vector.broadcast %269 : vector<1x128xf32> to vector<24x128xf32>
    %272 = arith.mulf %270, %271 : vector<24x128xf32>
    %273 = vector.extract_strided_slice %244 {offsets = [8, 0], sizes = [8, 128], strides = [1, 1]} : vector<48x768xf32> to vector<8x128xf32>
    %274 = vector.extract_strided_slice %244 {offsets = [8, 128], sizes = [8, 128], strides = [1, 1]} : vector<48x768xf32> to vector<8x128xf32>
    %275 = vector.extract_strided_slice %244 {offsets = [8, 256], sizes = [8, 128], strides = [1, 1]} : vector<48x768xf32> to vector<8x128xf32>
    %276 = tpu.concatenate %273, %274, %275 in 0 : vector<8x128xf32>, vector<8x128xf32>, vector<8x128xf32> -> vector<24x128xf32>
    %277 = arith.truncf %276 : vector<24x128xf32> to vector<24x128xbf16>
    %278 = vector.extract_strided_slice %244 {offsets = [24, 0], sizes = [8, 128], strides = [1, 1]} : vector<48x768xf32> to vector<8x128xf32>
    %279 = vector.extract_strided_slice %244 {offsets = [24, 128], sizes = [8, 128], strides = [1, 1]} : vector<48x768xf32> to vector<8x128xf32>
    %280 = vector.extract_strided_slice %244 {offsets = [24, 256], sizes = [8, 128], strides = [1, 1]} : vector<48x768xf32> to vector<8x128xf32>
    %281 = tpu.concatenate %278, %279, %280 in 0 : vector<8x128xf32>, vector<8x128xf32>, vector<8x128xf32> -> vector<24x128xf32>
    %282 = arith.truncf %281 : vector<24x128xf32> to vector<24x128xbf16>
    %283 = vector.extract_strided_slice %244 {offsets = [40, 0], sizes = [8, 128], strides = [1, 1]} : vector<48x768xf32> to vector<8x128xf32>
    %284 = vector.extract_strided_slice %244 {offsets = [40, 128], sizes = [8, 128], strides = [1, 1]} : vector<48x768xf32> to vector<8x128xf32>
    %285 = vector.extract_strided_slice %244 {offsets = [40, 256], sizes = [8, 128], strides = [1, 1]} : vector<48x768xf32> to vector<8x128xf32>
    %286 = tpu.concatenate %283, %284, %285, %0 in 0 : vector<8x128xf32>, vector<8x128xf32>, vector<8x128xf32>, vector<1x128xf32> -> vector<25x128xf32>
    %287 = arith.truncf %286 : vector<25x128xf32> to vector<25x128xbf16>
    %cst_55 = arith.constant dense<0.000000e+00> : vector<128x128xf32>
    %288 = tpu.matmul %277, %282, %cst_55 {dimension_numbers = #tpu.dot_dimension_numbers<[0], [0], [1], [1], [0, 1, 1, 1], [], []>} : vector<24x128xbf16>, vector<24x128xbf16>, vector<128x128xf32> -> vector<128x128xf32>
    %cst_56 = arith.constant dense<0xFF800000> : vector<128xf32>
    %289 = vector.multi_reduction <maximumf>, %288, %cst_56 [1] : vector<128x128xf32> to vector<128xf32>
    %290 = vector.shape_cast %289 : vector<128xf32> to vector<128x1xf32>
    %291 = vector.broadcast %290 : vector<128x1xf32> to vector<128x128xf32>
    %292 = arith.subf %288, %291 : vector<128x128xf32>
    %293 = math.exp %292 : vector<128x128xf32>
    %294 = arith.truncf %293 : vector<128x128xf32> to vector<128x128xbf16>
    %cst_57 = arith.constant dense<0.000000e+00> : vector<25x128xf32>
    %295 = tpu.matmul %287, %294, %cst_57 {dimension_numbers = #tpu.dot_dimension_numbers<[1], [1], [0], [0], [0, 0, 1, 0], [], []>} : vector<25x128xbf16>, vector<128x128xbf16>, vector<25x128xf32> -> vector<25x128xf32>
    %296 = vector.extract_strided_slice %295 {offsets = [24, 0], sizes = [1, 128], strides = [1, 1]} : vector<25x128xf32> to vector<1x128xf32>
    %297 = tpu.reciprocal %296 {approx = true} : vector<1x128xf32> -> vector<1x128xf32>
    %298 = vector.extract_strided_slice %295 {offsets = [0, 0], sizes = [24, 128], strides = [1, 1]} : vector<25x128xf32> to vector<24x128xf32>
    %299 = vector.broadcast %297 : vector<1x128xf32> to vector<24x128xf32>
    %300 = arith.mulf %298, %299 : vector<24x128xf32>
    %301 = vector.extract_strided_slice %272 {offsets = [0, 0], sizes = [8, 128], strides = [1, 1]} : vector<24x128xf32> to vector<8x128xf32>
    %302 = vector.extract_strided_slice %300 {offsets = [0, 0], sizes = [8, 128], strides = [1, 1]} : vector<24x128xf32> to vector<8x128xf32>
    %303 = tpu.concatenate %301, %302 in 0 : vector<8x128xf32>, vector<8x128xf32> -> vector<16x128xf32>
    %304 = vector.extract_strided_slice %272 {offsets = [8, 0], sizes = [8, 128], strides = [1, 1]} : vector<24x128xf32> to vector<8x128xf32>
    %305 = vector.extract_strided_slice %300 {offsets = [8, 0], sizes = [8, 128], strides = [1, 1]} : vector<24x128xf32> to vector<8x128xf32>
    %306 = tpu.concatenate %304, %305 in 0 : vector<8x128xf32>, vector<8x128xf32> -> vector<16x128xf32>
    %307 = vector.extract_strided_slice %272 {offsets = [16, 0], sizes = [8, 128], strides = [1, 1]} : vector<24x128xf32> to vector<8x128xf32>
    %308 = vector.extract_strided_slice %300 {offsets = [16, 0], sizes = [8, 128], strides = [1, 1]} : vector<24x128xf32> to vector<8x128xf32>
    %309 = tpu.concatenate %307, %308 in 0 : vector<8x128xf32>, vector<8x128xf32> -> vector<16x128xf32>
    %310 = tpu.concatenate %303, %306, %309 in 1 : vector<16x128xf32>, vector<16x128xf32>, vector<16x128xf32> -> vector<16x384xf32>
    %311 = vector.extract_strided_slice %244 {offsets = [0, 384], sizes = [8, 128], strides = [1, 1]} : vector<48x768xf32> to vector<8x128xf32>
    %312 = vector.extract_strided_slice %244 {offsets = [0, 512], sizes = [8, 128], strides = [1, 1]} : vector<48x768xf32> to vector<8x128xf32>
    %313 = vector.extract_strided_slice %244 {offsets = [0, 640], sizes = [8, 128], strides = [1, 1]} : vector<48x768xf32> to vector<8x128xf32>
    %314 = tpu.concatenate %311, %312, %313 in 0 : vector<8x128xf32>, vector<8x128xf32>, vector<8x128xf32> -> vector<24x128xf32>
    %315 = arith.truncf %314 : vector<24x128xf32> to vector<24x128xbf16>
    %316 = vector.extract_strided_slice %244 {offsets = [16, 384], sizes = [8, 128], strides = [1, 1]} : vector<48x768xf32> to vector<8x128xf32>
    %317 = vector.extract_strided_slice %244 {offsets = [16, 512], sizes = [8, 128], strides = [1, 1]} : vector<48x768xf32> to vector<8x128xf32>
    %318 = vector.extract_strided_slice %244 {offsets = [16, 640], sizes = [8, 128], strides = [1, 1]} : vector<48x768xf32> to vector<8x128xf32>
    %319 = tpu.concatenate %316, %317, %318 in 0 : vector<8x128xf32>, vector<8x128xf32>, vector<8x128xf32> -> vector<24x128xf32>
    %320 = arith.truncf %319 : vector<24x128xf32> to vector<24x128xbf16>
    %321 = vector.extract_strided_slice %244 {offsets = [32, 384], sizes = [8, 128], strides = [1, 1]} : vector<48x768xf32> to vector<8x128xf32>
    %322 = vector.extract_strided_slice %244 {offsets = [32, 512], sizes = [8, 128], strides = [1, 1]} : vector<48x768xf32> to vector<8x128xf32>
    %323 = vector.extract_strided_slice %244 {offsets = [32, 640], sizes = [8, 128], strides = [1, 1]} : vector<48x768xf32> to vector<8x128xf32>
    %324 = tpu.concatenate %321, %322, %323, %0 in 0 : vector<8x128xf32>, vector<8x128xf32>, vector<8x128xf32>, vector<1x128xf32> -> vector<25x128xf32>
    %325 = arith.truncf %324 : vector<25x128xf32> to vector<25x128xbf16>
    %cst_58 = arith.constant dense<0.000000e+00> : vector<128x128xf32>
    %326 = tpu.matmul %315, %320, %cst_58 {dimension_numbers = #tpu.dot_dimension_numbers<[0], [0], [1], [1], [0, 1, 1, 1], [], []>} : vector<24x128xbf16>, vector<24x128xbf16>, vector<128x128xf32> -> vector<128x128xf32>
    %cst_59 = arith.constant dense<0xFF800000> : vector<128xf32>
    %327 = vector.multi_reduction <maximumf>, %326, %cst_59 [1] : vector<128x128xf32> to vector<128xf32>
    %328 = vector.shape_cast %327 : vector<128xf32> to vector<128x1xf32>
    %329 = vector.broadcast %328 : vector<128x1xf32> to vector<128x128xf32>
    %330 = arith.subf %326, %329 : vector<128x128xf32>
    %331 = math.exp %330 : vector<128x128xf32>
    %332 = arith.truncf %331 : vector<128x128xf32> to vector<128x128xbf16>
    %cst_60 = arith.constant dense<0.000000e+00> : vector<25x128xf32>
    %333 = tpu.matmul %325, %332, %cst_60 {dimension_numbers = #tpu.dot_dimension_numbers<[1], [1], [0], [0], [0, 0, 1, 0], [], []>} : vector<25x128xbf16>, vector<128x128xbf16>, vector<25x128xf32> -> vector<25x128xf32>
    %334 = vector.extract_strided_slice %333 {offsets = [24, 0], sizes = [1, 128], strides = [1, 1]} : vector<25x128xf32> to vector<1x128xf32>
    %335 = tpu.reciprocal %334 {approx = true} : vector<1x128xf32> -> vector<1x128xf32>
    %336 = vector.extract_strided_slice %333 {offsets = [0, 0], sizes = [24, 128], strides = [1, 1]} : vector<25x128xf32> to vector<24x128xf32>
    %337 = vector.broadcast %335 : vector<1x128xf32> to vector<24x128xf32>
    %338 = arith.mulf %336, %337 : vector<24x128xf32>
    %339 = vector.extract_strided_slice %244 {offsets = [8, 384], sizes = [8, 128], strides = [1, 1]} : vector<48x768xf32> to vector<8x128xf32>
    %340 = vector.extract_strided_slice %244 {offsets = [8, 512], sizes = [8, 128], strides = [1, 1]} : vector<48x768xf32> to vector<8x128xf32>
    %341 = vector.extract_strided_slice %244 {offsets = [8, 640], sizes = [8, 128], strides = [1, 1]} : vector<48x768xf32> to vector<8x128xf32>
    %342 = tpu.concatenate %339, %340, %341 in 0 : vector<8x128xf32>, vector<8x128xf32>, vector<8x128xf32> -> vector<24x128xf32>
    %343 = arith.truncf %342 : vector<24x128xf32> to vector<24x128xbf16>
    %344 = vector.extract_strided_slice %244 {offsets = [24, 384], sizes = [8, 128], strides = [1, 1]} : vector<48x768xf32> to vector<8x128xf32>
    %345 = vector.extract_strided_slice %244 {offsets = [24, 512], sizes = [8, 128], strides = [1, 1]} : vector<48x768xf32> to vector<8x128xf32>
    %346 = vector.extract_strided_slice %244 {offsets = [24, 640], sizes = [8, 128], strides = [1, 1]} : vector<48x768xf32> to vector<8x128xf32>
    %347 = tpu.concatenate %344, %345, %346 in 0 : vector<8x128xf32>, vector<8x128xf32>, vector<8x128xf32> -> vector<24x128xf32>
    %348 = arith.truncf %347 : vector<24x128xf32> to vector<24x128xbf16>
    %349 = vector.extract_strided_slice %244 {offsets = [40, 384], sizes = [8, 128], strides = [1, 1]} : vector<48x768xf32> to vector<8x128xf32>
    %350 = vector.extract_strided_slice %244 {offsets = [40, 512], sizes = [8, 128], strides = [1, 1]} : vector<48x768xf32> to vector<8x128xf32>
    %351 = vector.extract_strided_slice %244 {offsets = [40, 640], sizes = [8, 128], strides = [1, 1]} : vector<48x768xf32> to vector<8x128xf32>
    %352 = tpu.concatenate %349, %350, %351, %0 in 0 : vector<8x128xf32>, vector<8x128xf32>, vector<8x128xf32>, vector<1x128xf32> -> vector<25x128xf32>
    %353 = arith.truncf %352 : vector<25x128xf32> to vector<25x128xbf16>
    %cst_61 = arith.constant dense<0.000000e+00> : vector<128x128xf32>
    %354 = tpu.matmul %343, %348, %cst_61 {dimension_numbers = #tpu.dot_dimension_numbers<[0], [0], [1], [1], [0, 1, 1, 1], [], []>} : vector<24x128xbf16>, vector<24x128xbf16>, vector<128x128xf32> -> vector<128x128xf32>
    %cst_62 = arith.constant dense<0xFF800000> : vector<128xf32>
    %355 = vector.multi_reduction <maximumf>, %354, %cst_62 [1] : vector<128x128xf32> to vector<128xf32>
    %356 = vector.shape_cast %355 : vector<128xf32> to vector<128x1xf32>
    %357 = vector.broadcast %356 : vector<128x1xf32> to vector<128x128xf32>
    %358 = arith.subf %354, %357 : vector<128x128xf32>
    %359 = math.exp %358 : vector<128x128xf32>
    %360 = arith.truncf %359 : vector<128x128xf32> to vector<128x128xbf16>
    %cst_63 = arith.constant dense<0.000000e+00> : vector<25x128xf32>
    %361 = tpu.matmul %353, %360, %cst_63 {dimension_numbers = #tpu.dot_dimension_numbers<[1], [1], [0], [0], [0, 0, 1, 0], [], []>} : vector<25x128xbf16>, vector<128x128xbf16>, vector<25x128xf32> -> vector<25x128xf32>
    %362 = vector.extract_strided_slice %361 {offsets = [24, 0], sizes = [1, 128], strides = [1, 1]} : vector<25x128xf32> to vector<1x128xf32>
    %363 = tpu.reciprocal %362 {approx = true} : vector<1x128xf32> -> vector<1x128xf32>
    %364 = vector.extract_strided_slice %361 {offsets = [0, 0], sizes = [24, 128], strides = [1, 1]} : vector<25x128xf32> to vector<24x128xf32>
    %365 = vector.broadcast %363 : vector<1x128xf32> to vector<24x128xf32>
    %366 = arith.mulf %364, %365 : vector<24x128xf32>
    %367 = vector.extract_strided_slice %338 {offsets = [0, 0], sizes = [8, 128], strides = [1, 1]} : vector<24x128xf32> to vector<8x128xf32>
    %368 = vector.extract_strided_slice %366 {offsets = [0, 0], sizes = [8, 128], strides = [1, 1]} : vector<24x128xf32> to vector<8x128xf32>
    %369 = tpu.concatenate %367, %368 in 0 : vector<8x128xf32>, vector<8x128xf32> -> vector<16x128xf32>
    %370 = vector.extract_strided_slice %338 {offsets = [8, 0], sizes = [8, 128], strides = [1, 1]} : vector<24x128xf32> to vector<8x128xf32>
    %371 = vector.extract_strided_slice %366 {offsets = [8, 0], sizes = [8, 128], strides = [1, 1]} : vector<24x128xf32> to vector<8x128xf32>
    %372 = tpu.concatenate %370, %371 in 0 : vector<8x128xf32>, vector<8x128xf32> -> vector<16x128xf32>
    %373 = vector.extract_strided_slice %338 {offsets = [16, 0], sizes = [8, 128], strides = [1, 1]} : vector<24x128xf32> to vector<8x128xf32>
    %374 = vector.extract_strided_slice %366 {offsets = [16, 0], sizes = [8, 128], strides = [1, 1]} : vector<24x128xf32> to vector<8x128xf32>
    %375 = tpu.concatenate %373, %374 in 0 : vector<8x128xf32>, vector<8x128xf32> -> vector<16x128xf32>
    %376 = tpu.concatenate %369, %372, %375 in 1 : vector<16x128xf32>, vector<16x128xf32>, vector<16x128xf32> -> vector<16x384xf32>
    %377 = tpu.concatenate %310, %376 in 1 : vector<16x384xf32>, vector<16x384xf32> -> vector<16x768xf32>
    %378 = arith.truncf %377 : vector<16x768xf32> to vector<16x768xbf16>
    %cst_64 = arith.constant dense<0.000000e+00> : vector<16x768xf32>
    %379 = tpu.matmul %238, %378, %cst_64 {dimension_numbers = #tpu.dot_dimension_numbers<[1], [0], [0], [1], [0, 0, 1, 1], [], []>} : vector<16x16xbf16>, vector<16x768xbf16>, vector<16x768xf32> -> vector<16x768xf32>
    %380 = arith.addf %234, %379 : vector<16x768xf32>
    %381 = arith.truncf %380 : vector<16x768xf32> to vector<16x768xbf16>
    %cst_65 = arith.constant dense<0.000000e+00> : vector<32x768xf32>
    %382 = tpu.matmul %240, %381, %cst_65 {dimension_numbers = #tpu.dot_dimension_numbers<[1], [0], [0], [1], [0, 0, 1, 1], [], []>} : vector<32x16xbf16>, vector<16x768xbf16>, vector<32x768xf32> -> vector<32x768xf32>
    %383 = vector.extract_strided_slice %382 {offsets = [0, 0], sizes = [16, 768], strides = [1, 1]} : vector<32x768xf32> to vector<16x768xf32>
    %384 = vector.extract_strided_slice %382 {offsets = [16, 0], sizes = [16, 768], strides = [1, 1]} : vector<32x768xf32> to vector<16x768xf32>
    %385 = vector.extract_strided_slice %383 {offsets = [0, 0], sizes = [16, 384], strides = [1, 1]} : vector<16x768xf32> to vector<16x384xf32>
    %386 = vector.extract_strided_slice %384 {offsets = [0, 0], sizes = [16, 384], strides = [1, 1]} : vector<16x768xf32> to vector<16x384xf32>
    %387 = vector.extract_strided_slice %385 {offsets = [0, 0], sizes = [16, 128], strides = [1, 1]} : vector<16x384xf32> to vector<16x128xf32>
    %388 = vector.extract_strided_slice %386 {offsets = [0, 0], sizes = [16, 128], strides = [1, 1]} : vector<16x384xf32> to vector<16x128xf32>
    %389 = arith.mulf %387, %388 : vector<16x128xf32>
    %390 = vector.extract_strided_slice %385 {offsets = [0, 128], sizes = [16, 128], strides = [1, 1]} : vector<16x384xf32> to vector<16x128xf32>
    %391 = vector.extract_strided_slice %386 {offsets = [0, 128], sizes = [16, 128], strides = [1, 1]} : vector<16x384xf32> to vector<16x128xf32>
    %392 = arith.mulf %390, %391 : vector<16x128xf32>
    %393 = arith.addf %389, %392 : vector<16x128xf32>
    %394 = vector.extract_strided_slice %385 {offsets = [0, 256], sizes = [16, 128], strides = [1, 1]} : vector<16x384xf32> to vector<16x128xf32>
    %395 = vector.extract_strided_slice %386 {offsets = [0, 256], sizes = [16, 128], strides = [1, 1]} : vector<16x384xf32> to vector<16x128xf32>
    %396 = arith.mulf %394, %395 : vector<16x128xf32>
    %397 = arith.addf %393, %396 : vector<16x128xf32>
    %398 = vector.extract_strided_slice %386 {offsets = [0, 0], sizes = [16, 128], strides = [1, 1]} : vector<16x384xf32> to vector<16x128xf32>
    %399 = vector.extract_strided_slice %386 {offsets = [0, 0], sizes = [16, 128], strides = [1, 1]} : vector<16x384xf32> to vector<16x128xf32>
    %400 = arith.mulf %398, %399 : vector<16x128xf32>
    %401 = vector.extract_strided_slice %386 {offsets = [0, 128], sizes = [16, 128], strides = [1, 1]} : vector<16x384xf32> to vector<16x128xf32>
    %402 = vector.extract_strided_slice %386 {offsets = [0, 128], sizes = [16, 128], strides = [1, 1]} : vector<16x384xf32> to vector<16x128xf32>
    %403 = arith.mulf %401, %402 : vector<16x128xf32>
    %404 = arith.addf %400, %403 : vector<16x128xf32>
    %405 = vector.extract_strided_slice %386 {offsets = [0, 256], sizes = [16, 128], strides = [1, 1]} : vector<16x384xf32> to vector<16x128xf32>
    %406 = vector.extract_strided_slice %386 {offsets = [0, 256], sizes = [16, 128], strides = [1, 1]} : vector<16x384xf32> to vector<16x128xf32>
    %407 = arith.mulf %405, %406 : vector<16x128xf32>
    %408 = arith.addf %404, %407 : vector<16x128xf32>
    %cst_66 = arith.constant 9.99999997E-7 : f32
    %409 = vector.broadcast %cst_66 : f32 to vector<16x128xf32>
    %410 = arith.addf %408, %409 : vector<16x128xf32>
    %411 = tpu.reciprocal %410 {approx = true} : vector<16x128xf32> -> vector<16x128xf32>
    %412 = arith.mulf %397, %411 : vector<16x128xf32>
    %cst_67 = arith.constant 0.000000e+00 : f32
    %413 = vector.broadcast %cst_67 : f32 to vector<16x128xf32>
    %414 = arith.cmpf oge, %397, %413 : vector<16x128xf32>
    %cst_68 = arith.constant 0.000000e+00 : f32
    %415 = vector.broadcast %cst_68 : f32 to vector<16x128xf32>
    %416 = arith.select %414, %415, %412 : vector<16x128xi1>, vector<16x128xf32>
    %417 = tpu.concatenate %416, %416, %416 in 1 : vector<16x128xf32>, vector<16x128xf32>, vector<16x128xf32> -> vector<16x384xf32>
    %cst_69 = arith.constant 8.000000e-01 : f32
    %418 = vector.broadcast %cst_69 : f32 to vector<16x384xf32>
    %419 = arith.mulf %418, %417 : vector<16x384xf32>
    %420 = arith.mulf %419, %386 : vector<16x384xf32>
    %421 = arith.subf %385, %420 : vector<16x384xf32>
    %422 = vector.extract_strided_slice %383 {offsets = [0, 384], sizes = [16, 384], strides = [1, 1]} : vector<16x768xf32> to vector<16x384xf32>
    %423 = vector.extract_strided_slice %384 {offsets = [0, 384], sizes = [16, 384], strides = [1, 1]} : vector<16x768xf32> to vector<16x384xf32>
    %424 = vector.extract_strided_slice %422 {offsets = [0, 0], sizes = [16, 128], strides = [1, 1]} : vector<16x384xf32> to vector<16x128xf32>
    %425 = vector.extract_strided_slice %423 {offsets = [0, 0], sizes = [16, 128], strides = [1, 1]} : vector<16x384xf32> to vector<16x128xf32>
    %426 = arith.mulf %424, %425 : vector<16x128xf32>
    %427 = vector.extract_strided_slice %422 {offsets = [0, 128], sizes = [16, 128], strides = [1, 1]} : vector<16x384xf32> to vector<16x128xf32>
    %428 = vector.extract_strided_slice %423 {offsets = [0, 128], sizes = [16, 128], strides = [1, 1]} : vector<16x384xf32> to vector<16x128xf32>
    %429 = arith.mulf %427, %428 : vector<16x128xf32>
    %430 = arith.addf %426, %429 : vector<16x128xf32>
    %431 = vector.extract_strided_slice %422 {offsets = [0, 256], sizes = [16, 128], strides = [1, 1]} : vector<16x384xf32> to vector<16x128xf32>
    %432 = vector.extract_strided_slice %423 {offsets = [0, 256], sizes = [16, 128], strides = [1, 1]} : vector<16x384xf32> to vector<16x128xf32>
    %433 = arith.mulf %431, %432 : vector<16x128xf32>
    %434 = arith.addf %430, %433 : vector<16x128xf32>
    %435 = vector.extract_strided_slice %423 {offsets = [0, 0], sizes = [16, 128], strides = [1, 1]} : vector<16x384xf32> to vector<16x128xf32>
    %436 = vector.extract_strided_slice %423 {offsets = [0, 0], sizes = [16, 128], strides = [1, 1]} : vector<16x384xf32> to vector<16x128xf32>
    %437 = arith.mulf %435, %436 : vector<16x128xf32>
    %438 = vector.extract_strided_slice %423 {offsets = [0, 128], sizes = [16, 128], strides = [1, 1]} : vector<16x384xf32> to vector<16x128xf32>
    %439 = vector.extract_strided_slice %423 {offsets = [0, 128], sizes = [16, 128], strides = [1, 1]} : vector<16x384xf32> to vector<16x128xf32>
    %440 = arith.mulf %438, %439 : vector<16x128xf32>
    %441 = arith.addf %437, %440 : vector<16x128xf32>
    %442 = vector.extract_strided_slice %423 {offsets = [0, 256], sizes = [16, 128], strides = [1, 1]} : vector<16x384xf32> to vector<16x128xf32>
    %443 = vector.extract_strided_slice %423 {offsets = [0, 256], sizes = [16, 128], strides = [1, 1]} : vector<16x384xf32> to vector<16x128xf32>
    %444 = arith.mulf %442, %443 : vector<16x128xf32>
    %445 = arith.addf %441, %444 : vector<16x128xf32>
    %cst_70 = arith.constant 9.99999997E-7 : f32
    %446 = vector.broadcast %cst_70 : f32 to vector<16x128xf32>
    %447 = arith.addf %445, %446 : vector<16x128xf32>
    %448 = tpu.reciprocal %447 {approx = true} : vector<16x128xf32> -> vector<16x128xf32>
    %449 = arith.mulf %434, %448 : vector<16x128xf32>
    %cst_71 = arith.constant 0.000000e+00 : f32
    %450 = vector.broadcast %cst_71 : f32 to vector<16x128xf32>
    %451 = arith.cmpf oge, %434, %450 : vector<16x128xf32>
    %cst_72 = arith.constant 0.000000e+00 : f32
    %452 = vector.broadcast %cst_72 : f32 to vector<16x128xf32>
    %453 = arith.select %451, %452, %449 : vector<16x128xi1>, vector<16x128xf32>
    %454 = tpu.concatenate %453, %453, %453 in 1 : vector<16x128xf32>, vector<16x128xf32>, vector<16x128xf32> -> vector<16x384xf32>
    %cst_73 = arith.constant 8.000000e-01 : f32
    %455 = vector.broadcast %cst_73 : f32 to vector<16x384xf32>
    %456 = arith.mulf %455, %454 : vector<16x384xf32>
    %457 = arith.mulf %456, %423 : vector<16x384xf32>
    %458 = arith.subf %422, %457 : vector<16x384xf32>
    %459 = tpu.concatenate %421, %458 in 1 : vector<16x384xf32>, vector<16x384xf32> -> vector<16x768xf32>
    %460 = arith.truncf %459 : vector<16x768xf32> to vector<16x768xbf16>
    %cst_74 = arith.constant dense<0.000000e+00> : vector<16x768xf32>
    %461 = tpu.matmul %242, %460, %cst_74 {dimension_numbers = #tpu.dot_dimension_numbers<[1], [0], [0], [1], [0, 0, 1, 1], [], []>} : vector<16x16xbf16>, vector<16x768xbf16>, vector<16x768xf32> -> vector<16x768xf32>
    %462 = arith.addf %380, %461 : vector<16x768xf32>
    %463 = arith.truncf %462 : vector<16x768xf32> to vector<16x768xbf16>
    %c0_75 = arith.constant 0 : index
    %c0_76 = arith.constant 0 : index
    %464 = vector.load %arg7[%c0_75, %c0_76] : memref<3x16xbf16, #tpu.memory_space<vmem>>, vector<3x16xbf16>
    %cst_77 = arith.constant dense<0.000000e+00> : vector<3x768xf32>
    %465 = tpu.matmul %464, %463, %cst_77 {dimension_numbers = #tpu.dot_dimension_numbers<[1], [0], [0], [1], [0, 0, 1, 1], [], []>} : vector<3x16xbf16>, vector<16x768xbf16>, vector<3x768xf32> -> vector<3x768xf32>
    %c0_78 = arith.constant 0 : index
    %c0_79 = arith.constant 0 : index
    %466 = vector.load %arg8[%c0_78, %c0_79] : memref<3x16xbf16, #tpu.memory_space<vmem>>, vector<3x16xbf16>
    %cst_80 = arith.constant dense<0.000000e+00> : vector<3x768xf32>
    %467 = tpu.matmul %466, %463, %cst_80 {dimension_numbers = #tpu.dot_dimension_numbers<[1], [0], [0], [1], [0, 0, 1, 1], [], []>} : vector<3x16xbf16>, vector<16x768xbf16>, vector<3x768xf32> -> vector<3x768xf32>
    %468 = vector.extract_strided_slice %465 {offsets = [0, 0], sizes = [3, 384], strides = [1, 1]} : vector<3x768xf32> to vector<3x384xf32>
    %469 = vector.extract_strided_slice %467 {offsets = [0, 0], sizes = [3, 384], strides = [1, 1]} : vector<3x768xf32> to vector<3x384xf32>
    %470 = vector.extract_strided_slice %468 {offsets = [0, 0], sizes = [3, 128], strides = [1, 1]} : vector<3x384xf32> to vector<3x128xf32>
    %471 = vector.extract_strided_slice %469 {offsets = [0, 0], sizes = [3, 128], strides = [1, 1]} : vector<3x384xf32> to vector<3x128xf32>
    %472 = arith.mulf %470, %471 : vector<3x128xf32>
    %473 = vector.extract_strided_slice %468 {offsets = [0, 128], sizes = [3, 128], strides = [1, 1]} : vector<3x384xf32> to vector<3x128xf32>
    %474 = vector.extract_strided_slice %469 {offsets = [0, 128], sizes = [3, 128], strides = [1, 1]} : vector<3x384xf32> to vector<3x128xf32>
    %475 = arith.mulf %473, %474 : vector<3x128xf32>
    %476 = arith.addf %472, %475 : vector<3x128xf32>
    %477 = vector.extract_strided_slice %468 {offsets = [0, 256], sizes = [3, 128], strides = [1, 1]} : vector<3x384xf32> to vector<3x128xf32>
    %478 = vector.extract_strided_slice %469 {offsets = [0, 256], sizes = [3, 128], strides = [1, 1]} : vector<3x384xf32> to vector<3x128xf32>
    %479 = arith.mulf %477, %478 : vector<3x128xf32>
    %480 = arith.addf %476, %479 : vector<3x128xf32>
    %481 = vector.extract_strided_slice %469 {offsets = [0, 0], sizes = [3, 128], strides = [1, 1]} : vector<3x384xf32> to vector<3x128xf32>
    %482 = vector.extract_strided_slice %469 {offsets = [0, 0], sizes = [3, 128], strides = [1, 1]} : vector<3x384xf32> to vector<3x128xf32>
    %483 = arith.mulf %481, %482 : vector<3x128xf32>
    %484 = vector.extract_strided_slice %469 {offsets = [0, 128], sizes = [3, 128], strides = [1, 1]} : vector<3x384xf32> to vector<3x128xf32>
    %485 = vector.extract_strided_slice %469 {offsets = [0, 128], sizes = [3, 128], strides = [1, 1]} : vector<3x384xf32> to vector<3x128xf32>
    %486 = arith.mulf %484, %485 : vector<3x128xf32>
    %487 = arith.addf %483, %486 : vector<3x128xf32>
    %488 = vector.extract_strided_slice %469 {offsets = [0, 256], sizes = [3, 128], strides = [1, 1]} : vector<3x384xf32> to vector<3x128xf32>
    %489 = vector.extract_strided_slice %469 {offsets = [0, 256], sizes = [3, 128], strides = [1, 1]} : vector<3x384xf32> to vector<3x128xf32>
    %490 = arith.mulf %488, %489 : vector<3x128xf32>
    %491 = arith.addf %487, %490 : vector<3x128xf32>
    %cst_81 = arith.constant 9.99999997E-7 : f32
    %492 = vector.broadcast %cst_81 : f32 to vector<3x128xf32>
    %493 = arith.addf %491, %492 : vector<3x128xf32>
    %494 = tpu.reciprocal %493 {approx = true} : vector<3x128xf32> -> vector<3x128xf32>
    %495 = arith.mulf %480, %494 : vector<3x128xf32>
    %cst_82 = arith.constant 0.000000e+00 : f32
    %496 = vector.broadcast %cst_82 : f32 to vector<3x128xf32>
    %497 = arith.cmpf oge, %480, %496 : vector<3x128xf32>
    %cst_83 = arith.constant 0.000000e+00 : f32
    %498 = vector.broadcast %cst_83 : f32 to vector<3x128xf32>
    %499 = arith.select %497, %498, %495 : vector<3x128xi1>, vector<3x128xf32>
    %500 = tpu.concatenate %499, %499, %499 in 1 : vector<3x128xf32>, vector<3x128xf32>, vector<3x128xf32> -> vector<3x384xf32>
    %cst_84 = arith.constant 8.000000e-01 : f32
    %501 = vector.broadcast %cst_84 : f32 to vector<3x384xf32>
    %502 = arith.mulf %501, %500 : vector<3x384xf32>
    %503 = arith.mulf %502, %469 : vector<3x384xf32>
    %504 = arith.subf %468, %503 : vector<3x384xf32>
    %505 = vector.extract_strided_slice %465 {offsets = [0, 384], sizes = [3, 384], strides = [1, 1]} : vector<3x768xf32> to vector<3x384xf32>
    %506 = vector.extract_strided_slice %467 {offsets = [0, 384], sizes = [3, 384], strides = [1, 1]} : vector<3x768xf32> to vector<3x384xf32>
    %507 = vector.extract_strided_slice %505 {offsets = [0, 0], sizes = [3, 128], strides = [1, 1]} : vector<3x384xf32> to vector<3x128xf32>
    %508 = vector.extract_strided_slice %506 {offsets = [0, 0], sizes = [3, 128], strides = [1, 1]} : vector<3x384xf32> to vector<3x128xf32>
    %509 = arith.mulf %507, %508 : vector<3x128xf32>
    %510 = vector.extract_strided_slice %505 {offsets = [0, 128], sizes = [3, 128], strides = [1, 1]} : vector<3x384xf32> to vector<3x128xf32>
    %511 = vector.extract_strided_slice %506 {offsets = [0, 128], sizes = [3, 128], strides = [1, 1]} : vector<3x384xf32> to vector<3x128xf32>
    %512 = arith.mulf %510, %511 : vector<3x128xf32>
    %513 = arith.addf %509, %512 : vector<3x128xf32>
    %514 = vector.extract_strided_slice %505 {offsets = [0, 256], sizes = [3, 128], strides = [1, 1]} : vector<3x384xf32> to vector<3x128xf32>
    %515 = vector.extract_strided_slice %506 {offsets = [0, 256], sizes = [3, 128], strides = [1, 1]} : vector<3x384xf32> to vector<3x128xf32>
    %516 = arith.mulf %514, %515 : vector<3x128xf32>
    %517 = arith.addf %513, %516 : vector<3x128xf32>
    %518 = vector.extract_strided_slice %506 {offsets = [0, 0], sizes = [3, 128], strides = [1, 1]} : vector<3x384xf32> to vector<3x128xf32>
    %519 = vector.extract_strided_slice %506 {offsets = [0, 0], sizes = [3, 128], strides = [1, 1]} : vector<3x384xf32> to vector<3x128xf32>
    %520 = arith.mulf %518, %519 : vector<3x128xf32>
    %521 = vector.extract_strided_slice %506 {offsets = [0, 128], sizes = [3, 128], strides = [1, 1]} : vector<3x384xf32> to vector<3x128xf32>
    %522 = vector.extract_strided_slice %506 {offsets = [0, 128], sizes = [3, 128], strides = [1, 1]} : vector<3x384xf32> to vector<3x128xf32>
    %523 = arith.mulf %521, %522 : vector<3x128xf32>
    %524 = arith.addf %520, %523 : vector<3x128xf32>
    %525 = vector.extract_strided_slice %506 {offsets = [0, 256], sizes = [3, 128], strides = [1, 1]} : vector<3x384xf32> to vector<3x128xf32>
    %526 = vector.extract_strided_slice %506 {offsets = [0, 256], sizes = [3, 128], strides = [1, 1]} : vector<3x384xf32> to vector<3x128xf32>
    %527 = arith.mulf %525, %526 : vector<3x128xf32>
    %528 = arith.addf %524, %527 : vector<3x128xf32>
    %cst_85 = arith.constant 9.99999997E-7 : f32
    %529 = vector.broadcast %cst_85 : f32 to vector<3x128xf32>
    %530 = arith.addf %528, %529 : vector<3x128xf32>
    %531 = tpu.reciprocal %530 {approx = true} : vector<3x128xf32> -> vector<3x128xf32>
    %532 = arith.mulf %517, %531 : vector<3x128xf32>
    %cst_86 = arith.constant 0.000000e+00 : f32
    %533 = vector.broadcast %cst_86 : f32 to vector<3x128xf32>
    %534 = arith.cmpf oge, %517, %533 : vector<3x128xf32>
    %cst_87 = arith.constant 0.000000e+00 : f32
    %535 = vector.broadcast %cst_87 : f32 to vector<3x128xf32>
    %536 = arith.select %534, %535, %532 : vector<3x128xi1>, vector<3x128xf32>
    %537 = tpu.concatenate %536, %536, %536 in 1 : vector<3x128xf32>, vector<3x128xf32>, vector<3x128xf32> -> vector<3x384xf32>
    %cst_88 = arith.constant 8.000000e-01 : f32
    %538 = vector.broadcast %cst_88 : f32 to vector<3x384xf32>
    %539 = arith.mulf %538, %537 : vector<3x384xf32>
    %540 = arith.mulf %539, %506 : vector<3x384xf32>
    %541 = arith.subf %505, %540 : vector<3x384xf32>
    %542 = tpu.concatenate %504, %541 in 1 : vector<3x384xf32>, vector<3x384xf32> -> vector<3x768xf32>
    %543 = arith.truncf %542 : vector<3x768xf32> to vector<3x768xbf16>
    %544 = vector.extract_strided_slice %543 {offsets = [0, 0], sizes = [3, 384], strides = [1, 1]} : vector<3x768xbf16> to vector<3x384xbf16>
    %545 = vector.extract_strided_slice %463 {offsets = [0, 0], sizes = [16, 384], strides = [1, 1]} : vector<16x768xbf16> to vector<16x384xbf16>
    %cst_89 = arith.constant dense<0.000000e+00> : vector<3x16xf32>
    %546 = tpu.matmul %544, %545, %cst_89 {dimension_numbers = #tpu.dot_dimension_numbers<[1], [1], [0], [0], [0, 0, 1, 0], [], []>} : vector<3x384xbf16>, vector<16x384xbf16>, vector<3x16xf32> -> vector<3x16xf32>
    %cst_90 = arith.constant 7.812500e-03 : f32
    %547 = vector.broadcast %cst_90 : f32 to vector<3x16xf32>
    %548 = arith.mulf %546, %547 : vector<3x16xf32>
    %c0_91 = arith.constant 0 : index
    %c0_92 = arith.constant 0 : index
    %549 = vector.load %arg10[%c0_91, %c0_92] : memref<1x32xf32, #tpu.memory_space<vmem>>, vector<1x32xf32>
    %550 = vector.extract_strided_slice %548 {offsets = [0, 0], sizes = [1, 16], strides = [1, 1]} : vector<3x16xf32> to vector<1x16xf32>
    %c0_93 = arith.constant 0 : index
    %c0_94 = arith.constant 0 : index
    %c0_95 = arith.constant 0 : index
    %551 = vector.load %arg9[%c0_93, %c0_94, %c0_95] : memref<3x16x32xf32, #tpu.memory_space<vmem>>, vector<1x16x32xf32>
    %552 = vector.shape_cast %551 : vector<1x16x32xf32> to vector<16x32xf32>
    %cst_96 = arith.constant dense<0.000000e+00> : vector<1x32xf32>
    %553 = tpu.matmul %550, %552, %cst_96 {dimension_numbers = #tpu.dot_dimension_numbers<[1], [0], [0], [1], [0, 0, 1, 1], [], []>} : vector<1x16xf32>, vector<16x32xf32>, vector<1x32xf32> -> vector<1x32xf32>
    %554 = arith.addf %549, %553 : vector<1x32xf32>
    %555 = vector.extract_strided_slice %548 {offsets = [1, 0], sizes = [1, 16], strides = [1, 1]} : vector<3x16xf32> to vector<1x16xf32>
    %c1_97 = arith.constant 1 : index
    %c0_98 = arith.constant 0 : index
    %c0_99 = arith.constant 0 : index
    %556 = vector.load %arg9[%c1_97, %c0_98, %c0_99] : memref<3x16x32xf32, #tpu.memory_space<vmem>>, vector<1x16x32xf32>
    %557 = vector.shape_cast %556 : vector<1x16x32xf32> to vector<16x32xf32>
    %cst_100 = arith.constant dense<0.000000e+00> : vector<1x32xf32>
    %558 = tpu.matmul %555, %557, %cst_100 {dimension_numbers = #tpu.dot_dimension_numbers<[1], [0], [0], [1], [0, 0, 1, 1], [], []>} : vector<1x16xf32>, vector<16x32xf32>, vector<1x32xf32> -> vector<1x32xf32>
    %559 = arith.addf %554, %558 : vector<1x32xf32>
    %560 = vector.extract_strided_slice %548 {offsets = [2, 0], sizes = [1, 16], strides = [1, 1]} : vector<3x16xf32> to vector<1x16xf32>
    %c2 = arith.constant 2 : index
    %c0_101 = arith.constant 0 : index
    %c0_102 = arith.constant 0 : index
    %561 = vector.load %arg9[%c2, %c0_101, %c0_102] : memref<3x16x32xf32, #tpu.memory_space<vmem>>, vector<1x16x32xf32>
    %562 = vector.shape_cast %561 : vector<1x16x32xf32> to vector<16x32xf32>
    %cst_103 = arith.constant dense<0.000000e+00> : vector<1x32xf32>
    %563 = tpu.matmul %560, %562, %cst_103 {dimension_numbers = #tpu.dot_dimension_numbers<[1], [0], [0], [1], [0, 0, 1, 1], [], []>} : vector<1x16xf32>, vector<16x32xf32>, vector<1x32xf32> -> vector<1x32xf32>
    %564 = arith.addf %559, %563 : vector<1x32xf32>
    %cst_104 = arith.constant 0.000000e+00 : f32
    %565 = vector.broadcast %cst_104 : f32 to vector<1x32xf32>
    %566 = arith.cmpf oge, %564, %565 : vector<1x32xf32>
    %cst_105 = arith.constant 0.00999999977 : f32
    %567 = vector.broadcast %cst_105 : f32 to vector<1x32xf32>
    %568 = arith.mulf %567, %564 : vector<1x32xf32>
    %569 = arith.select %566, %564, %568 : vector<1x32xi1>, vector<1x32xf32>
    %c0_106 = arith.constant 0 : index
    %c0_107 = arith.constant 0 : index
    %570 = vector.load %arg11[%c0_106, %c0_107] : memref<32x128xf32, #tpu.memory_space<vmem>>, vector<32x128xf32>
    %cst_108 = arith.constant dense<0.000000e+00> : vector<1x128xf32>
    %571 = tpu.matmul %569, %570, %cst_108 {dimension_numbers = #tpu.dot_dimension_numbers<[1], [0], [0], [1], [0, 0, 1, 1], [], []>} : vector<1x32xf32>, vector<32x128xf32>, vector<1x128xf32> -> vector<1x128xf32>
    %c0_109 = arith.constant 0 : index
    %c0_110 = arith.constant 0 : index
    %572 = vector.load %arg12[%c0_109, %c0_110] : memref<1x128xf32, #tpu.memory_space<vmem>>, vector<1x128xf32>
    %573 = arith.addf %571, %572 : vector<1x128xf32>
    %574 = vector.extract_strided_slice %543 {offsets = [0, 384], sizes = [3, 384], strides = [1, 1]} : vector<3x768xbf16> to vector<3x384xbf16>
    %575 = vector.extract_strided_slice %463 {offsets = [0, 384], sizes = [16, 384], strides = [1, 1]} : vector<16x768xbf16> to vector<16x384xbf16>
    %cst_111 = arith.constant dense<0.000000e+00> : vector<3x16xf32>
    %576 = tpu.matmul %574, %575, %cst_111 {dimension_numbers = #tpu.dot_dimension_numbers<[1], [1], [0], [0], [0, 0, 1, 0], [], []>} : vector<3x384xbf16>, vector<16x384xbf16>, vector<3x16xf32> -> vector<3x16xf32>
    %cst_112 = arith.constant 7.812500e-03 : f32
    %577 = vector.broadcast %cst_112 : f32 to vector<3x16xf32>
    %578 = arith.mulf %576, %577 : vector<3x16xf32>
    %c0_113 = arith.constant 0 : index
    %c0_114 = arith.constant 0 : index
    %579 = vector.load %arg10[%c0_113, %c0_114] : memref<1x32xf32, #tpu.memory_space<vmem>>, vector<1x32xf32>
    %580 = vector.extract_strided_slice %578 {offsets = [0, 0], sizes = [1, 16], strides = [1, 1]} : vector<3x16xf32> to vector<1x16xf32>
    %c0_115 = arith.constant 0 : index
    %c0_116 = arith.constant 0 : index
    %c0_117 = arith.constant 0 : index
    %581 = vector.load %arg9[%c0_115, %c0_116, %c0_117] : memref<3x16x32xf32, #tpu.memory_space<vmem>>, vector<1x16x32xf32>
    %582 = vector.shape_cast %581 : vector<1x16x32xf32> to vector<16x32xf32>
    %cst_118 = arith.constant dense<0.000000e+00> : vector<1x32xf32>
    %583 = tpu.matmul %580, %582, %cst_118 {dimension_numbers = #tpu.dot_dimension_numbers<[1], [0], [0], [1], [0, 0, 1, 1], [], []>} : vector<1x16xf32>, vector<16x32xf32>, vector<1x32xf32> -> vector<1x32xf32>
    %584 = arith.addf %579, %583 : vector<1x32xf32>
    %585 = vector.extract_strided_slice %578 {offsets = [1, 0], sizes = [1, 16], strides = [1, 1]} : vector<3x16xf32> to vector<1x16xf32>
    %c1_119 = arith.constant 1 : index
    %c0_120 = arith.constant 0 : index
    %c0_121 = arith.constant 0 : index
    %586 = vector.load %arg9[%c1_119, %c0_120, %c0_121] : memref<3x16x32xf32, #tpu.memory_space<vmem>>, vector<1x16x32xf32>
    %587 = vector.shape_cast %586 : vector<1x16x32xf32> to vector<16x32xf32>
    %cst_122 = arith.constant dense<0.000000e+00> : vector<1x32xf32>
    %588 = tpu.matmul %585, %587, %cst_122 {dimension_numbers = #tpu.dot_dimension_numbers<[1], [0], [0], [1], [0, 0, 1, 1], [], []>} : vector<1x16xf32>, vector<16x32xf32>, vector<1x32xf32> -> vector<1x32xf32>
    %589 = arith.addf %584, %588 : vector<1x32xf32>
    %590 = vector.extract_strided_slice %578 {offsets = [2, 0], sizes = [1, 16], strides = [1, 1]} : vector<3x16xf32> to vector<1x16xf32>
    %c2_123 = arith.constant 2 : index
    %c0_124 = arith.constant 0 : index
    %c0_125 = arith.constant 0 : index
    %591 = vector.load %arg9[%c2_123, %c0_124, %c0_125] : memref<3x16x32xf32, #tpu.memory_space<vmem>>, vector<1x16x32xf32>
    %592 = vector.shape_cast %591 : vector<1x16x32xf32> to vector<16x32xf32>
    %cst_126 = arith.constant dense<0.000000e+00> : vector<1x32xf32>
    %593 = tpu.matmul %590, %592, %cst_126 {dimension_numbers = #tpu.dot_dimension_numbers<[1], [0], [0], [1], [0, 0, 1, 1], [], []>} : vector<1x16xf32>, vector<16x32xf32>, vector<1x32xf32> -> vector<1x32xf32>
    %594 = arith.addf %589, %593 : vector<1x32xf32>
    %cst_127 = arith.constant 0.000000e+00 : f32
    %595 = vector.broadcast %cst_127 : f32 to vector<1x32xf32>
    %596 = arith.cmpf oge, %594, %595 : vector<1x32xf32>
    %cst_128 = arith.constant 0.00999999977 : f32
    %597 = vector.broadcast %cst_128 : f32 to vector<1x32xf32>
    %598 = arith.mulf %597, %594 : vector<1x32xf32>
    %599 = arith.select %596, %594, %598 : vector<1x32xi1>, vector<1x32xf32>
    %c0_129 = arith.constant 0 : index
    %c0_130 = arith.constant 0 : index
    %600 = vector.load %arg11[%c0_129, %c0_130] : memref<32x128xf32, #tpu.memory_space<vmem>>, vector<32x128xf32>
    %cst_131 = arith.constant dense<0.000000e+00> : vector<1x128xf32>
    %601 = tpu.matmul %599, %600, %cst_131 {dimension_numbers = #tpu.dot_dimension_numbers<[1], [0], [0], [1], [0, 0, 1, 1], [], []>} : vector<1x32xf32>, vector<32x128xf32>, vector<1x128xf32> -> vector<1x128xf32>
    %c0_132 = arith.constant 0 : index
    %c0_133 = arith.constant 0 : index
    %602 = vector.load %arg12[%c0_132, %c0_133] : memref<1x128xf32, #tpu.memory_space<vmem>>, vector<1x128xf32>
    %603 = arith.addf %601, %602 : vector<1x128xf32>
    %604 = tpu.concatenate %573, %603 in 0 : vector<1x128xf32>, vector<1x128xf32> -> vector<2x128xf32>
    %c0_134 = arith.constant 0 : index
    %c0_135 = arith.constant 0 : index
    %c0_136 = arith.constant 0 : index
    %605 = vector.load %arg13[%c0_134, %c0_135, %c0_136] : memref<1x2x128xf32, #tpu.memory_space<vmem>>, vector<1x2x128xf32>
    %606 = vector.shape_cast %605 : vector<1x2x128xf32> to vector<2x128xf32>
    %607 = vector.shape_cast %604 : vector<2x128xf32> to vector<1x2x128xf32>
    tpu.vector_store %arg13[%c0_134, %c0_135, %c0_136], %607 {strides = array<i32>} : memref<1x2x128xf32, #tpu.memory_space<vmem>>, vector<1x2x128xf32>,
    return
  }
  func.func @transform_0(%arg0: i32) -> (i32, i32, i32) {
    %c0_i32 = arith.constant 0 : i32
    %c0_i32_0 = arith.constant 0 : i32
    %c0_i32_1 = arith.constant 0 : i32
    return %arg0, %c0_i32, %c0_i32_0 : i32, i32, i32
  }
  func.func @transform_1(%arg0: i32) -> (i32, i32) {
    %c0_i32 = arith.constant 0 : i32
    %c0_i32_0 = arith.constant 0 : i32
    %c0_i32_1 = arith.constant 0 : i32
    return %c0_i32, %c0_i32_0 : i32, i32
  }
  func.func @transform_2(%arg0: i32) -> (i32, i32, i32) {
    %c0_i32 = arith.constant 0 : i32
    %c0_i32_0 = arith.constant 0 : i32
    %c0_i32_1 = arith.constant 0 : i32
    %c0_i32_2 = arith.constant 0 : i32
    return %c0_i32, %c0_i32_0, %c0_i32_1 : i32, i32, i32
  }
  func.func @transform_3(%arg0: i32) -> (i32, i32, i32) {
    %c0_i32 = arith.constant 0 : i32
    %c0_i32_0 = arith.constant 0 : i32
    %c0_i32_1 = arith.constant 0 : i32
    %c0_i32_2 = arith.constant 0 : i32
    return %c0_i32, %c0_i32_0, %c0_i32_1 : i32, i32, i32
  }
  func.func @transform_4(%arg0: i32) -> (i32, i32, i32) {
    %c0_i32 = arith.constant 0 : i32
    %c0_i32_0 = arith.constant 0 : i32
    %c0_i32_1 = arith.constant 0 : i32
    %c0_i32_2 = arith.constant 0 : i32
    return %c0_i32, %c0_i32_0, %c0_i32_1 : i32, i32, i32
  }
  func.func @transform_5(%arg0: i32) -> (i32, i32, i32) {
    %c0_i32 = arith.constant 0 : i32
    %c0_i32_0 = arith.constant 0 : i32
    %c0_i32_1 = arith.constant 0 : i32
    %c0_i32_2 = arith.constant 0 : i32
    return %c0_i32, %c0_i32_0, %c0_i32_1 : i32, i32, i32
  }
  func.func @transform_6(%arg0: i32) -> (i32, i32) {
    %c0_i32 = arith.constant 0 : i32
    %c0_i32_0 = arith.constant 0 : i32
    %c0_i32_1 = arith.constant 0 : i32
    return %c0_i32, %c0_i32_0 : i32, i32
  }
  func.func @transform_7(%arg0: i32) -> (i32, i32) {
    %c0_i32 = arith.constant 0 : i32
    %c0_i32_0 = arith.constant 0 : i32
    %c0_i32_1 = arith.constant 0 : i32
    return %c0_i32, %c0_i32_0 : i32, i32
  }
  func.func @transform_8(%arg0: i32) -> (i32, i32, i32) {
    %c0_i32 = arith.constant 0 : i32
    %c0_i32_0 = arith.constant 0 : i32
    %c0_i32_1 = arith.constant 0 : i32
    %c0_i32_2 = arith.constant 0 : i32
    return %c0_i32, %c0_i32_0, %c0_i32_1 : i32, i32, i32
  }
  func.func @transform_9(%arg0: i32) -> (i32, i32) {
    %c0_i32 = arith.constant 0 : i32
    %c0_i32_0 = arith.constant 0 : i32
    %c0_i32_1 = arith.constant 0 : i32
    return %c0_i32, %c0_i32_0 : i32, i32
  }
  func.func @transform_10(%arg0: i32) -> (i32, i32) {
    %c0_i32 = arith.constant 0 : i32
    %c0_i32_0 = arith.constant 0 : i32
    %c0_i32_1 = arith.constant 0 : i32
    return %c0_i32, %c0_i32_0 : i32, i32
  }
  func.func @transform_11(%arg0: i32) -> (i32, i32) {
    %c0_i32 = arith.constant 0 : i32
    %c0_i32_0 = arith.constant 0 : i32
    %c0_i32_1 = arith.constant 0 : i32
    return %c0_i32, %c0_i32_0 : i32, i32
  }
  func.func @transform_12(%arg0: i32) -> (i32, i32, i32) {
    %c0_i32 = arith.constant 0 : i32
    %c0_i32_0 = arith.constant 0 : i32
    %c0_i32_1 = arith.constant 0 : i32
    return %arg0, %c0_i32, %c0_i32_0 : i32, i32, i32
  }
}

</mosaic_0001>

<llo_original>
// kernel: model_forward.1
$region0: #{model_forward.1}
  #allocation0 [shape = 'u32[]', space=smem, size = 0x4, offset = 0x4, fixed_abs, tag = 'smem constant byte address 0x4 - core index']
  #allocation1 [shape = 'u32[72,128]{1,0:T(1,128)}', space=vmem, size = 0x9000, scoped, tag = 'internal scratch']
  %s0 = inlined_call_operand.hbm [shape: f32[2,1,768], index: 0, kind: input, shape index: {}]
  %s1 = inlined_call_operand.vmem [shape: f32[16,1], index: 1, kind: input, shape index: {}]
  %s2 = inlined_call_operand.vmem [shape: bf16[2,48,16], index: 2, kind: input, shape index: {}]
  %s3 = inlined_call_operand.vmem [shape: bf16[2,16,16], index: 3, kind: input, shape index: {}]
  %s4 = inlined_call_operand.vmem [shape: bf16[2,32,16], index: 4, kind: input, shape index: {}]
  %s5 = inlined_call_operand.hbm [shape: bf16[2,16,16], index: 5, kind: input, shape index: {}]
  %s6 = inlined_call_operand.vmem [shape: bf16[3,16], index: 6, kind: input, shape index: {}]
  %s7 = inlined_call_operand.vmem [shape: bf16[3,16], index: 7, kind: input, shape index: {}]
  %s8 = inlined_call_operand.vmem [shape: f32[3,16,32], index: 8, kind: input, shape index: {}]
  %s9 = inlined_call_operand.vmem [shape: f32[1,32], index: 9, kind: input, shape index: {}]
  %s10 = inlined_call_operand.vmem [shape: f32[32,128], index: 10, kind: input, shape index: {}]
  %s11 = inlined_call_operand.vmem [shape: f32[1,128], index: 11, kind: input, shape index: {}]
  %s12 = inlined_call_operand.hbm [shape: f32[2,2,128], index: 12, kind: output, shape index: {}]
  %s13 = sld [smem:[#allocation0]]
  $region89: #{model_forward.1} parent=0
    _
  %s15 = ssub.s32 1, %s13
  %s16 = scalar_select 0, %s15, %s13
  $region1: #{model_forward.1} parent=0
    #allocation2 [shape = 'u8[6144]{0}', space=vmem, size = 0x1800, scoped, tag = 'input window, operand 0']
    #allocation3 [shape = 's32[2]{0}', space=sflag, size = 0x8, scoped, tag = 'scoped memory for model_forward.1']
    #allocation4 [shape = 's32[2]{0}', space=sflag, size = 0x8, scoped, tag = 'scoped memory for model_forward.1']
    #allocation5 [shape = 'u8[8192]{0}', space=vmem, size = 0x2000, scoped, tag = 'input window, operand 5, single buffered']
    #allocation6 [shape = 's32[1]{0}', space=sflag, size = 0x4, scoped, tag = 'scoped memory for model_forward.1']
    #allocation7 [shape = 'u8[2048]{0}', space=vmem, size = 0x800, scoped, tag = 'output window, operand 0']
    %17 = vsyncpa [#allocation3], 0
    %s18 = scalar_lea.sflag [#allocation3], 1
    %19 = vsyncpa %s18, 0
    %20 = vsyncpa [#allocation6], 0
    %21 = vsyncpa [#allocation4], 0
    %s22 = scalar_lea.sflag [#allocation4], 1
    %23 = vsyncpa %s22, 0
    loop: start=0, step=1, limit=4
    $region2: #{model_forward.1} parent=1 // loop_pre_header
      _
    $region3: #{model_forward.1} parent=1 // loop_header
      %s25 = sphi 0, %s29
      %p26 = scmp.ge.s32.totalorder %s25, 4
      %s35 = sphi 0, %s37
      %s38 = sphi 0, %s35
      %s39 = sphi 0, %s38
      %s55 = sphi 0, %s39
      %s59 = sphi 0, %s59
      %s61 = sphi 0, %s59
      %s62 = sphi 0, %s61
      %s76 = sphi 0, %s62
      %s80 = sphi 0, %s80
      %s82 = sphi 0, %s80
      %s83 = sphi 0, %s82
      %s97 = sphi 0, %s83
      %s101 = sphi 0, %s101
      %s103 = sphi 0, %s101
      %s104 = sphi 0, %s103
      %s118 = sphi 0, %s104
      %s122 = sphi 0, %s122
      %s124 = sphi 0, %s122
      %s125 = sphi 0, %s124
      %s139 = sphi 0, %s125
      %s143 = sphi 0, %s143
      %s145 = sphi 0, %s143
      %s146 = sphi 0, %s145
      %s160 = sphi 0, %s146
      %s164 = sphi 0, %s164
      %s166 = sphi 0, %s164
      %s167 = sphi 0, %s166
      %s181 = sphi 0, %s167
      %s185 = sphi 0, %s185
      %s187 = sphi 0, %s185
      %s188 = sphi 0, %s187
      %s202 = sphi 0, %s188
      %s206 = sphi 0, %s206
      %s208 = sphi 0, %s206
      %s209 = sphi 0, %s208
      %s223 = sphi 0, %s209
      %s227 = sphi 0, %s227
      %s229 = sphi 0, %s227
      %s230 = sphi 0, %s229
      %s244 = sphi 0, %s230
      %s248 = sphi 0, %s248
      %s250 = sphi 0, %s248
      %s251 = sphi 0, %s250
      %s265 = sphi 0, %s251
      %s269 = sphi 0, %s269
      %s271 = sphi 0, %s269
      %s272 = sphi 0, %s271
      %s286 = sphi 0, %s272
      %s292 = sphi 0, %s294
      %s295 = sphi 0, %s292
      %s296 = sphi 0, %s295
      %s312 = sphi 0, %s296
    $region4: #{model_forward.1} parent=1 // loop_header_branch
      %28 = sbr.rel (%p26) target = $region8
    $region5: #{model_forward.1} parent=1 // loop_body
      %s30 = ssub.s32 %s25, 1
      %s31 = ssub.s32 %s25, 2
      %s32 = sadd.s32 %s25, 1
      %s33 = ssub.s32 %s25, %s32
      %p34 = scmp.eq.s32.totalorder %s33, 0
      %s36 = sadd.s32 %s35, 1
      %s37 = scalar_select %p34, %s35, %s36
      %p40 = pneg %p34
      %p41 = scmp.eq.s32.totalorder %s25, 1
      %p42 = por %p40, %p41
      %p43 = scmp.ne.s32.totalorder %s35, %s38
      %p44 = scmp.eq.s32.totalorder %s25, 0
      %p45 = por %p43, %p44
      %p46 = scmp.ne.s32.totalorder %s35, %s38
      %p47 = scmp.eq.s32.totalorder %s30, 1
      %p48 = por %p46, %p47
      %p49 = scmp.ne.s32.totalorder %s38, %s39
      %p50 = scmp.eq.s32.totalorder %s30, 0
      %p51 = por %p49, %p50
      %p52 = scmp.ne.s32.totalorder %s38, %s39
      %p53 = scmp.eq.s32.totalorder %s31, 1
      %p54 = por %p52, %p53
      %p56 = scmp.ne.s32.totalorder %s39, %s55
      %p57 = scmp.eq.s32.totalorder %s31, 0
      %p58 = por %p56, %p57
      %s60 = sadd.s32 %s59, 1
      %p63 = scmp.eq.s32.totalorder %s25, 1
      %p64 = scmp.ne.s32.totalorder %s59, %s61
      %p65 = scmp.eq.s32.totalorder %s25, 0
      %p66 = por %p64, %p65
      %p67 = scmp.ne.s32.totalorder %s59, %s61
      %p68 = scmp.eq.s32.totalorder %s30, 1
      %p69 = por %p67, %p68
      %p70 = scmp.ne.s32.totalorder %s61, %s62
      %p71 = scmp.eq.s32.totalorder %s30, 0
      %p72 = por %p70, %p71
      %p73 = scmp.ne.s32.totalorder %s61, %s62
      %p74 = scmp.eq.s32.totalorder %s31, 1
      %p75 = por %p73, %p74
      %p77 = scmp.ne.s32.totalorder %s62, %s76
      %p78 = scmp.eq.s32.totalorder %s31, 0
      %p79 = por %p77, %p78
      %s81 = sadd.s32 %s80, 1
      %p84 = scmp.eq.s32.totalorder %s25, 1
      %p85 = scmp.ne.s32.totalorder %s80, %s82
      %p86 = scmp.eq.s32.totalorder %s25, 0
      %p87 = por %p85, %p86
      %p88 = scmp.ne.s32.totalorder %s80, %s82
      %p89 = scmp.eq.s32.totalorder %s30, 1
      %p90 = por %p88, %p89
      %p91 = scmp.ne.s32.totalorder %s82, %s83
      %p92 = scmp.eq.s32.totalorder %s30, 0
      %p93 = por %p91, %p92
      %p94 = scmp.ne.s32.totalorder %s82, %s83
      %p95 = scmp.eq.s32.totalorder %s31, 1
      %p96 = por %p94, %p95
      %p98 = scmp.ne.s32.totalorder %s83, %s97
      %p99 = scmp.eq.s32.totalorder %s31, 0
      %p100 = por %p98, %p99
      %s102 = sadd.s32 %s101, 1
      %p105 = scmp.eq.s32.totalorder %s25, 1
      %p106 = scmp.ne.s32.totalorder %s101, %s103
      %p107 = scmp.eq.s32.totalorder %s25, 0
      %p108 = por %p106, %p107
      %p109 = scmp.ne.s32.totalorder %s101, %s103
      %p110 = scmp.eq.s32.totalorder %s30, 1
      %p111 = por %p109, %p110
      %p112 = scmp.ne.s32.totalorder %s103, %s104
      %p113 = scmp.eq.s32.totalorder %s30, 0
      %p114 = por %p112, %p113
      %p115 = scmp.ne.s32.totalorder %s103, %s104
      %p116 = scmp.eq.s32.totalorder %s31, 1
      %p117 = por %p115, %p116
      %p119 = scmp.ne.s32.totalorder %s104, %s118
      %p120 = scmp.eq.s32.totalorder %s31, 0
      %p121 = por %p119, %p120
      %s123 = sadd.s32 %s122, 1
      %p126 = scmp.eq.s32.totalorder %s25, 1
      %p127 = scmp.ne.s32.totalorder %s122, %s124
      %p128 = scmp.eq.s32.totalorder %s25, 0
      %p129 = por %p127, %p128
      %p130 = scmp.ne.s32.totalorder %s122, %s124
      %p131 = scmp.eq.s32.totalorder %s30, 1
      %p132 = por %p130, %p131
      %p133 = scmp.ne.s32.totalorder %s124, %s125
      %p134 = scmp.eq.s32.totalorder %s30, 0
      %p135 = por %p133, %p134
      %p136 = scmp.ne.s32.totalorder %s124, %s125
      %p137 = scmp.eq.s32.totalorder %s31, 1
      %p138 = por %p136, %p137
      %p140 = scmp.ne.s32.totalorder %s125, %s139
      %p141 = scmp.eq.s32.totalorder %s31, 0
      %p142 = por %p140, %p141
      %s144 = sadd.s32 %s143, 1
      %p147 = scmp.eq.s32.totalorder %s25, 1
      %p148 = scmp.ne.s32.totalorder %s143, %s145
      %p149 = scmp.eq.s32.totalorder %s25, 0
      %p150 = por %p148, %p149
      %p151 = scmp.ne.s32.totalorder %s143, %s145
      %p152 = scmp.eq.s32.totalorder %s30, 1
      %p153 = por %p151, %p152
      %p154 = scmp.ne.s32.totalorder %s145, %s146
      %p155 = scmp.eq.s32.totalorder %s30, 0
      %p156 = por %p154, %p155
      %p157 = scmp.ne.s32.totalorder %s145, %s146
      %p158 = scmp.eq.s32.totalorder %s31, 1
      %p159 = por %p157, %p158
      %p161 = scmp.ne.s32.totalorder %s146, %s160
      %p162 = scmp.eq.s32.totalorder %s31, 0
      %p163 = por %p161, %p162
      %s165 = sadd.s32 %s164, 1
      %p168 = scmp.eq.s32.totalorder %s25, 1
      %p169 = scmp.ne.s32.totalorder %s164, %s166
      %p170 = scmp.eq.s32.totalorder %s25, 0
      %p171 = por %p169, %p170
      %p172 = scmp.ne.s32.totalorder %s164, %s166
      %p173 = scmp.eq.s32.totalorder %s30, 1
      %p174 = por %p172, %p173
      %p175 = scmp.ne.s32.totalorder %s166, %s167
      %p176 = scmp.eq.s32.totalorder %s30, 0
      %p177 = por %p175, %p176
      %p178 = scmp.ne.s32.totalorder %s166, %s167
      %p179 = scmp.eq.s32.totalorder %s31, 1
      %p180 = por %p178, %p179
      %p182 = scmp.ne.s32.totalorder %s167, %s181
      %p183 = scmp.eq.s32.totalorder %s31, 0
      %p184 = por %p182, %p183
      %s186 = sadd.s32 %s185, 1
      %p189 = scmp.eq.s32.totalorder %s25, 1
      %p190 = scmp.ne.s32.totalorder %s185, %s187
      %p191 = scmp.eq.s32.totalorder %s25, 0
      %p192 = por %p190, %p191
      %p193 = scmp.ne.s32.totalorder %s185, %s187
      %p194 = scmp.eq.s32.totalorder %s30, 1
      %p195 = por %p193, %p194
      %p196 = scmp.ne.s32.totalorder %s187, %s188
      %p197 = scmp.eq.s32.totalorder %s30, 0
      %p198 = por %p196, %p197
      %p199 = scmp.ne.s32.totalorder %s187, %s188
      %p200 = scmp.eq.s32.totalorder %s31, 1
      %p201 = por %p199, %p200
      %p203 = scmp.ne.s32.totalorder %s188, %s202
      %p204 = scmp.eq.s32.totalorder %s31, 0
      %p205 = por %p203, %p204
      %s207 = sadd.s32 %s206, 1
      %p210 = scmp.eq.s32.totalorder %s25, 1
      %p211 = scmp.ne.s32.totalorder %s206, %s208
      %p212 = scmp.eq.s32.totalorder %s25, 0
      %p213 = por %p211, %p212
      %p214 = scmp.ne.s32.totalorder %s206, %s208
      %p215 = scmp.eq.s32.totalorder %s30, 1
      %p216 = por %p214, %p215
      %p217 = scmp.ne.s32.totalorder %s208, %s209
      %p218 = scmp.eq.s32.totalorder %s30, 0
      %p219 = por %p217, %p218
      %p220 = scmp.ne.s32.totalorder %s208, %s209
      %p221 = scmp.eq.s32.totalorder %s31, 1
      %p222 = por %p220, %p221
      %p224 = scmp.ne.s32.totalorder %s209, %s223
      %p225 = scmp.eq.s32.totalorder %s31, 0
      %p226 = por %p224, %p225
      %s228 = sadd.s32 %s227, 1
      %p231 = scmp.eq.s32.totalorder %s25, 1
      %p232 = scmp.ne.s32.totalorder %s227, %s229
      %p233 = scmp.eq.s32.totalorder %s25, 0
      %p234 = por %p232, %p233
      %p235 = scmp.ne.s32.totalorder %s227, %s229
      %p236 = scmp.eq.s32.totalorder %s30, 1
      %p237 = por %p235, %p236
      %p238 = scmp.ne.s32.totalorder %s229, %s230
      %p239 = scmp.eq.s32.totalorder %s30, 0
      %p240 = por %p238, %p239
      %p241 = scmp.ne.s32.totalorder %s229, %s230
      %p242 = scmp.eq.s32.totalorder %s31, 1
      %p243 = por %p241, %p242
      %p245 = scmp.ne.s32.totalorder %s230, %s244
      %p246 = scmp.eq.s32.totalorder %s31, 0
      %p247 = por %p245, %p246
      %s249 = sadd.s32 %s248, 1
      %p252 = scmp.eq.s32.totalorder %s25, 1
      %p253 = scmp.ne.s32.totalorder %s248, %s250
      %p254 = scmp.eq.s32.totalorder %s25, 0
      %p255 = por %p253, %p254
      %p256 = scmp.ne.s32.totalorder %s248, %s250
      %p257 = scmp.eq.s32.totalorder %s30, 1
      %p258 = por %p256, %p257
      %p259 = scmp.ne.s32.totalorder %s250, %s251
      %p260 = scmp.eq.s32.totalorder %s30, 0
      %p261 = por %p259, %p260
      %p262 = scmp.ne.s32.totalorder %s250, %s251
      %p263 = scmp.eq.s32.totalorder %s31, 1
      %p264 = por %p262, %p263
      %p266 = scmp.ne.s32.totalorder %s251, %s265
      %p267 = scmp.eq.s32.totalorder %s31, 0
      %p268 = por %p266, %p267
      %s270 = sadd.s32 %s269, 1
      %p273 = scmp.eq.s32.totalorder %s25, 1
      %p274 = scmp.ne.s32.totalorder %s269, %s271
      %p275 = scmp.eq.s32.totalorder %s25, 0
      %p276 = por %p274, %p275
      %p277 = scmp.ne.s32.totalorder %s269, %s271
      %p278 = scmp.eq.s32.totalorder %s30, 1
      %p279 = por %p277, %p278
      %p280 = scmp.ne.s32.totalorder %s271, %s272
      %p281 = scmp.eq.s32.totalorder %s30, 0
      %p282 = por %p280, %p281
      %p283 = scmp.ne.s32.totalorder %s271, %s272
      %p284 = scmp.eq.s32.totalorder %s31, 1
      %p285 = por %p283, %p284
      %p287 = scmp.ne.s32.totalorder %s272, %s286
      %p288 = scmp.eq.s32.totalorder %s31, 0
      %p289 = por %p287, %p288
      %s290 = ssub.s32 %s25, %s32
      %p291 = scmp.eq.s32.totalorder %s290, 0
      %s293 = sadd.s32 %s292, 1
      %s294 = scalar_select %p291, %s292, %s293
      %p297 = pneg %p291
      %p298 = scmp.eq.s32.totalorder %s25, 1
      %p299 = por %p297, %p298
      %p300 = scmp.ne.s32.totalorder %s292, %s295
      %p301 = scmp.eq.s32.totalorder %s25, 0
      %p302 = por %p300, %p301
      %p303 = scmp.ne.s32.totalorder %s292, %s295
      %p304 = scmp.eq.s32.totalorder %s30, 1
      %p305 = por %p303, %p304
      %p306 = scmp.ne.s32.totalorder %s295, %s296
      %p307 = scmp.eq.s32.totalorder %s30, 0
      %p308 = por %p306, %p307
      %p309 = scmp.ne.s32.totalorder %s295, %s296
      %p310 = scmp.eq.s32.totalorder %s31, 1
      %p311 = por %p309, %p310
      %p313 = scmp.ne.s32.totalorder %s296, %s312
      %p314 = scmp.eq.s32.totalorder %s31, 0
      %p315 = por %p313, %p314
      %p316 = scmp.le.s32.totalorder 1, %s25
      %p317 = scmp.lt.s32.totalorder %s25, 3
      %p318 = pnand %p316, %p317
      %p319 = pneg %p318
      // Predicated region
      $region9: #{model_forward.1} parent=5 // pred_check
        _
      $region10: #{model_forward.1} parent=5 // pred_check_branch
        %321 = sbr.rel (%p318) target = $region12
      $region11: #{model_forward.1} parent=5 // pred_region
        %s322 = ssub.s32 %s25, 1
        // Predicated region
        $region13: #{model_forward.1} parent=11 // pred_check
          %p323 = pneg %p72
        $region14: #{model_forward.1} parent=11 // pred_check_branch
          %325 = sbr.rel (%p323) target = $region16
        $region15: #{model_forward.1} parent=11 // pred_region
          _
        $region16: #{model_forward.1} parent=11 // pred_fallthru
          _
        // Predicated region
        $region17: #{model_forward.1} parent=11 // pred_check
          %p326 = pneg %p93
        $region18: #{model_forward.1} parent=11 // pred_check_branch
          %328 = sbr.rel (%p326) target = $region20
        $region19: #{model_forward.1} parent=11 // pred_region
          _
        $region20: #{model_forward.1} parent=11 // pred_fallthru
          _
        // Predicated region
        $region21: #{model_forward.1} parent=11 // pred_check
          %p329 = pneg %p114
        $region22: #{model_forward.1} parent=11 // pred_check_branch
          %331 = sbr.rel (%p329) target = $region24
        $region23: #{model_forward.1} parent=11 // pred_region
          _
        $region24: #{model_forward.1} parent=11 // pred_fallthru
          _
        // Predicated region
        $region25: #{model_forward.1} parent=11 // pred_check
          %p332 = pneg %p135
        $region26: #{model_forward.1} parent=11 // pred_check_branch
          %334 = sbr.rel (%p332) target = $region28
        $region27: #{model_forward.1} parent=11 // pred_region
          _
        $region28: #{model_forward.1} parent=11 // pred_fallthru
          _
        // Predicated region
        $region29: #{model_forward.1} parent=11 // pred_check
          %p335 = pneg %p156
        $region30: #{model_forward.1} parent=11 // pred_check_branch
          %337 = sbr.rel (%p335) target = $region32
        $region31: #{model_forward.1} parent=11 // pred_region
          %339 = vsyncadd [#allocation6], 0
          %s340 = sshll.u32 %s5, 4
          %s341 = int_to_ptr.hbm [resolvable:$true] %s340
          %s342 = sshll.u32 [#allocation5], 4
          %s343 = int_to_ptr.vmem [resolvable:$true] %s342
          %348 = dma.hbm_to_vmem [thread:$0]  %s341, 256, %s343, [#allocation6], 64, 64, 4
        $region32: #{model_forward.1} parent=11 // pred_fallthru
          _
        // Predicated region
        $region33: #{model_forward.1} parent=11 // pred_check
          %p349 = pneg %p177
        $region34: #{model_forward.1} parent=11 // pred_check_branch
          %351 = sbr.rel (%p349) target = $region36
        $region35: #{model_forward.1} parent=11 // pred_region
          _
        $region36: #{model_forward.1} parent=11 // pred_fallthru
          _
        // Predicated region
        $region37: #{model_forward.1} parent=11 // pred_check
          %p352 = pneg %p198
        $region38: #{model_forward.1} parent=11 // pred_check_branch
          %354 = sbr.rel (%p352) target = $region40
        $region39: #{model_forward.1} parent=11 // pred_region
          _
        $region40: #{model_forward.1} parent=11 // pred_fallthru
          _
        // Predicated region
        $region41: #{model_forward.1} parent=11 // pred_check
          %p355 = pneg %p219
        $region42: #{model_forward.1} parent=11 // pred_check_branch
          %357 = sbr.rel (%p355) target = $region44
        $region43: #{model_forward.1} parent=11 // pred_region
          _
        $region44: #{model_forward.1} parent=11 // pred_fallthru
          _
        // Predicated region
        $region45: #{model_forward.1} parent=11 // pred_check
          %p358 = pneg %p240
        $region46: #{model_forward.1} parent=11 // pred_check_branch
          %360 = sbr.rel (%p358) target = $region48
        $region47: #{model_forward.1} parent=11 // pred_region
          _
        $region48: #{model_forward.1} parent=11 // pred_fallthru
          _
        // Predicated region
        $region49: #{model_forward.1} parent=11 // pred_check
          %p361 = pneg %p261
        $region50: #{model_forward.1} parent=11 // pred_check_branch
          %363 = sbr.rel (%p361) target = $region52
        $region51: #{model_forward.1} parent=11 // pred_region
          _
        $region52: #{model_forward.1} parent=11 // pred_fallthru
          _
        // Predicated region
        $region53: #{model_forward.1} parent=11 // pred_check
          %p364 = pneg %p282
        $region54: #{model_forward.1} parent=11 // pred_check_branch
          %366 = sbr.rel (%p364) target = $region56
        $region55: #{model_forward.1} parent=11 // pred_region
          _
        $region56: #{model_forward.1} parent=11 // pred_fallthru
          _
      $region12: #{model_forward.1} parent=5 // pred_fallthru
        _
      %p367 = scmp.lt.s32.totalorder %s25, 2
      // Predicated region
      $region57: #{model_forward.1} parent=5 // pred_check
        %p368 = pneg %p367
      $region58: #{model_forward.1} parent=5 // pred_check_branch
        %370 = sbr.rel (%p368) target = $region60
      $region59: #{model_forward.1} parent=5 // pred_region
        // Predicated region
        $region61: #{model_forward.1} parent=59 // pred_check
          %p371 = pneg %p45
        $region62: #{model_forward.1} parent=59 // pred_check_branch
          %373 = sbr.rel (%p371) target = $region64
        $region63: #{model_forward.1} parent=59 // pred_region
          %s374 = sand.u32 %s35, 1
          %s375 = scalar_lea.sflag [#allocation3], %s374
          %s376 = sand.u32 %s35, 1
          %s377 = smul.addr %s376, 6
          %s378 = scalar_lea.vmem [#allocation2], %s377
          %380 = vsyncadd %s375, 0
          %s381 = smul.addr %s25, 6
          %s382 = scalar_lea.hbm %s0, %s381
          %s384 = sshll.u32 %s382, 4
          %s385 = int_to_ptr.hbm [resolvable:$true] %s384
          %s386 = sshll.u32 %s378, 4
          %s387 = int_to_ptr.vmem [resolvable:$true] %s386
          %389 = dma.hbm_to_vmem [thread:$0]  %s385, 96, %s387, %s375
        $region64: #{model_forward.1} parent=59 // pred_fallthru
          _
      $region60: #{model_forward.1} parent=5 // pred_fallthru
        _
      %p390 = scmp.le.s32.totalorder 1, %s25
      %p391 = scmp.lt.s32.totalorder %s25, 3
      %p392 = pnand %p390, %p391
      %p393 = pneg %p392
      // Predicated region
      $region65: #{model_forward.1} parent=5 // pred_check
        _
      $region66: #{model_forward.1} parent=5 // pred_check_branch
        %395 = sbr.rel (%p392) target = $region68
      $region67: #{model_forward.1} parent=5 // pred_region
        %s396 = ssub.s32 %s25, 1
        %s397 = sand.u32 %s38, 1
        %s398 = scalar_lea.sflag [#allocation3], %s397
        %s399 = sand.u32 %s38, 1
        %s400 = smul.addr %s399, 6
        %s401 = scalar_lea.vmem [#allocation2], %s400
        // Predicated region
        $region69: #{model_forward.1} parent=67 // pred_check
          %p402 = pneg %p51
        $region70: #{model_forward.1} parent=67 // pred_check_branch
          %404 = sbr.rel (%p402) target = $region72
        $region71: #{model_forward.1} parent=67 // pred_region
          %406 = dma.done %s398, 96
        $region72: #{model_forward.1} parent=67 // pred_fallthru
          _
        // Predicated region
        $region73: #{model_forward.1} parent=67 // pred_check
          %p407 = pneg %p156
        $region74: #{model_forward.1} parent=67 // pred_check_branch
          %409 = sbr.rel (%p407) target = $region76
        $region75: #{model_forward.1} parent=67 // pred_region
          %411 = dma.done [#allocation6], 256
        $region76: #{model_forward.1} parent=67 // pred_fallthru
          _
        %s412 = sand.u32 %s38, 1
        %s413 = scalar_lea.sflag [#allocation3], %s412
        %s414 = sand.u32 %s38, 1
        %s415 = smul.addr %s414, 6
        %s416 = scalar_lea.vmem [#allocation2], %s415
        %p417 = pneg %p51
        %p418 = pneg %p48
        %p419 = pneg %p72
        %p420 = pneg %p69
        %p421 = pneg %p93
        %p422 = pneg %p90
        %p423 = pneg %p114
        %p424 = pneg %p111
        %p425 = pneg %p135
        %p426 = pneg %p132
        %p427 = pneg %p156
        %p428 = pneg %p153
        %p429 = pneg %p177
        %p430 = pneg %p174
        %p431 = pneg %p198
        %p432 = pneg %p195
        %p433 = pneg %p219
        %p434 = pneg %p216
        %p435 = pneg %p240
        %p436 = pneg %p237
        %p437 = pneg %p261
        %p438 = pneg %p258
        %p439 = pneg %p282
        %p440 = pneg %p279
        %p441 = pneg %p308
        %p442 = pneg %p305
        %s443 = sand.u32 %s295, 1
        %s444 = scalar_lea.sflag [#allocation4], %s443
        %s445 = sand.u32 %s295, 1
        %s446 = smul.addr %s445, 2
        %s447 = scalar_lea.vmem [#allocation7], %s446
        %v449 = vld [vmem:[%s1] sm:$0xff]
        %v450 = vld [vmem:[%s1 + $0x8] sm:$0xff]
        %v451 = vld [vmem:[%s401] sm:$0x3f]
        %453 = vset.pattern.permute.xlu0 0
        %454 = vperm.xlu0 %453, %v449
        %v455 = vpop.permute.xlu0 %454
        %458 = vset.pattern.permute.xlu0 0
        %459 = vperm.xlu0 %458, %v450
        %v460 = vpop.permute.xlu0 %459
        %v463 = vperm.slane %v451, 0
        %v464 = vperm.slane %v451, 1
        %v465 = vperm.slane %v451, 2
        %v466 = vperm.slane %v451, 3
        %v467 = vperm.slane %v451, 4
        %v468 = vperm.slane %v451, 5
        %v475 = vmul.f32 %v455, %v463
        %v476 = vmul.f32 %v455, %v464
        %v477 = vmul.f32 %v455, %v465
        %v478 = vmul.f32 %v455, %v466
        %v479 = vmul.f32 %v455, %v467
        %v480 = vmul.f32 %v455, %v468
        %v481 = vmul.f32 %v460, %v463
        %v482 = vmul.f32 %v460, %v464
        %v483 = vmul.f32 %v460, %v465
        %v484 = vmul.f32 %v460, %v466
        %v485 = vmul.f32 %v460, %v467
        %v486 = vmul.f32 %v460, %v468
        %v487 = vld [vmem:[%s2] sm:$0xf]
        %v488 = vld [vmem:[%s2 + $0x4] sm:$0xf]
        %v489 = vld [vmem:[%s2 + $0x8] sm:$0xf]
        %v490 = vld [vmem:[%s2 + $0xc] sm:$0xf]
        %v491 = vld [vmem:[%s2 + $0x10] sm:$0xf]
        %v492 = vld [vmem:[%s2 + $0x14] sm:$0xf]
        %v493 = vld [vmem:[%s3] sm:$0xf]
        %v494 = vld [vmem:[%s3 + $0x4] sm:$0xf]
        %v495 = vld [vmem:[%s4] sm:$0xf]
        %v496 = vld [vmem:[%s4 + $0x4] sm:$0xf]
        %v497 = vld [vmem:[%s4 + $0x8] sm:$0xf]
        %v498 = vld [vmem:[%s4 + $0xc] sm:$0xf]
        %v499 = vld [vmem:[#allocation5] sm:$0xf]
        %v500 = vld [vmem:[#allocation5 + $0x4] sm:$0xf]
        %v501 = vpack.c.bf16 %v481, %v475
        %v502 = vpack.c.bf16 %v482, %v476
        %v503 = vpack.c.bf16 %v483, %v477
        %v504 = vpack.c.bf16 %v484, %v478
        %v505 = vpack.c.bf16 %v485, %v479
        %v506 = vpack.c.bf16 %v486, %v480
        %v513 = vunpack.c.l.b16 %v487
        %v514 = vunpack.c.l.b16 %v488
        %v515 = vunpack.c.l.b16 %v489
        %v516 = vunpack.c.l.b16 %v490
        %v517 = vunpack.c.l.b16 %v491
        %v518 = vunpack.c.l.b16 %v492
        %v519 = vpack.c.b16 %v514, %v513
        %v520 = vpack.c.b16 %v516, %v515
        %v521 = vpack.c.b16 %v518, %v517
        %vm522 = vcmask 130048
        %v524 = vsel %vm522, %v519, 0
        %v527 = vsel %vm522, %v520, 0
        %v530 = vsel %vm522, %v521, 0
        %532 = vmatpush.bf16.msra.mxu0 0
        %533 = vmatpush.bf16.msra.mxu0 0
        %534 = vmatpush.bf16.msra.mxu0 0
        %535 = vmatpush.bf16.msra.mxu0 0
        %536 = vmatpush.bf16.msra.mxu0 0
        %537 = vmatpush.bf16.msra.mxu0 0
        %538 = vmatpush.bf16.msra.mxu0 0
        %539 = vmatpush.bf16.msra.mxu0 %v501
        %540 = vmatmul.bf16.gmra.mxu0 %v524
        %v541 = vpop.f32.mrf.mxu0
        %v542 = vadd.f32 0.0, %v541
        %v543 = vpop.f32.mrf.mxu0
        %v544 = vadd.f32 0.0, %v543
        %545 = vmatmul.bf16.gmra.mxu0 %v527
        %v546 = vpop.f32.mrf.mxu0
        %v547 = vadd.f32 0.0, %v546
        %v548 = vpop.f32.mrf.mxu0
        %v549 = vadd.f32 0.0, %v548
        %550 = vmatmul.bf16.gmra.mxu0 %v530
        %v551 = vpop.f32.mrf.mxu0
        %v552 = vadd.f32 0.0, %v551
        %v553 = vpop.f32.mrf.mxu0
        %v554 = vadd.f32 0.0, %v553
        %555 = vdwg.mxu0
        %556 = vmatpush.bf16.msra.mxu0 0
        %557 = vmatpush.bf16.msra.mxu0 0
        %558 = vmatpush.bf16.msra.mxu0 0
        %559 = vmatpush.bf16.msra.mxu0 0
        %560 = vmatpush.bf16.msra.mxu0 0
        %561 = vmatpush.bf16.msra.mxu0 0
        %562 = vmatpush.bf16.msra.mxu0 0
        %563 = vmatpush.bf16.msra.mxu0 %v502
        %564 = vmatmul.bf16.gmra.mxu0 %v524
        %v565 = vpop.f32.mrf.mxu0
        %v566 = vadd.f32 0.0, %v565
        %v567 = vpop.f32.mrf.mxu0
        %v568 = vadd.f32 0.0, %v567
        %569 = vmatmul.bf16.gmra.mxu0 %v527
        %v570 = vpop.f32.mrf.mxu0
        %v571 = vadd.f32 0.0, %v570
        %v572 = vpop.f32.mrf.mxu0
        %v573 = vadd.f32 0.0, %v572
        %574 = vmatmul.bf16.gmra.mxu0 %v530
        %v575 = vpop.f32.mrf.mxu0
        %v576 = vadd.f32 0.0, %v575
        %v577 = vpop.f32.mrf.mxu0
        %v578 = vadd.f32 0.0, %v577
        %579 = vdwg.mxu0
        %580 = vmatpush.bf16.msra.mxu0 0
        %581 = vmatpush.bf16.msra.mxu0 0
        %582 = vmatpush.bf16.msra.mxu0 0
        %583 = vmatpush.bf16.msra.mxu0 0
        %584 = vmatpush.bf16.msra.mxu0 0
        %585 = vmatpush.bf16.msra.mxu0 0
        %586 = vmatpush.bf16.msra.mxu0 0
        %587 = vmatpush.bf16.msra.mxu0 %v503
        %588 = vmatmul.bf16.gmra.mxu0 %v524
        %v589 = vpop.f32.mrf.mxu0
        %v590 = vadd.f32 0.0, %v589
        %v591 = vpop.f32.mrf.mxu0
        %v592 = vadd.f32 0.0, %v591
        %593 = vmatmul.bf16.gmra.mxu0 %v527
        %v594 = vpop.f32.mrf.mxu0
        %v595 = vadd.f32 0.0, %v594
        %v596 = vpop.f32.mrf.mxu0
        %v597 = vadd.f32 0.0, %v596
        %598 = vmatmul.bf16.gmra.mxu0 %v530
        %v599 = vpop.f32.mrf.mxu0
        %v600 = vadd.f32 0.0, %v599
        %v601 = vpop.f32.mrf.mxu0
        %v602 = vadd.f32 0.0, %v601
        %603 = vdwg.mxu0
        %604 = vmatpush.bf16.msra.mxu0 0
        %605 = vmatpush.bf16.msra.mxu0 0
        %606 = vmatpush.bf16.msra.mxu0 0
        %607 = vmatpush.bf16.msra.mxu0 0
        %608 = vmatpush.bf16.msra.mxu0 0
        %609 = vmatpush.bf16.msra.mxu0 0
        %610 = vmatpush.bf16.msra.mxu0 0
        %611 = vmatpush.bf16.msra.mxu0 %v504
        %612 = vmatmul.bf16.gmra.mxu0 %v524
        %v613 = vpop.f32.mrf.mxu0
        %v614 = vadd.f32 0.0, %v613
        %v615 = vpop.f32.mrf.mxu0
        %v616 = vadd.f32 0.0, %v615
        %617 = vmatmul.bf16.gmra.mxu0 %v527
        %v618 = vpop.f32.mrf.mxu0
        %v619 = vadd.f32 0.0, %v618
        %v620 = vpop.f32.mrf.mxu0
        %v621 = vadd.f32 0.0, %v620
        %622 = vmatmul.bf16.gmra.mxu0 %v530
        %v623 = vpop.f32.mrf.mxu0
        %v624 = vadd.f32 0.0, %v623
        %v625 = vpop.f32.mrf.mxu0
        %v626 = vadd.f32 0.0, %v625
        %627 = vdwg.mxu0
        %628 = vmatpush.bf16.msra.mxu0 0
        %629 = vmatpush.bf16.msra.mxu0 0
        %630 = vmatpush.bf16.msra.mxu0 0
        %631 = vmatpush.bf16.msra.mxu0 0
        %632 = vmatpush.bf16.msra.mxu0 0
        %633 = vmatpush.bf16.msra.mxu0 0
        %634 = vmatpush.bf16.msra.mxu0 0
        %635 = vmatpush.bf16.msra.mxu0 %v505
        %636 = vmatmul.bf16.gmra.mxu0 %v524
        %v637 = vpop.f32.mrf.mxu0
        %v638 = vadd.f32 0.0, %v637
        %v639 = vpop.f32.mrf.mxu0
        %v640 = vadd.f32 0.0, %v639
        %641 = vmatmul.bf16.gmra.mxu0 %v527
        %v642 = vpop.f32.mrf.mxu0
        %v643 = vadd.f32 0.0, %v642
        %v644 = vpop.f32.mrf.mxu0
        %v645 = vadd.f32 0.0, %v644
        %646 = vmatmul.bf16.gmra.mxu0 %v530
        %v647 = vpop.f32.mrf.mxu0
        %v648 = vadd.f32 0.0, %v647
        %v649 = vpop.f32.mrf.mxu0
        %v650 = vadd.f32 0.0, %v649
        %651 = vdwg.mxu0
        %652 = vmatpush.bf16.msra.mxu0 0
        %653 = vmatpush.bf16.msra.mxu0 0
        %654 = vmatpush.bf16.msra.mxu0 0
        %655 = vmatpush.bf16.msra.mxu0 0
        %656 = vmatpush.bf16.msra.mxu0 0
        %657 = vmatpush.bf16.msra.mxu0 0
        %658 = vmatpush.bf16.msra.mxu0 0
        %659 = vmatpush.bf16.msra.mxu0 %v506
        %660 = vmatmul.bf16.gmra.mxu0 %v524
        %v661 = vpop.f32.mrf.mxu0
        %v662 = vadd.f32 0.0, %v661
        %v663 = vpop.f32.mrf.mxu0
        %v664 = vadd.f32 0.0, %v663
        %665 = vmatmul.bf16.gmra.mxu0 %v527
        %v666 = vpop.f32.mrf.mxu0
        %v667 = vadd.f32 0.0, %v666
        %v668 = vpop.f32.mrf.mxu0
        %v669 = vadd.f32 0.0, %v668
        %670 = vmatmul.bf16.gmra.mxu0 %v530
        %v671 = vpop.f32.mrf.mxu0
        %v672 = vadd.f32 0.0, %v671
        %v673 = vpop.f32.mrf.mxu0
        %v674 = vadd.f32 0.0, %v673
        %675 = vdwg.mxu0
        %v676 = vpack.c.bf16 %v566, %v542
        %v677 = vpack.c.bf16 %v590, %v590
        %v678 = vpack.c.bf16 %v571, %v547
        %v679 = vpack.c.bf16 %v595, %v595
        %v680 = vpack.c.bf16 %v576, %v552
        %v681 = vpack.c.bf16 1.0, %v600
        %682 = vxpose.xlu0.c.b16.start [1/8] %v676, 128
        %683 = vxpose.xlu0.c.b16.cont [2/8] %v677, 128
        %684 = vxpose.xlu0.c.b16.cont [3/8] 0, 128
        %685 = vxpose.xlu0.c.b16.cont [4/8] 0, 128
        %686 = vxpose.xlu0.c.b16.cont [5/8] 0, 128
        %687 = vxpose.xlu0.c.b16.cont [6/8] 0, 128
        %688 = vxpose.xlu0.c.b16.cont [7/8] 0, 128
        %689 = vxpose.xlu0.c.b16.end [8/8] 0, 128
        %v690 = vpop.trf.xlu0
        %v691 = vpop.trf.xlu0
        %v692 = vpop.trf.xlu0
        %v693 = vpop.trf.xlu0
        %v694 = vpop.trf.xlu0
        %v695 = vpop.trf.xlu0
        %v696 = vpop.trf.xlu0
        %v697 = vpop.trf.xlu0
        %vm698 = vcmask 195584
        %v700 = vsel %vm698, %v690, 0
        %v703 = vsel %vm698, %v691, 0
        %v706 = vsel %vm698, %v692, 0
        %v709 = vsel %vm698, %v693, 0
        %v712 = vsel %vm698, %v694, 0
        %v715 = vsel %vm698, %v695, 0
        %v718 = vsel %vm698, %v696, 0
        %v721 = vsel %vm698, %v697, 0
        %vm723 = vcmask 1043456
        %v725 = vsel %vm723, %v679, 0
        %727 = vmatpush.bf16.msra.mxu0 0
        %728 = vmatpush.bf16.msra.mxu0 0
        %729 = vmatpush.bf16.msra.mxu0 0
        %730 = vmatpush.bf16.msra.mxu0 0
        %731 = vmatpush.bf16.msra.mxu0 0
        %732 = vmatpush.bf16.msra.mxu0 0
        %733 = vmatpush.bf16.msra.mxu0 %v725
        %734 = vmatpush.bf16.msra.mxu0 %v678
        %735 = vmatmul.bf16.gmra.mxu0 %v700
        %v736 = vpop.f32.mrf.mxu0
        %v737 = vadd.f32 0.0, %v736
        %v738 = vpop.f32.mrf.mxu0
        %v739 = vadd.f32 0.0, %v738
        %740 = vmatmul.bf16.gmra.mxu0 %v703
        %v741 = vpop.f32.mrf.mxu0
        %v742 = vadd.f32 0.0, %v741
        %v743 = vpop.f32.mrf.mxu0
        %v744 = vadd.f32 0.0, %v743
        %745 = vmatmul.bf16.gmra.mxu0 %v706
        %v746 = vpop.f32.mrf.mxu0
        %v747 = vadd.f32 0.0, %v746
        %v748 = vpop.f32.mrf.mxu0
        %v749 = vadd.f32 0.0, %v748
        %750 = vmatmul.bf16.gmra.mxu0 %v709
        %v751 = vpop.f32.mrf.mxu0
        %v752 = vadd.f32 0.0, %v751
        %v753 = vpop.f32.mrf.mxu0
        %v754 = vadd.f32 0.0, %v753
        %755 = vmatmul.bf16.gmra.mxu0 %v712
        %v756 = vpop.f32.mrf.mxu0
        %v757 = vadd.f32 0.0, %v756
        %v758 = vpop.f32.mrf.mxu0
        %v759 = vadd.f32 0.0, %v758
        %760 = vmatmul.bf16.gmra.mxu0 %v715
        %v761 = vpop.f32.mrf.mxu0
        %v762 = vadd.f32 0.0, %v761
        %v763 = vpop.f32.mrf.mxu0
        %v764 = vadd.f32 0.0, %v763
        %765 = vmatmul.bf16.gmra.mxu0 %v718
        %v766 = vpop.f32.mrf.mxu0
        %v767 = vadd.f32 0.0, %v766
        %v768 = vpop.f32.mrf.mxu0
        %v769 = vadd.f32 0.0, %v768
        %770 = vmatmul.bf16.gmra.mxu0 %v721
        %v771 = vpop.f32.mrf.mxu0
        %v772 = vadd.f32 0.0, %v771
        %v773 = vpop.f32.mrf.mxu0
        %v774 = vadd.f32 0.0, %v773
        %775 = vdwg.mxu0
        %776 = vmax.xlane.f32.xlu0 %v737
        %v777 = vpop.xlane.xlu0 %776
        %778 = vmax.xlane.f32.xlu0 %v739
        %v779 = vpop.xlane.xlu0 %778
        %780 = vmax.xlane.f32.xlu0 %v742
        %v781 = vpop.xlane.xlu0 %780
        %782 = vmax.xlane.f32.xlu0 %v744
        %v783 = vpop.xlane.xlu0 %782
        %784 = vmax.xlane.f32.xlu0 %v747
        %v785 = vpop.xlane.xlu0 %784
        %786 = vmax.xlane.f32.xlu0 %v749
        %v787 = vpop.xlane.xlu0 %786
        %788 = vmax.xlane.f32.xlu0 %v752
        %v789 = vpop.xlane.xlu0 %788
        %790 = vmax.xlane.f32.xlu0 %v754
        %v791 = vpop.xlane.xlu0 %790
        %792 = vmax.xlane.f32.xlu0 %v757
        %v793 = vpop.xlane.xlu0 %792
        %794 = vmax.xlane.f32.xlu0 %v759
        %v795 = vpop.xlane.xlu0 %794
        %796 = vmax.xlane.f32.xlu0 %v762
        %v797 = vpop.xlane.xlu0 %796
        %798 = vmax.xlane.f32.xlu0 %v764
        %v799 = vpop.xlane.xlu0 %798
        %800 = vmax.xlane.f32.xlu0 %v767
        %v801 = vpop.xlane.xlu0 %800
        %802 = vmax.xlane.f32.xlu0 %v769
        %v803 = vpop.xlane.xlu0 %802
        %804 = vmax.xlane.f32.xlu0 %v772
        %v805 = vpop.xlane.xlu0 %804
        %806 = vmax.xlane.f32.xlu0 %v774
        %v807 = vpop.xlane.xlu0 %806
        %v808 = vsub.f32 %v737, %v777
        %v809 = vsub.f32 %v739, %v779
        %v810 = vsub.f32 %v742, %v781
        %v811 = vsub.f32 %v744, %v783
        %v812 = vsub.f32 %v747, %v785
        %v813 = vsub.f32 %v749, %v787
        %v814 = vsub.f32 %v752, %v789
        %v815 = vsub.f32 %v754, %v791
        %v816 = vsub.f32 %v757, %v793
        %v817 = vsub.f32 %v759, %v795
        %v818 = vsub.f32 %v762, %v797
        %v819 = vsub.f32 %v764, %v799
        %v820 = vsub.f32 %v767, %v801
        %v821 = vsub.f32 %v769, %v803
        %v822 = vsub.f32 %v772, %v805
        %v823 = vsub.f32 %v774, %v807
        %v824 = vmul.f32 %v808, 1.442695
        %v825 = vpow.pop %v824
        %v826 = vmul.f32 %v809, 1.442695
        %v827 = vpow.pop %v826
        %v828 = vmul.f32 %v810, 1.442695
        %v829 = vpow.pop %v828
        %v830 = vmul.f32 %v811, 1.442695
        %v831 = vpow.pop %v830
        %v832 = vmul.f32 %v812, 1.442695
        %v833 = vpow.pop %v832
        %v834 = vmul.f32 %v813, 1.442695
        %v835 = vpow.pop %v834
        %v836 = vmul.f32 %v814, 1.442695
        %v837 = vpow.pop %v836
        %v838 = vmul.f32 %v815, 1.442695
        %v839 = vpow.pop %v838
        %v840 = vmul.f32 %v816, 1.442695
        %v841 = vpow.pop %v840
        %v842 = vmul.f32 %v817, 1.442695
        %v843 = vpow.pop %v842
        %v844 = vmul.f32 %v818, 1.442695
        %v845 = vpow.pop %v844
        %v846 = vmul.f32 %v819, 1.442695
        %v847 = vpow.pop %v846
        %v848 = vmul.f32 %v820, 1.442695
        %v849 = vpow.pop %v848
        %v850 = vmul.f32 %v821, 1.442695
        %v851 = vpow.pop %v850
        %v852 = vmul.f32 %v822, 1.442695
        %v853 = vpow.pop %v852
        %v854 = vmul.f32 %v823, 1.442695
        %v855 = vpow.pop %v854
        %v856 = vpack.c.bf16 %v827, %v825
        %v857 = vpack.c.bf16 %v831, %v829
        %v858 = vpack.c.bf16 %v835, %v833
        %v859 = vpack.c.bf16 %v839, %v837
        %v860 = vpack.c.bf16 %v843, %v841
        %v861 = vpack.c.bf16 %v847, %v845
        %v862 = vpack.c.bf16 %v851, %v849
        %v863 = vpack.c.bf16 %v855, %v853
        %864 = vmatpush.bf16.xpose.msra.mxu0 %v863
        %865 = vmatpush.bf16.xpose.msra.mxu0 %v862
        %866 = vmatpush.bf16.xpose.msra.mxu0 %v861
        %867 = vmatpush.bf16.xpose.msra.mxu0 %v860
        %868 = vmatpush.bf16.xpose.msra.mxu0 %v859
        %869 = vmatpush.bf16.xpose.msra.mxu0 %v858
        %870 = vmatpush.bf16.xpose.msra.mxu0 %v857
        %871 = vmatpush.bf16.xpose.msra.mxu0 %v856
        %872 = vmatmul.bf16.gmra.mxu0 %v680
        %v873 = vpop.f32.mrf.mxu0
        %v874 = vadd.f32 0.0, %v873
        %v875 = vpop.f32.mrf.mxu0
        %v876 = vadd.f32 0.0, %v875
        %877 = vmatmul.bf16.gmra.mxu0 %v681
        %v878 = vpop.f32.mrf.mxu0
        %v879 = vadd.f32 0.0, %v878
        %v880 = vpop.f32.mrf.mxu0
        %v881 = vadd.f32 0.0, %v880
        %882 = vdwg.mxu0
        %v883 = vrcp.pop %v881
        %v884 = vperm.slane %v883, 0
        %v885 = vmul.f32 %v874, %v884
        %v886 = vmul.f32 %v876, %v884
        %v887 = vmul.f32 %v879, %v884
        %v888 = vpack.c.bf16 %v568, %v544
        %v889 = vpack.c.bf16 %v592, %v592
        %v890 = vpack.c.bf16 %v573, %v549
        %v891 = vpack.c.bf16 %v597, %v597
        %v892 = vpack.c.bf16 %v578, %v554
        %v893 = vpack.c.bf16 1.0, %v602
        %894 = vxpose.xlu0.c.b16.start [1/8] %v888, 128
        %895 = vxpose.xlu0.c.b16.cont [2/8] %v889, 128
        %896 = vxpose.xlu0.c.b16.cont [3/8] 0, 128
        %897 = vxpose.xlu0.c.b16.cont [4/8] 0, 128
        %898 = vxpose.xlu0.c.b16.cont [5/8] 0, 128
        %899 = vxpose.xlu0.c.b16.cont [6/8] 0, 128
        %900 = vxpose.xlu0.c.b16.cont [7/8] 0, 128
        %901 = vxpose.xlu0.c.b16.end [8/8] 0, 128
        %v902 = vpop.trf.xlu0
        %v903 = vpop.trf.xlu0
        %v904 = vpop.trf.xlu0
        %v905 = vpop.trf.xlu0
        %v906 = vpop.trf.xlu0
        %v907 = vpop.trf.xlu0
        %v908 = vpop.trf.xlu0
        %v909 = vpop.trf.xlu0
        %v911 = vsel %vm698, %v902, 0
        %v914 = vsel %vm698, %v903, 0
        %v917 = vsel %vm698, %v904, 0
        %v920 = vsel %vm698, %v905, 0
        %v923 = vsel %vm698, %v906, 0
        %v926 = vsel %vm698, %v907, 0
        %v929 = vsel %vm698, %v908, 0
        %v932 = vsel %vm698, %v909, 0
        %v935 = vsel %vm723, %v891, 0
        %937 = vmatpush.bf16.msra.mxu0 0
        %938 = vmatpush.bf16.msra.mxu0 0
        %939 = vmatpush.bf16.msra.mxu0 0
        %940 = vmatpush.bf16.msra.mxu0 0
        %941 = vmatpush.bf16.msra.mxu0 0
        %942 = vmatpush.bf16.msra.mxu0 0
        %943 = vmatpush.bf16.msra.mxu0 %v935
        %944 = vmatpush.bf16.msra.mxu0 %v890
        %945 = vmatmul.bf16.gmra.mxu0 %v911
        %v946 = vpop.f32.mrf.mxu0
        %v947 = vadd.f32 0.0, %v946
        %v948 = vpop.f32.mrf.mxu0
        %v949 = vadd.f32 0.0, %v948
        %950 = vmatmul.bf16.gmra.mxu0 %v914
        %v951 = vpop.f32.mrf.mxu0
        %v952 = vadd.f32 0.0, %v951
        %v953 = vpop.f32.mrf.mxu0
        %v954 = vadd.f32 0.0, %v953
        %955 = vmatmul.bf16.gmra.mxu0 %v917
        %v956 = vpop.f32.mrf.mxu0
        %v957 = vadd.f32 0.0, %v956
        %v958 = vpop.f32.mrf.mxu0
        %v959 = vadd.f32 0.0, %v958
        %960 = vmatmul.bf16.gmra.mxu0 %v920
        %v961 = vpop.f32.mrf.mxu0
        %v962 = vadd.f32 0.0, %v961
        %v963 = vpop.f32.mrf.mxu0
        %v964 = vadd.f32 0.0, %v963
        %965 = vmatmul.bf16.gmra.mxu0 %v923
        %v966 = vpop.f32.mrf.mxu0
        %v967 = vadd.f32 0.0, %v966
        %v968 = vpop.f32.mrf.mxu0
        %v969 = vadd.f32 0.0, %v968
        %970 = vmatmul.bf16.gmra.mxu0 %v926
        %v971 = vpop.f32.mrf.mxu0
        %v972 = vadd.f32 0.0, %v971
        %v973 = vpop.f32.mrf.mxu0
        %v974 = vadd.f32 0.0, %v973
        %975 = vmatmul.bf16.gmra.mxu0 %v929
        %v976 = vpop.f32.mrf.mxu0
        %v977 = vadd.f32 0.0, %v976
        %v978 = vpop.f32.mrf.mxu0
        %v979 = vadd.f32 0.0, %v978
        %980 = vmatmul.bf16.gmra.mxu0 %v932
        %v981 = vpop.f32.mrf.mxu0
        %v982 = vadd.f32 0.0, %v981
        %v983 = vpop.f32.mrf.mxu0
        %v984 = vadd.f32 0.0, %v983
        %985 = vdwg.mxu0
        %986 = vmax.xlane.f32.xlu0 %v947
        %v987 = vpop.xlane.xlu0 %986
        %988 = vmax.xlane.f32.xlu0 %v949
        %v989 = vpop.xlane.xlu0 %988
        %990 = vmax.xlane.f32.xlu0 %v952
        %v991 = vpop.xlane.xlu0 %990
        %992 = vmax.xlane.f32.xlu0 %v954
        %v993 = vpop.xlane.xlu0 %992
        %994 = vmax.xlane.f32.xlu0 %v957
        %v995 = vpop.xlane.xlu0 %994
        %996 = vmax.xlane.f32.xlu0 %v959
        %v997 = vpop.xlane.xlu0 %996
        %998 = vmax.xlane.f32.xlu0 %v962
        %v999 = vpop.xlane.xlu0 %998
        %1000 = vmax.xlane.f32.xlu0 %v964
        %v1001 = vpop.xlane.xlu0 %1000
        %1002 = vmax.xlane.f32.xlu0 %v967
        %v1003 = vpop.xlane.xlu0 %1002
        %1004 = vmax.xlane.f32.xlu0 %v969
        %v1005 = vpop.xlane.xlu0 %1004
        %1006 = vmax.xlane.f32.xlu0 %v972
        %v1007 = vpop.xlane.xlu0 %1006
        %1008 = vmax.xlane.f32.xlu0 %v974
        %v1009 = vpop.xlane.xlu0 %1008
        %1010 = vmax.xlane.f32.xlu0 %v977
        %v1011 = vpop.xlane.xlu0 %1010
        %1012 = vmax.xlane.f32.xlu0 %v979
        %v1013 = vpop.xlane.xlu0 %1012
        %1014 = vmax.xlane.f32.xlu0 %v982
        %v1015 = vpop.xlane.xlu0 %1014
        %1016 = vmax.xlane.f32.xlu0 %v984
        %v1017 = vpop.xlane.xlu0 %1016
        %v1018 = vsub.f32 %v947, %v987
        %v1019 = vsub.f32 %v949, %v989
        %v1020 = vsub.f32 %v952, %v991
        %v1021 = vsub.f32 %v954, %v993
        %v1022 = vsub.f32 %v957, %v995
        %v1023 = vsub.f32 %v959, %v997
        %v1024 = vsub.f32 %v962, %v999
        %v1025 = vsub.f32 %v964, %v1001
        %v1026 = vsub.f32 %v967, %v1003
        %v1027 = vsub.f32 %v969, %v1005
        %v1028 = vsub.f32 %v972, %v1007
        %v1029 = vsub.f32 %v974, %v1009
        %v1030 = vsub.f32 %v977, %v1011
        %v1031 = vsub.f32 %v979, %v1013
        %v1032 = vsub.f32 %v982, %v1015
        %v1033 = vsub.f32 %v984, %v1017
        %v1034 = vmul.f32 %v1018, 1.442695
        %v1035 = vpow.pop %v1034
        %v1036 = vmul.f32 %v1019, 1.442695
        %v1037 = vpow.pop %v1036
        %v1038 = vmul.f32 %v1020, 1.442695
        %v1039 = vpow.pop %v1038
        %v1040 = vmul.f32 %v1021, 1.442695
        %v1041 = vpow.pop %v1040
        %v1042 = vmul.f32 %v1022, 1.442695
        %v1043 = vpow.pop %v1042
        %v1044 = vmul.f32 %v1023, 1.442695
        %v1045 = vpow.pop %v1044
        %v1046 = vmul.f32 %v1024, 1.442695
        %v1047 = vpow.pop %v1046
        %v1048 = vmul.f32 %v1025, 1.442695
        %v1049 = vpow.pop %v1048
        %v1050 = vmul.f32 %v1026, 1.442695
        %v1051 = vpow.pop %v1050
        %v1052 = vmul.f32 %v1027, 1.442695
        %v1053 = vpow.pop %v1052
        %v1054 = vmul.f32 %v1028, 1.442695
        %v1055 = vpow.pop %v1054
        %v1056 = vmul.f32 %v1029, 1.442695
        %v1057 = vpow.pop %v1056
        %v1058 = vmul.f32 %v1030, 1.442695
        %v1059 = vpow.pop %v1058
        %v1060 = vmul.f32 %v1031, 1.442695
        %v1061 = vpow.pop %v1060
        %v1062 = vmul.f32 %v1032, 1.442695
        %v1063 = vpow.pop %v1062
        %v1064 = vmul.f32 %v1033, 1.442695
        %v1065 = vpow.pop %v1064
        %v1066 = vpack.c.bf16 %v1037, %v1035
        %v1067 = vpack.c.bf16 %v1041, %v1039
        %v1068 = vpack.c.bf16 %v1045, %v1043
        %v1069 = vpack.c.bf16 %v1049, %v1047
        %v1070 = vpack.c.bf16 %v1053, %v1051
        %v1071 = vpack.c.bf16 %v1057, %v1055
        %v1072 = vpack.c.bf16 %v1061, %v1059
        %v1073 = vpack.c.bf16 %v1065, %v1063
        %1074 = vmatpush.bf16.xpose.msra.mxu0 %v1073
        %1075 = vmatpush.bf16.xpose.msra.mxu0 %v1072
        %1076 = vmatpush.bf16.xpose.msra.mxu0 %v1071
        %1077 = vmatpush.bf16.xpose.msra.mxu0 %v1070
        %1078 = vmatpush.bf16.xpose.msra.mxu0 %v1069
        %1079 = vmatpush.bf16.xpose.msra.mxu0 %v1068
        %1080 = vmatpush.bf16.xpose.msra.mxu0 %v1067
        %1081 = vmatpush.bf16.xpose.msra.mxu0 %v1066
        %1082 = vmatmul.bf16.gmra.mxu0 %v892
        %v1083 = vpop.f32.mrf.mxu0
        %v1084 = vadd.f32 0.0, %v1083
        %v1085 = vpop.f32.mrf.mxu0
        %v1086 = vadd.f32 0.0, %v1085
        %1087 = vmatmul.bf16.gmra.mxu0 %v893
        %v1088 = vpop.f32.mrf.mxu0
        %v1089 = vadd.f32 0.0, %v1088
        %v1090 = vpop.f32.mrf.mxu0
        %v1091 = vadd.f32 0.0, %v1090
        %1092 = vdwg.mxu0
        %v1093 = vrcp.pop %v1091
        %v1094 = vperm.slane %v1093, 0
        %v1095 = vmul.f32 %v1084, %v1094
        %v1096 = vmul.f32 %v1086, %v1094
        %v1097 = vmul.f32 %v1089, %v1094
        %v1098 = vpack.c.bf16 %v638, %v614
        %v1099 = vpack.c.bf16 %v662, %v662
        %v1100 = vpack.c.bf16 %v643, %v619
        %v1101 = vpack.c.bf16 %v667, %v667
        %v1102 = vpack.c.bf16 %v648, %v624
        %v1103 = vpack.c.bf16 1.0, %v672
        %1104 = vxpose.xlu0.c.b16.start [1/8] %v1098, 128
        %1105 = vxpose.xlu0.c.b16.cont [2/8] %v1099, 128
        %1106 = vxpose.xlu0.c.b16.cont [3/8] 0, 128
        %1107 = vxpose.xlu0.c.b16.cont [4/8] 0, 128
        %1108 = vxpose.xlu0.c.b16.cont [5/8] 0, 128
        %1109 = vxpose.xlu0.c.b16.cont [6/8] 0, 128
        %1110 = vxpose.xlu0.c.b16.cont [7/8] 0, 128
        %1111 = vxpose.xlu0.c.b16.end [8/8] 0, 128
        %v1112 = vpop.trf.xlu0
        %v1113 = vpop.trf.xlu0
        %v1114 = vpop.trf.xlu0
        %v1115 = vpop.trf.xlu0
        %v1116 = vpop.trf.xlu0
        %v1117 = vpop.trf.xlu0
        %v1118 = vpop.trf.xlu0
        %v1119 = vpop.trf.xlu0
        %v1121 = vsel %vm698, %v1112, 0
        %v1124 = vsel %vm698, %v1113, 0
        %v1127 = vsel %vm698, %v1114, 0
        %v1130 = vsel %vm698, %v1115, 0
        %v1133 = vsel %vm698, %v1116, 0
        %v1136 = vsel %vm698, %v1117, 0
        %v1139 = vsel %vm698, %v1118, 0
        %v1142 = vsel %vm698, %v1119, 0
        %v1145 = vsel %vm723, %v1101, 0
        %1147 = vmatpush.bf16.msra.mxu0 0
        %1148 = vmatpush.bf16.msra.mxu0 0
        %1149 = vmatpush.bf16.msra.mxu0 0
        %1150 = vmatpush.bf16.msra.mxu0 0
        %1151 = vmatpush.bf16.msra.mxu0 0
        %1152 = vmatpush.bf16.msra.mxu0 0
        %1153 = vmatpush.bf16.msra.mxu0 %v1145
        %1154 = vmatpush.bf16.msra.mxu0 %v1100
        %1155 = vmatmul.bf16.gmra.mxu0 %v1121
        %v1156 = vpop.f32.mrf.mxu0
        %v1157 = vadd.f32 0.0, %v1156
        %v1158 = vpop.f32.mrf.mxu0
        %v1159 = vadd.f32 0.0, %v1158
        %1160 = vmatmul.bf16.gmra.mxu0 %v1124
        %v1161 = vpop.f32.mrf.mxu0
        %v1162 = vadd.f32 0.0, %v1161
        %v1163 = vpop.f32.mrf.mxu0
        %v1164 = vadd.f32 0.0, %v1163
        %1165 = vmatmul.bf16.gmra.mxu0 %v1127
        %v1166 = vpop.f32.mrf.mxu0
        %v1167 = vadd.f32 0.0, %v1166
        %v1168 = vpop.f32.mrf.mxu0
        %v1169 = vadd.f32 0.0, %v1168
        %1170 = vmatmul.bf16.gmra.mxu0 %v1130
        %v1171 = vpop.f32.mrf.mxu0
        %v1172 = vadd.f32 0.0, %v1171
        %v1173 = vpop.f32.mrf.mxu0
        %v1174 = vadd.f32 0.0, %v1173
        %1175 = vmatmul.bf16.gmra.mxu0 %v1133
        %v1176 = vpop.f32.mrf.mxu0
        %v1177 = vadd.f32 0.0, %v1176
        %v1178 = vpop.f32.mrf.mxu0
        %v1179 = vadd.f32 0.0, %v1178
        %1180 = vmatmul.bf16.gmra.mxu0 %v1136
        %v1181 = vpop.f32.mrf.mxu0
        %v1182 = vadd.f32 0.0, %v1181
        %v1183 = vpop.f32.mrf.mxu0
        %v1184 = vadd.f32 0.0, %v1183
        %1185 = vmatmul.bf16.gmra.mxu0 %v1139
        %v1186 = vpop.f32.mrf.mxu0
        %v1187 = vadd.f32 0.0, %v1186
        %v1188 = vpop.f32.mrf.mxu0
        %v1189 = vadd.f32 0.0, %v1188
        %1190 = vmatmul.bf16.gmra.mxu0 %v1142
        %v1191 = vpop.f32.mrf.mxu0
        %v1192 = vadd.f32 0.0, %v1191
        %v1193 = vpop.f32.mrf.mxu0
        %v1194 = vadd.f32 0.0, %v1193
        %1195 = vdwg.mxu0
        %1196 = vmax.xlane.f32.xlu0 %v1157
        %v1197 = vpop.xlane.xlu0 %1196
        %1198 = vmax.xlane.f32.xlu0 %v1159
        %v1199 = vpop.xlane.xlu0 %1198
        %1200 = vmax.xlane.f32.xlu0 %v1162
        %v1201 = vpop.xlane.xlu0 %1200
        %1202 = vmax.xlane.f32.xlu0 %v1164
        %v1203 = vpop.xlane.xlu0 %1202
        %1204 = vmax.xlane.f32.xlu0 %v1167
        %v1205 = vpop.xlane.xlu0 %1204
        %1206 = vmax.xlane.f32.xlu0 %v1169
        %v1207 = vpop.xlane.xlu0 %1206
        %1208 = vmax.xlane.f32.xlu0 %v1172
        %v1209 = vpop.xlane.xlu0 %1208
        %1210 = vmax.xlane.f32.xlu0 %v1174
        %v1211 = vpop.xlane.xlu0 %1210
        %1212 = vmax.xlane.f32.xlu0 %v1177
        %v1213 = vpop.xlane.xlu0 %1212
        %1214 = vmax.xlane.f32.xlu0 %v1179
        %v1215 = vpop.xlane.xlu0 %1214
        %1216 = vmax.xlane.f32.xlu0 %v1182
        %v1217 = vpop.xlane.xlu0 %1216
        %1218 = vmax.xlane.f32.xlu0 %v1184
        %v1219 = vpop.xlane.xlu0 %1218
        %1220 = vmax.xlane.f32.xlu0 %v1187
        %v1221 = vpop.xlane.xlu0 %1220
        %1222 = vmax.xlane.f32.xlu0 %v1189
        %v1223 = vpop.xlane.xlu0 %1222
        %1224 = vmax.xlane.f32.xlu0 %v1192
        %v1225 = vpop.xlane.xlu0 %1224
        %1226 = vmax.xlane.f32.xlu0 %v1194
        %v1227 = vpop.xlane.xlu0 %1226
        %v1228 = vsub.f32 %v1157, %v1197
        %v1229 = vsub.f32 %v1159, %v1199
        %v1230 = vsub.f32 %v1162, %v1201
        %v1231 = vsub.f32 %v1164, %v1203
        %v1232 = vsub.f32 %v1167, %v1205
        %v1233 = vsub.f32 %v1169, %v1207
        %v1234 = vsub.f32 %v1172, %v1209
        %v1235 = vsub.f32 %v1174, %v1211
        %v1236 = vsub.f32 %v1177, %v1213
        %v1237 = vsub.f32 %v1179, %v1215
        %v1238 = vsub.f32 %v1182, %v1217
        %v1239 = vsub.f32 %v1184, %v1219
        %v1240 = vsub.f32 %v1187, %v1221
        %v1241 = vsub.f32 %v1189, %v1223
        %v1242 = vsub.f32 %v1192, %v1225
        %v1243 = vsub.f32 %v1194, %v1227
        %v1244 = vmul.f32 %v1228, 1.442695
        %v1245 = vpow.pop %v1244
        %v1246 = vmul.f32 %v1229, 1.442695
        %v1247 = vpow.pop %v1246
        %v1248 = vmul.f32 %v1230, 1.442695
        %v1249 = vpow.pop %v1248
        %v1250 = vmul.f32 %v1231, 1.442695
        %v1251 = vpow.pop %v1250
        %v1252 = vmul.f32 %v1232, 1.442695
        %v1253 = vpow.pop %v1252
        %v1254 = vmul.f32 %v1233, 1.442695
        %v1255 = vpow.pop %v1254
        %v1256 = vmul.f32 %v1234, 1.442695
        %v1257 = vpow.pop %v1256
        %v1258 = vmul.f32 %v1235, 1.442695
        %v1259 = vpow.pop %v1258
        %v1260 = vmul.f32 %v1236, 1.442695
        %v1261 = vpow.pop %v1260
        %v1262 = vmul.f32 %v1237, 1.442695
        %v1263 = vpow.pop %v1262
        %v1264 = vmul.f32 %v1238, 1.442695
        %v1265 = vpow.pop %v1264
        %v1266 = vmul.f32 %v1239, 1.442695
        %v1267 = vpow.pop %v1266
        %v1268 = vmul.f32 %v1240, 1.442695
        %v1269 = vpow.pop %v1268
        %v1270 = vmul.f32 %v1241, 1.442695
        %v1271 = vpow.pop %v1270
        %v1272 = vmul.f32 %v1242, 1.442695
        %v1273 = vpow.pop %v1272
        %v1274 = vmul.f32 %v1243, 1.442695
        %v1275 = vpow.pop %v1274
        %v1276 = vpack.c.bf16 %v1247, %v1245
        %v1277 = vpack.c.bf16 %v1251, %v1249
        %v1278 = vpack.c.bf16 %v1255, %v1253
        %v1279 = vpack.c.bf16 %v1259, %v1257
        %v1280 = vpack.c.bf16 %v1263, %v1261
        %v1281 = vpack.c.bf16 %v1267, %v1265
        %v1282 = vpack.c.bf16 %v1271, %v1269
        %v1283 = vpack.c.bf16 %v1275, %v1273
        %1284 = vmatpush.bf16.xpose.msra.mxu0 %v1283
        %1285 = vmatpush.bf16.xpose.msra.mxu0 %v1282
        %1286 = vmatpush.bf16.xpose.msra.mxu0 %v1281
        %1287 = vmatpush.bf16.xpose.msra.mxu0 %v1280
        %1288 = vmatpush.bf16.xpose.msra.mxu0 %v1279
        %1289 = vmatpush.bf16.xpose.msra.mxu0 %v1278
        %1290 = vmatpush.bf16.xpose.msra.mxu0 %v1277
        %1291 = vmatpush.bf16.xpose.msra.mxu0 %v1276
        %1292 = vmatmul.bf16.gmra.mxu0 %v1102
        %v1293 = vpop.f32.mrf.mxu0
        %v1294 = vadd.f32 0.0, %v1293
        %v1295 = vpop.f32.mrf.mxu0
        %v1296 = vadd.f32 0.0, %v1295
        %1297 = vmatmul.bf16.gmra.mxu0 %v1103
        %v1298 = vpop.f32.mrf.mxu0
        %v1299 = vadd.f32 0.0, %v1298
        %v1300 = vpop.f32.mrf.mxu0
        %v1301 = vadd.f32 0.0, %v1300
        %1302 = vdwg.mxu0
        %v1303 = vrcp.pop %v1301
        %v1304 = vperm.slane %v1303, 0
        %v1305 = vmul.f32 %v1294, %v1304
        %v1306 = vmul.f32 %v1296, %v1304
        %v1307 = vmul.f32 %v1299, %v1304
        %v1308 = vpack.c.bf16 %v640, %v616
        %v1309 = vpack.c.bf16 %v664, %v664
        %v1310 = vpack.c.bf16 %v645, %v621
        %v1311 = vpack.c.bf16 %v669, %v669
        %v1312 = vpack.c.bf16 %v650, %v626
        %v1313 = vpack.c.bf16 1.0, %v674
        %1314 = vxpose.xlu0.c.b16.start [1/8] %v1308, 128
        %1315 = vxpose.xlu0.c.b16.cont [2/8] %v1309, 128
        %1316 = vxpose.xlu0.c.b16.cont [3/8] 0, 128
        %1317 = vxpose.xlu0.c.b16.cont [4/8] 0, 128
        %1318 = vxpose.xlu0.c.b16.cont [5/8] 0, 128
        %1319 = vxpose.xlu0.c.b16.cont [6/8] 0, 128
        %1320 = vxpose.xlu0.c.b16.cont [7/8] 0, 128
        %1321 = vxpose.xlu0.c.b16.end [8/8] 0, 128
        %v1322 = vpop.trf.xlu0
        %v1323 = vpop.trf.xlu0
        %v1324 = vpop.trf.xlu0
        %v1325 = vpop.trf.xlu0
        %v1326 = vpop.trf.xlu0
        %v1327 = vpop.trf.xlu0
        %v1328 = vpop.trf.xlu0
        %v1329 = vpop.trf.xlu0
        %v1331 = vsel %vm698, %v1322, 0
        %v1334 = vsel %vm698, %v1323, 0
        %v1337 = vsel %vm698, %v1324, 0
        %v1340 = vsel %vm698, %v1325, 0
        %v1343 = vsel %vm698, %v1326, 0
        %v1346 = vsel %vm698, %v1327, 0
        %v1349 = vsel %vm698, %v1328, 0
        %v1352 = vsel %vm698, %v1329, 0
        %v1355 = vsel %vm723, %v1311, 0
        %1357 = vmatpush.bf16.msra.mxu0 0
        %1358 = vmatpush.bf16.msra.mxu0 0
        %1359 = vmatpush.bf16.msra.mxu0 0
        %1360 = vmatpush.bf16.msra.mxu0 0
        %1361 = vmatpush.bf16.msra.mxu0 0
        %1362 = vmatpush.bf16.msra.mxu0 0
        %1363 = vmatpush.bf16.msra.mxu0 %v1355
        %1364 = vmatpush.bf16.msra.mxu0 %v1310
        %1365 = vmatmul.bf16.gmra.mxu0 %v1331
        %v1366 = vpop.f32.mrf.mxu0
        %v1367 = vadd.f32 0.0, %v1366
        %v1368 = vpop.f32.mrf.mxu0
        %v1369 = vadd.f32 0.0, %v1368
        %1370 = vmatmul.bf16.gmra.mxu0 %v1334
        %v1371 = vpop.f32.mrf.mxu0
        %v1372 = vadd.f32 0.0, %v1371
        %v1373 = vpop.f32.mrf.mxu0
        %v1374 = vadd.f32 0.0, %v1373
        %1375 = vmatmul.bf16.gmra.mxu0 %v1337
        %v1376 = vpop.f32.mrf.mxu0
        %v1377 = vadd.f32 0.0, %v1376
        %v1378 = vpop.f32.mrf.mxu0
        %v1379 = vadd.f32 0.0, %v1378
        %1380 = vmatmul.bf16.gmra.mxu0 %v1340
        %v1381 = vpop.f32.mrf.mxu0
        %v1382 = vadd.f32 0.0, %v1381
        %v1383 = vpop.f32.mrf.mxu0
        %v1384 = vadd.f32 0.0, %v1383
        %1385 = vmatmul.bf16.gmra.mxu0 %v1343
        %v1386 = vpop.f32.mrf.mxu0
        %v1387 = vadd.f32 0.0, %v1386
        %v1388 = vpop.f32.mrf.mxu0
        %v1389 = vadd.f32 0.0, %v1388
        %1390 = vmatmul.bf16.gmra.mxu0 %v1346
        %v1391 = vpop.f32.mrf.mxu0
        %v1392 = vadd.f32 0.0, %v1391
        %v1393 = vpop.f32.mrf.mxu0
        %v1394 = vadd.f32 0.0, %v1393
        %1395 = vmatmul.bf16.gmra.mxu0 %v1349
        %v1396 = vpop.f32.mrf.mxu0
        %v1397 = vadd.f32 0.0, %v1396
        %v1398 = vpop.f32.mrf.mxu0
        %v1399 = vadd.f32 0.0, %v1398
        %1400 = vmatmul.bf16.gmra.mxu0 %v1352
        %v1401 = vpop.f32.mrf.mxu0
        %v1402 = vadd.f32 0.0, %v1401
        %v1403 = vpop.f32.mrf.mxu0
        %v1404 = vadd.f32 0.0, %v1403
        %1405 = vdwg.mxu0
        %1406 = vmax.xlane.f32.xlu0 %v1367
        %v1407 = vpop.xlane.xlu0 %1406
        %1408 = vmax.xlane.f32.xlu0 %v1369
        %v1409 = vpop.xlane.xlu0 %1408
        %1410 = vmax.xlane.f32.xlu0 %v1372
        %v1411 = vpop.xlane.xlu0 %1410
        %1412 = vmax.xlane.f32.xlu0 %v1374
        %v1413 = vpop.xlane.xlu0 %1412
        %1414 = vmax.xlane.f32.xlu0 %v1377
        %v1415 = vpop.xlane.xlu0 %1414
        %1416 = vmax.xlane.f32.xlu0 %v1379
        %v1417 = vpop.xlane.xlu0 %1416
        %1418 = vmax.xlane.f32.xlu0 %v1382
        %v1419 = vpop.xlane.xlu0 %1418
        %1420 = vmax.xlane.f32.xlu0 %v1384
        %v1421 = vpop.xlane.xlu0 %1420
        %1422 = vmax.xlane.f32.xlu0 %v1387
        %v1423 = vpop.xlane.xlu0 %1422
        %1424 = vmax.xlane.f32.xlu0 %v1389
        %v1425 = vpop.xlane.xlu0 %1424
        %1426 = vmax.xlane.f32.xlu0 %v1392
        %v1427 = vpop.xlane.xlu0 %1426
        %1428 = vmax.xlane.f32.xlu0 %v1394
        %v1429 = vpop.xlane.xlu0 %1428
        %1430 = vmax.xlane.f32.xlu0 %v1397
        %v1431 = vpop.xlane.xlu0 %1430
        %1432 = vmax.xlane.f32.xlu0 %v1399
        %v1433 = vpop.xlane.xlu0 %1432
        %1434 = vmax.xlane.f32.xlu0 %v1402
        %v1435 = vpop.xlane.xlu0 %1434
        %1436 = vmax.xlane.f32.xlu0 %v1404
        %v1437 = vpop.xlane.xlu0 %1436
        %v1438 = vsub.f32 %v1367, %v1407
        %v1439 = vsub.f32 %v1369, %v1409
        %v1440 = vsub.f32 %v1372, %v1411
        %v1441 = vsub.f32 %v1374, %v1413
        %v1442 = vsub.f32 %v1377, %v1415
        %v1443 = vsub.f32 %v1379, %v1417
        %v1444 = vsub.f32 %v1382, %v1419
        %v1445 = vsub.f32 %v1384, %v1421
        %v1446 = vsub.f32 %v1387, %v1423
        %v1447 = vsub.f32 %v1389, %v1425
        %v1448 = vsub.f32 %v1392, %v1427
        %v1449 = vsub.f32 %v1394, %v1429
        %v1450 = vsub.f32 %v1397, %v1431
        %v1451 = vsub.f32 %v1399, %v1433
        %v1452 = vsub.f32 %v1402, %v1435
        %v1453 = vsub.f32 %v1404, %v1437
        %v1454 = vmul.f32 %v1438, 1.442695
        %v1455 = vpow.pop %v1454
        %v1456 = vmul.f32 %v1439, 1.442695
        %v1457 = vpow.pop %v1456
        %v1458 = vmul.f32 %v1440, 1.442695
        %v1459 = vpow.pop %v1458
        %v1460 = vmul.f32 %v1441, 1.442695
        %v1461 = vpow.pop %v1460
        %v1462 = vmul.f32 %v1442, 1.442695
        %v1463 = vpow.pop %v1462
        %v1464 = vmul.f32 %v1443, 1.442695
        %v1465 = vpow.pop %v1464
        %v1466 = vmul.f32 %v1444, 1.442695
        %v1467 = vpow.pop %v1466
        %v1468 = vmul.f32 %v1445, 1.442695
        %v1469 = vpow.pop %v1468
        %v1470 = vmul.f32 %v1446, 1.442695
        %v1471 = vpow.pop %v1470
        %v1472 = vmul.f32 %v1447, 1.442695
        %v1473 = vpow.pop %v1472
        %v1474 = vmul.f32 %v1448, 1.442695
        %v1475 = vpow.pop %v1474
        %v1476 = vmul.f32 %v1449, 1.442695
        %v1477 = vpow.pop %v1476
        %v1478 = vmul.f32 %v1450, 1.442695
        %v1479 = vpow.pop %v1478
        %v1480 = vmul.f32 %v1451, 1.442695
        %v1481 = vpow.pop %v1480
        %v1482 = vmul.f32 %v1452, 1.442695
        %v1483 = vpow.pop %v1482
        %v1484 = vmul.f32 %v1453, 1.442695
        %v1485 = vpow.pop %v1484
        %v1486 = vpack.c.bf16 %v1457, %v1455
        %v1487 = vpack.c.bf16 %v1461, %v1459
        %v1488 = vpack.c.bf16 %v1465, %v1463
        %v1489 = vpack.c.bf16 %v1469, %v1467
        %v1490 = vpack.c.bf16 %v1473, %v1471
        %v1491 = vpack.c.bf16 %v1477, %v1475
        %v1492 = vpack.c.bf16 %v1481, %v1479
        %v1493 = vpack.c.bf16 %v1485, %v1483
        %1494 = vmatpush.bf16.xpose.msra.mxu0 %v1493
        %1495 = vmatpush.bf16.xpose.msra.mxu0 %v1492
        %1496 = vmatpush.bf16.xpose.msra.mxu0 %v1491
        %1497 = vmatpush.bf16.xpose.msra.mxu0 %v1490
        %1498 = vmatpush.bf16.xpose.msra.mxu0 %v1489
        %1499 = vmatpush.bf16.xpose.msra.mxu0 %v1488
        %1500 = vmatpush.bf16.xpose.msra.mxu0 %v1487
        %1501 = vmatpush.bf16.xpose.msra.mxu0 %v1486
        %1502 = vmatmul.bf16.gmra.mxu0 %v1312
        %v1503 = vpop.f32.mrf.mxu0
        %v1504 = vadd.f32 0.0, %v1503
        %v1505 = vpop.f32.mrf.mxu0
        %v1506 = vadd.f32 0.0, %v1505
        %1507 = vmatmul.bf16.gmra.mxu0 %v1313
        %v1508 = vpop.f32.mrf.mxu0
        %v1509 = vadd.f32 0.0, %v1508
        %v1510 = vpop.f32.mrf.mxu0
        %v1511 = vadd.f32 0.0, %v1510
        %1512 = vdwg.mxu0
        %v1513 = vrcp.pop %v1511
        %v1514 = vperm.slane %v1513, 0
        %v1515 = vmul.f32 %v1504, %v1514
        %v1516 = vmul.f32 %v1506, %v1514
        %v1517 = vmul.f32 %v1509, %v1514
        %v1518 = vpack.c.bf16 %v1095, %v885
        %v1519 = vpack.c.bf16 %v1096, %v886
        %v1520 = vpack.c.bf16 %v1097, %v887
        %v1521 = vpack.c.bf16 %v1515, %v1305
        %v1522 = vpack.c.bf16 %v1516, %v1306
        %v1523 = vpack.c.bf16 %v1517, %v1307
        %v1526 = vunpack.c.l.b16 %v493
        %v1527 = vunpack.c.l.b16 %v494
        %v1528 = vpack.c.b16 %v1527, %v1526
        %v1530 = vsel %vm522, %v1528, 0
        %1532 = vmatpush.bf16.msra.mxu0 0
        %1533 = vmatpush.bf16.msra.mxu0 0
        %1534 = vmatpush.bf16.msra.mxu0 0
        %1535 = vmatpush.bf16.msra.mxu0 0
        %1536 = vmatpush.bf16.msra.mxu0 0
        %1537 = vmatpush.bf16.msra.mxu0 0
        %1538 = vmatpush.bf16.msra.mxu0 0
        %1539 = vmatpush.bf16.msra.mxu0 %v1518
        %1540 = vmatmul.bf16.gmra.mxu0 %v1530
        %v1541 = vpop.f32.mrf.mxu0
        %v1542 = vadd.f32 0.0, %v1541
        %v1543 = vpop.f32.mrf.mxu0
        %v1544 = vadd.f32 0.0, %v1543
        %1545 = vdwg.mxu0
        %1546 = vmatpush.bf16.msra.mxu0 0
        %1547 = vmatpush.bf16.msra.mxu0 0
        %1548 = vmatpush.bf16.msra.mxu0 0
        %1549 = vmatpush.bf16.msra.mxu0 0
        %1550 = vmatpush.bf16.msra.mxu0 0
        %1551 = vmatpush.bf16.msra.mxu0 0
        %1552 = vmatpush.bf16.msra.mxu0 0
        %1553 = vmatpush.bf16.msra.mxu0 %v1519
        %1554 = vmatmul.bf16.gmra.mxu0 %v1530
        %v1555 = vpop.f32.mrf.mxu0
        %v1556 = vadd.f32 0.0, %v1555
        %v1557 = vpop.f32.mrf.mxu0
        %v1558 = vadd.f32 0.0, %v1557
        %1559 = vdwg.mxu0
        %1560 = vmatpush.bf16.msra.mxu0 0
        %1561 = vmatpush.bf16.msra.mxu0 0
        %1562 = vmatpush.bf16.msra.mxu0 0
        %1563 = vmatpush.bf16.msra.mxu0 0
        %1564 = vmatpush.bf16.msra.mxu0 0
        %1565 = vmatpush.bf16.msra.mxu0 0
        %1566 = vmatpush.bf16.msra.mxu0 0
        %1567 = vmatpush.bf16.msra.mxu0 %v1520
        %1568 = vmatmul.bf16.gmra.mxu0 %v1530
        %v1569 = vpop.f32.mrf.mxu0
        %v1570 = vadd.f32 0.0, %v1569
        %v1571 = vpop.f32.mrf.mxu0
        %v1572 = vadd.f32 0.0, %v1571
        %1573 = vdwg.mxu0
        %1574 = vmatpush.bf16.msra.mxu0 0
        %1575 = vmatpush.bf16.msra.mxu0 0
        %1576 = vmatpush.bf16.msra.mxu0 0
        %1577 = vmatpush.bf16.msra.mxu0 0
        %1578 = vmatpush.bf16.msra.mxu0 0
        %1579 = vmatpush.bf16.msra.mxu0 0
        %1580 = vmatpush.bf16.msra.mxu0 0
        %1581 = vmatpush.bf16.msra.mxu0 %v1521
        %1582 = vmatmul.bf16.gmra.mxu0 %v1530
        %v1583 = vpop.f32.mrf.mxu0
        %v1584 = vadd.f32 0.0, %v1583
        %v1585 = vpop.f32.mrf.mxu0
        %v1586 = vadd.f32 0.0, %v1585
        %1587 = vdwg.mxu0
        %1588 = vmatpush.bf16.msra.mxu0 0
        %1589 = vmatpush.bf16.msra.mxu0 0
        %1590 = vmatpush.bf16.msra.mxu0 0
        %1591 = vmatpush.bf16.msra.mxu0 0
        %1592 = vmatpush.bf16.msra.mxu0 0
        %1593 = vmatpush.bf16.msra.mxu0 0
        %1594 = vmatpush.bf16.msra.mxu0 0
        %1595 = vmatpush.bf16.msra.mxu0 %v1522
        %1596 = vmatmul.bf16.gmra.mxu0 %v1530
        %v1597 = vpop.f32.mrf.mxu0
        %v1598 = vadd.f32 0.0, %v1597
        %v1599 = vpop.f32.mrf.mxu0
        %v1600 = vadd.f32 0.0, %v1599
        %1601 = vdwg.mxu0
        %1602 = vmatpush.bf16.msra.mxu0 0
        %1603 = vmatpush.bf16.msra.mxu0 0
        %1604 = vmatpush.bf16.msra.mxu0 0
        %1605 = vmatpush.bf16.msra.mxu0 0
        %1606 = vmatpush.bf16.msra.mxu0 0
        %1607 = vmatpush.bf16.msra.mxu0 0
        %1608 = vmatpush.bf16.msra.mxu0 0
        %1609 = vmatpush.bf16.msra.mxu0 %v1523
        %1610 = vmatmul.bf16.gmra.mxu0 %v1530
        %v1611 = vpop.f32.mrf.mxu0
        %v1612 = vadd.f32 0.0, %v1611
        %v1613 = vpop.f32.mrf.mxu0
        %v1614 = vadd.f32 0.0, %v1613
        %1615 = vdwg.mxu0
        %v1616 = vadd.f32 %v475, %v1542
        %v1617 = vadd.f32 %v476, %v1556
        %v1618 = vadd.f32 %v477, %v1570
        %v1619 = vadd.f32 %v478, %v1584
        %v1620 = vadd.f32 %v479, %v1598
        %v1621 = vadd.f32 %v480, %v1612
        %v1622 = vadd.f32 %v481, %v1544
        %v1623 = vadd.f32 %v482, %v1558
        %v1624 = vadd.f32 %v483, %v1572
        %v1625 = vadd.f32 %v484, %v1586
        %v1626 = vadd.f32 %v485, %v1600
        %v1627 = vadd.f32 %v486, %v1614
        %v1628 = vpack.c.bf16 %v1622, %v1616
        %v1629 = vpack.c.bf16 %v1623, %v1617
        %v1630 = vpack.c.bf16 %v1624, %v1618
        %v1631 = vpack.c.bf16 %v1625, %v1619
        %v1632 = vpack.c.bf16 %v1626, %v1620
        %v1633 = vpack.c.bf16 %v1627, %v1621
        %v1638 = vunpack.c.l.b16 %v495
        %v1639 = vunpack.c.l.b16 %v496
        %v1640 = vunpack.c.l.b16 %v497
        %v1641 = vunpack.c.l.b16 %v498
        %v1642 = vpack.c.b16 %v1639, %v1638
        %v1643 = vpack.c.b16 %v1641, %v1640
        %v1645 = vsel %vm522, %v1642, 0
        %v1648 = vsel %vm522, %v1643, 0
        %1650 = vmatpush.bf16.msra.mxu0 0
        %1651 = vmatpush.bf16.msra.mxu0 0
        %1652 = vmatpush.bf16.msra.mxu0 0
        %1653 = vmatpush.bf16.msra.mxu0 0
        %1654 = vmatpush.bf16.msra.mxu0 0
        %1655 = vmatpush.bf16.msra.mxu0 0
        %1656 = vmatpush.bf16.msra.mxu0 0
        %1657 = vmatpush.bf16.msra.mxu0 %v1628
        %1658 = vmatmul.bf16.gmra.mxu0 %v1645
        %v1659 = vpop.f32.mrf.mxu0
        %v1660 = vadd.f32 0.0, %v1659
        %v1661 = vpop.f32.mrf.mxu0
        %v1662 = vadd.f32 0.0, %v1661
        %1663 = vmatmul.bf16.gmra.mxu0 %v1648
        %v1664 = vpop.f32.mrf.mxu0
        %v1665 = vadd.f32 0.0, %v1664
        %v1666 = vpop.f32.mrf.mxu0
        %v1667 = vadd.f32 0.0, %v1666
        %1668 = vdwg.mxu0
        %1669 = vmatpush.bf16.msra.mxu0 0
        %1670 = vmatpush.bf16.msra.mxu0 0
        %1671 = vmatpush.bf16.msra.mxu0 0
        %1672 = vmatpush.bf16.msra.mxu0 0
        %1673 = vmatpush.bf16.msra.mxu0 0
        %1674 = vmatpush.bf16.msra.mxu0 0
        %1675 = vmatpush.bf16.msra.mxu0 0
        %1676 = vmatpush.bf16.msra.mxu0 %v1629
        %1677 = vmatmul.bf16.gmra.mxu0 %v1645
        %v1678 = vpop.f32.mrf.mxu0
        %v1679 = vadd.f32 0.0, %v1678
        %v1680 = vpop.f32.mrf.mxu0
        %v1681 = vadd.f32 0.0, %v1680
        %1682 = vmatmul.bf16.gmra.mxu0 %v1648
        %v1683 = vpop.f32.mrf.mxu0
        %v1684 = vadd.f32 0.0, %v1683
        %v1685 = vpop.f32.mrf.mxu0
        %v1686 = vadd.f32 0.0, %v1685
        %1687 = vdwg.mxu0
        %1688 = vmatpush.bf16.msra.mxu0 0
        %1689 = vmatpush.bf16.msra.mxu0 0
        %1690 = vmatpush.bf16.msra.mxu0 0
        %1691 = vmatpush.bf16.msra.mxu0 0
        %1692 = vmatpush.bf16.msra.mxu0 0
        %1693 = vmatpush.bf16.msra.mxu0 0
        %1694 = vmatpush.bf16.msra.mxu0 0
        %1695 = vmatpush.bf16.msra.mxu0 %v1630
        %1696 = vmatmul.bf16.gmra.mxu0 %v1645
        %v1697 = vpop.f32.mrf.mxu0
        %v1698 = vadd.f32 0.0, %v1697
        %v1699 = vpop.f32.mrf.mxu0
        %v1700 = vadd.f32 0.0, %v1699
        %1701 = vmatmul.bf16.gmra.mxu0 %v1648
        %v1702 = vpop.f32.mrf.mxu0
        %v1703 = vadd.f32 0.0, %v1702
        %v1704 = vpop.f32.mrf.mxu0
        %v1705 = vadd.f32 0.0, %v1704
        %1706 = vdwg.mxu0
        %1707 = vmatpush.bf16.msra.mxu0 0
        %1708 = vmatpush.bf16.msra.mxu0 0
        %1709 = vmatpush.bf16.msra.mxu0 0
        %1710 = vmatpush.bf16.msra.mxu0 0
        %1711 = vmatpush.bf16.msra.mxu0 0
        %1712 = vmatpush.bf16.msra.mxu0 0
        %1713 = vmatpush.bf16.msra.mxu0 0
        %1714 = vmatpush.bf16.msra.mxu0 %v1631
        %1715 = vmatmul.bf16.gmra.mxu0 %v1645
        %v1716 = vpop.f32.mrf.mxu0
        %v1717 = vadd.f32 0.0, %v1716
        %v1718 = vpop.f32.mrf.mxu0
        %v1719 = vadd.f32 0.0, %v1718
        %1720 = vmatmul.bf16.gmra.mxu0 %v1648
        %v1721 = vpop.f32.mrf.mxu0
        %v1722 = vadd.f32 0.0, %v1721
        %v1723 = vpop.f32.mrf.mxu0
        %v1724 = vadd.f32 0.0, %v1723
        %1725 = vdwg.mxu0
        %1726 = vmatpush.bf16.msra.mxu0 0
        %1727 = vmatpush.bf16.msra.mxu0 0
        %1728 = vmatpush.bf16.msra.mxu0 0
        %1729 = vmatpush.bf16.msra.mxu0 0
        %1730 = vmatpush.bf16.msra.mxu0 0
        %1731 = vmatpush.bf16.msra.mxu0 0
        %1732 = vmatpush.bf16.msra.mxu0 0
        %1733 = vmatpush.bf16.msra.mxu0 %v1632
        %1734 = vmatmul.bf16.gmra.mxu0 %v1645
        %v1735 = vpop.f32.mrf.mxu0
        %v1736 = vadd.f32 0.0, %v1735
        %v1737 = vpop.f32.mrf.mxu0
        %v1738 = vadd.f32 0.0, %v1737
        %1739 = vmatmul.bf16.gmra.mxu0 %v1648
        %v1740 = vpop.f32.mrf.mxu0
        %v1741 = vadd.f32 0.0, %v1740
        %v1742 = vpop.f32.mrf.mxu0
        %v1743 = vadd.f32 0.0, %v1742
        %1744 = vdwg.mxu0
        %1745 = vmatpush.bf16.msra.mxu0 0
        %1746 = vmatpush.bf16.msra.mxu0 0
        %1747 = vmatpush.bf16.msra.mxu0 0
        %1748 = vmatpush.bf16.msra.mxu0 0
        %1749 = vmatpush.bf16.msra.mxu0 0
        %1750 = vmatpush.bf16.msra.mxu0 0
        %1751 = vmatpush.bf16.msra.mxu0 0
        %1752 = vmatpush.bf16.msra.mxu0 %v1633
        %1753 = vmatmul.bf16.gmra.mxu0 %v1645
        %v1754 = vpop.f32.mrf.mxu0
        %v1755 = vadd.f32 0.0, %v1754
        %v1756 = vpop.f32.mrf.mxu0
        %v1757 = vadd.f32 0.0, %v1756
        %1758 = vmatmul.bf16.gmra.mxu0 %v1648
        %v1759 = vpop.f32.mrf.mxu0
        %v1760 = vadd.f32 0.0, %v1759
        %v1761 = vpop.f32.mrf.mxu0
        %v1762 = vadd.f32 0.0, %v1761
        %1763 = vdwg.mxu0
        %v1764 = vmul.f32 %v1660, %v1665
        %v1765 = vmul.f32 %v1662, %v1667
        %v1766 = vmul.f32 %v1679, %v1684
        %v1767 = vmul.f32 %v1681, %v1686
        %v1768 = vadd.f32 %v1764, %v1766
        %v1769 = vadd.f32 %v1765, %v1767
        %v1770 = vmul.f32 %v1698, %v1703
        %v1771 = vmul.f32 %v1700, %v1705
        %v1772 = vadd.f32 %v1768, %v1770
        %v1773 = vadd.f32 %v1769, %v1771
        %v1774 = vmul.f32 %v1665, %v1665
        %v1775 = vmul.f32 %v1667, %v1667
        %v1776 = vmul.f32 %v1684, %v1684
        %v1777 = vmul.f32 %v1686, %v1686
        %v1778 = vadd.f32 %v1774, %v1776
        %v1779 = vadd.f32 %v1775, %v1777
        %v1780 = vmul.f32 %v1703, %v1703
        %v1781 = vmul.f32 %v1705, %v1705
        %v1782 = vadd.f32 %v1778, %v1780
        %v1783 = vadd.f32 %v1779, %v1781
        %v1784 = vadd.f32 %v1782, 1e-06
        %v1785 = vadd.f32 %v1783, 1e-06
        %v1786 = vrcp.pop %v1784
        %v1787 = vrcp.pop %v1785
        %v1788 = vmul.f32 %v1772, %v1786
        %v1789 = vmul.f32 %v1773, %v1787
        %vm1790 = vcmp.ge.f32.partialorder %v1772, 0.0
        %vm1791 = vcmp.ge.f32.partialorder %v1773, 0.0
        %v1792 = vsel %vm1790, 0.0, %v1788
        %v1793 = vsel %vm1791, 0.0, %v1789
        %v1794 = vmul.f32 %v1792, 0.8
        %v1795 = vmul.f32 %v1793, 0.8
        %v1796 = vmul.f32 %v1794, %v1665
        %v1797 = vmul.f32 %v1794, %v1684
        %v1798 = vmul.f32 %v1794, %v1703
        %v1799 = vmul.f32 %v1795, %v1667
        %v1800 = vmul.f32 %v1795, %v1686
        %v1801 = vmul.f32 %v1795, %v1705
        %v1802 = vsub.f32 %v1660, %v1796
        %v1803 = vsub.f32 %v1679, %v1797
        %v1804 = vsub.f32 %v1698, %v1798
        %v1805 = vsub.f32 %v1662, %v1799
        %v1806 = vsub.f32 %v1681, %v1800
        %v1807 = vsub.f32 %v1700, %v1801
        %v1808 = vmul.f32 %v1717, %v1722
        %v1809 = vmul.f32 %v1719, %v1724
        %v1810 = vmul.f32 %v1736, %v1741
        %v1811 = vmul.f32 %v1738, %v1743
        %v1812 = vadd.f32 %v1808, %v1810
        %v1813 = vadd.f32 %v1809, %v1811
        %v1814 = vmul.f32 %v1755, %v1760
        %v1815 = vmul.f32 %v1757, %v1762
        %v1816 = vadd.f32 %v1812, %v1814
        %v1817 = vadd.f32 %v1813, %v1815
        %v1818 = vmul.f32 %v1722, %v1722
        %v1819 = vmul.f32 %v1724, %v1724
        %v1820 = vmul.f32 %v1741, %v1741
        %v1821 = vmul.f32 %v1743, %v1743
        %v1822 = vadd.f32 %v1818, %v1820
        %v1823 = vadd.f32 %v1819, %v1821
        %v1824 = vmul.f32 %v1760, %v1760
        %v1825 = vmul.f32 %v1762, %v1762
        %v1826 = vadd.f32 %v1822, %v1824
        %v1827 = vadd.f32 %v1823, %v1825
        %v1828 = vadd.f32 %v1826, 1e-06
        %v1829 = vadd.f32 %v1827, 1e-06
        %v1830 = vrcp.pop %v1828
        %v1831 = vrcp.pop %v1829
        %v1832 = vmul.f32 %v1816, %v1830
        %v1833 = vmul.f32 %v1817, %v1831
        %vm1834 = vcmp.ge.f32.partialorder %v1816, 0.0
        %vm1835 = vcmp.ge.f32.partialorder %v1817, 0.0
        %v1836 = vsel %vm1834, 0.0, %v1832
        %v1837 = vsel %vm1835, 0.0, %v1833
        %v1838 = vmul.f32 %v1836, 0.8
        %v1839 = vmul.f32 %v1837, 0.8
        %v1840 = vmul.f32 %v1838, %v1722
        %v1841 = vmul.f32 %v1838, %v1741
        %v1842 = vmul.f32 %v1838, %v1760
        %v1843 = vmul.f32 %v1839, %v1724
        %v1844 = vmul.f32 %v1839, %v1743
        %v1845 = vmul.f32 %v1839, %v1762
        %v1846 = vsub.f32 %v1717, %v1840
        %v1847 = vsub.f32 %v1736, %v1841
        %v1848 = vsub.f32 %v1755, %v1842
        %v1849 = vsub.f32 %v1719, %v1843
        %v1850 = vsub.f32 %v1738, %v1844
        %v1851 = vsub.f32 %v1757, %v1845
        %v1852 = vpack.c.bf16 %v1805, %v1802
        %v1853 = vpack.c.bf16 %v1806, %v1803
        %v1854 = vpack.c.bf16 %v1807, %v1804
        %v1855 = vpack.c.bf16 %v1849, %v1846
        %v1856 = vpack.c.bf16 %v1850, %v1847
        %v1857 = vpack.c.bf16 %v1851, %v1848
        %v1860 = vunpack.c.l.b16 %v499
        %v1861 = vunpack.c.l.b16 %v500
        %v1862 = vpack.c.b16 %v1861, %v1860
        %v1864 = vsel %vm522, %v1862, 0
        %1866 = vmatpush.bf16.msra.mxu0 0
        %1867 = vmatpush.bf16.msra.mxu0 0
        %1868 = vmatpush.bf16.msra.mxu0 0
        %1869 = vmatpush.bf16.msra.mxu0 0
        %1870 = vmatpush.bf16.msra.mxu0 0
        %1871 = vmatpush.bf16.msra.mxu0 0
        %1872 = vmatpush.bf16.msra.mxu0 0
        %1873 = vmatpush.bf16.msra.mxu0 %v1852
        %1874 = vmatmul.bf16.gmra.mxu0 %v1864
        %v1875 = vpop.f32.mrf.mxu0
        %v1876 = vadd.f32 0.0, %v1875
        %v1877 = vpop.f32.mrf.mxu0
        %v1878 = vadd.f32 0.0, %v1877
        %1879 = vdwg.mxu0
        %1880 = vmatpush.bf16.msra.mxu0 0
        %1881 = vmatpush.bf16.msra.mxu0 0
        %1882 = vmatpush.bf16.msra.mxu0 0
        %1883 = vmatpush.bf16.msra.mxu0 0
        %1884 = vmatpush.bf16.msra.mxu0 0
        %1885 = vmatpush.bf16.msra.mxu0 0
        %1886 = vmatpush.bf16.msra.mxu0 0
        %1887 = vmatpush.bf16.msra.mxu0 %v1853
        %1888 = vmatmul.bf16.gmra.mxu0 %v1864
        %v1889 = vpop.f32.mrf.mxu0
        %v1890 = vadd.f32 0.0, %v1889
        %v1891 = vpop.f32.mrf.mxu0
        %v1892 = vadd.f32 0.0, %v1891
        %1893 = vdwg.mxu0
        %1894 = vmatpush.bf16.msra.mxu0 0
        %1895 = vmatpush.bf16.msra.mxu0 0
        %1896 = vmatpush.bf16.msra.mxu0 0
        %1897 = vmatpush.bf16.msra.mxu0 0
        %1898 = vmatpush.bf16.msra.mxu0 0
        %1899 = vmatpush.bf16.msra.mxu0 0
        %1900 = vmatpush.bf16.msra.mxu0 0
        %1901 = vmatpush.bf16.msra.mxu0 %v1854
        %1902 = vmatmul.bf16.gmra.mxu0 %v1864
        %v1903 = vpop.f32.mrf.mxu0
        %v1904 = vadd.f32 0.0, %v1903
        %v1905 = vpop.f32.mrf.mxu0
        %v1906 = vadd.f32 0.0, %v1905
        %1907 = vdwg.mxu0
        %1908 = vmatpush.bf16.msra.mxu0 0
        %1909 = vmatpush.bf16.msra.mxu0 0
        %1910 = vmatpush.bf16.msra.mxu0 0
        %1911 = vmatpush.bf16.msra.mxu0 0
        %1912 = vmatpush.bf16.msra.mxu0 0
        %1913 = vmatpush.bf16.msra.mxu0 0
        %1914 = vmatpush.bf16.msra.mxu0 0
        %1915 = vmatpush.bf16.msra.mxu0 %v1855
        %1916 = vmatmul.bf16.gmra.mxu0 %v1864
        %v1917 = vpop.f32.mrf.mxu0
        %v1918 = vadd.f32 0.0, %v1917
        %v1919 = vpop.f32.mrf.mxu0
        %v1920 = vadd.f32 0.0, %v1919
        %1921 = vdwg.mxu0
        %1922 = vmatpush.bf16.msra.mxu0 0
        %1923 = vmatpush.bf16.msra.mxu0 0
        %1924 = vmatpush.bf16.msra.mxu0 0
        %1925 = vmatpush.bf16.msra.mxu0 0
        %1926 = vmatpush.bf16.msra.mxu0 0
        %1927 = vmatpush.bf16.msra.mxu0 0
        %1928 = vmatpush.bf16.msra.mxu0 0
        %1929 = vmatpush.bf16.msra.mxu0 %v1856
        %1930 = vmatmul.bf16.gmra.mxu0 %v1864
        %v1931 = vpop.f32.mrf.mxu0
        %v1932 = vadd.f32 0.0, %v1931
        %v1933 = vpop.f32.mrf.mxu0
        %v1934 = vadd.f32 0.0, %v1933
        %1935 = vdwg.mxu0
        %1936 = vmatpush.bf16.msra.mxu0 0
        %1937 = vmatpush.bf16.msra.mxu0 0
        %1938 = vmatpush.bf16.msra.mxu0 0
        %1939 = vmatpush.bf16.msra.mxu0 0
        %1940 = vmatpush.bf16.msra.mxu0 0
        %1941 = vmatpush.bf16.msra.mxu0 0
        %1942 = vmatpush.bf16.msra.mxu0 0
        %1943 = vmatpush.bf16.msra.mxu0 %v1857
        %1944 = vmatmul.bf16.gmra.mxu0 %v1864
        %v1945 = vpop.f32.mrf.mxu0
        %v1946 = vadd.f32 0.0, %v1945
        %v1947 = vpop.f32.mrf.mxu0
        %v1948 = vadd.f32 0.0, %v1947
        %1949 = vdwg.mxu0
        %v1950 = vadd.f32 %v1616, %v1876
        %v1951 = vadd.f32 %v1617, %v1890
        %v1952 = vadd.f32 %v1618, %v1904
        %v1953 = vadd.f32 %v1619, %v1918
        %v1954 = vadd.f32 %v1620, %v1932
        %v1955 = vadd.f32 %v1621, %v1946
        %v1956 = vadd.f32 %v1622, %v1878
        %v1957 = vadd.f32 %v1623, %v1892
        %v1958 = vadd.f32 %v1624, %v1906
        %v1959 = vadd.f32 %v1625, %v1920
        %v1960 = vadd.f32 %v1626, %v1934
        %v1961 = vadd.f32 %v1627, %v1948
        %s1962 = scalar_lea.vmem %s2, 24
        %v1963 = vld [vmem:[%s1962] sm:$0xf]
        %v1964 = vld [vmem:[%s1962 + $0x4] sm:$0xf]
        %v1965 = vld [vmem:[%s1962 + $0x8] sm:$0xf]
        %v1966 = vld [vmem:[%s1962 + $0xc] sm:$0xf]
        %v1967 = vld [vmem:[%s1962 + $0x10] sm:$0xf]
        %v1968 = vld [vmem:[%s1962 + $0x14] sm:$0xf]
        %s1969 = scalar_lea.vmem %s3, 8
        %v1970 = vld [vmem:[%s1969] sm:$0xf]
        %v1971 = vld [vmem:[%s1969 + $0x4] sm:$0xf]
        %s1972 = scalar_lea.vmem %s4, 16
        %v1973 = vld [vmem:[%s1972] sm:$0xf]
        %v1974 = vld [vmem:[%s1972 + $0x4] sm:$0xf]
        %v1975 = vld [vmem:[%s1972 + $0x8] sm:$0xf]
        %v1976 = vld [vmem:[%s1972 + $0xc] sm:$0xf]
        %s1977 = scalar_lea.vmem [#allocation5], 8
        %v1978 = vld [vmem:[%s1977] sm:$0xf]
        %v1979 = vld [vmem:[%s1977 + $0x4] sm:$0xf]
        %v1980 = vpack.c.bf16 %v1956, %v1950
        %v1981 = vpack.c.bf16 %v1957, %v1951
        %v1982 = vpack.c.bf16 %v1958, %v1952
        %v1983 = vpack.c.bf16 %v1959, %v1953
        %v1984 = vpack.c.bf16 %v1960, %v1954
        %v1985 = vpack.c.bf16 %v1961, %v1955
        %v1992 = vunpack.c.l.b16 %v1963
        %v1993 = vunpack.c.l.b16 %v1964
        %v1994 = vunpack.c.l.b16 %v1965
        %v1995 = vunpack.c.l.b16 %v1966
        %v1996 = vunpack.c.l.b16 %v1967
        %v1997 = vunpack.c.l.b16 %v1968
        %v1998 = vpack.c.b16 %v1993, %v1992
        %v1999 = vpack.c.b16 %v1995, %v1994
        %v2000 = vpack.c.b16 %v1997, %v1996
        %v2002 = vsel %vm522, %v1998, 0
        %v2005 = vsel %vm522, %v1999, 0
        %v2008 = vsel %vm522, %v2000, 0
        %2010 = vmatpush.bf16.msra.mxu0 0
        %2011 = vmatpush.bf16.msra.mxu0 0
        %2012 = vmatpush.bf16.msra.mxu0 0
        %2013 = vmatpush.bf16.msra.mxu0 0
        %2014 = vmatpush.bf16.msra.mxu0 0
        %2015 = vmatpush.bf16.msra.mxu0 0
        %2016 = vmatpush.bf16.msra.mxu0 0
        %2017 = vmatpush.bf16.msra.mxu0 %v1980
        %2018 = vmatmul.bf16.gmra.mxu0 %v2002
        %v2019 = vpop.f32.mrf.mxu0
        %v2020 = vadd.f32 0.0, %v2019
        %v2021 = vpop.f32.mrf.mxu0
        %v2022 = vadd.f32 0.0, %v2021
        %2023 = vmatmul.bf16.gmra.mxu0 %v2005
        %v2024 = vpop.f32.mrf.mxu0
        %v2025 = vadd.f32 0.0, %v2024
        %v2026 = vpop.f32.mrf.mxu0
        %v2027 = vadd.f32 0.0, %v2026
        %2028 = vmatmul.bf16.gmra.mxu0 %v2008
        %v2029 = vpop.f32.mrf.mxu0
        %v2030 = vadd.f32 0.0, %v2029
        %v2031 = vpop.f32.mrf.mxu0
        %v2032 = vadd.f32 0.0, %v2031
        %2033 = vdwg.mxu0
        %2034 = vmatpush.bf16.msra.mxu0 0
        %2035 = vmatpush.bf16.msra.mxu0 0
        %2036 = vmatpush.bf16.msra.mxu0 0
        %2037 = vmatpush.bf16.msra.mxu0 0
        %2038 = vmatpush.bf16.msra.mxu0 0
        %2039 = vmatpush.bf16.msra.mxu0 0
        %2040 = vmatpush.bf16.msra.mxu0 0
        %2041 = vmatpush.bf16.msra.mxu0 %v1981
        %2042 = vmatmul.bf16.gmra.mxu0 %v2002
        %v2043 = vpop.f32.mrf.mxu0
        %v2044 = vadd.f32 0.0, %v2043
        %v2045 = vpop.f32.mrf.mxu0
        %v2046 = vadd.f32 0.0, %v2045
        %2047 = vmatmul.bf16.gmra.mxu0 %v2005
        %v2048 = vpop.f32.mrf.mxu0
        %v2049 = vadd.f32 0.0, %v2048
        %v2050 = vpop.f32.mrf.mxu0
        %v2051 = vadd.f32 0.0, %v2050
        %2052 = vmatmul.bf16.gmra.mxu0 %v2008
        %v2053 = vpop.f32.mrf.mxu0
        %v2054 = vadd.f32 0.0, %v2053
        %v2055 = vpop.f32.mrf.mxu0
        %v2056 = vadd.f32 0.0, %v2055
        %2057 = vdwg.mxu0
        %2058 = vmatpush.bf16.msra.mxu0 0
        %2059 = vmatpush.bf16.msra.mxu0 0
        %2060 = vmatpush.bf16.msra.mxu0 0
        %2061 = vmatpush.bf16.msra.mxu0 0
        %2062 = vmatpush.bf16.msra.mxu0 0
        %2063 = vmatpush.bf16.msra.mxu0 0
        %2064 = vmatpush.bf16.msra.mxu0 0
        %2065 = vmatpush.bf16.msra.mxu0 %v1982
        %2066 = vmatmul.bf16.gmra.mxu0 %v2002
        %v2067 = vpop.f32.mrf.mxu0
        %v2068 = vadd.f32 0.0, %v2067
        %v2069 = vpop.f32.mrf.mxu0
        %v2070 = vadd.f32 0.0, %v2069
        %2071 = vmatmul.bf16.gmra.mxu0 %v2005
        %v2072 = vpop.f32.mrf.mxu0
        %v2073 = vadd.f32 0.0, %v2072
        %v2074 = vpop.f32.mrf.mxu0
        %v2075 = vadd.f32 0.0, %v2074
        %2076 = vmatmul.bf16.gmra.mxu0 %v2008
        %v2077 = vpop.f32.mrf.mxu0
        %v2078 = vadd.f32 0.0, %v2077
        %v2079 = vpop.f32.mrf.mxu0
        %v2080 = vadd.f32 0.0, %v2079
        %2081 = vdwg.mxu0
        %2082 = vmatpush.bf16.msra.mxu0 0
        %2083 = vmatpush.bf16.msra.mxu0 0
        %2084 = vmatpush.bf16.msra.mxu0 0
        %2085 = vmatpush.bf16.msra.mxu0 0
        %2086 = vmatpush.bf16.msra.mxu0 0
        %2087 = vmatpush.bf16.msra.mxu0 0
        %2088 = vmatpush.bf16.msra.mxu0 0
        %2089 = vmatpush.bf16.msra.mxu0 %v1983
        %2090 = vmatmul.bf16.gmra.mxu0 %v2002
        %v2091 = vpop.f32.mrf.mxu0
        %v2092 = vadd.f32 0.0, %v2091
        %v2093 = vpop.f32.mrf.mxu0
        %v2094 = vadd.f32 0.0, %v2093
        %2095 = vmatmul.bf16.gmra.mxu0 %v2005
        %v2096 = vpop.f32.mrf.mxu0
        %v2097 = vadd.f32 0.0, %v2096
        %v2098 = vpop.f32.mrf.mxu0
        %v2099 = vadd.f32 0.0, %v2098
        %2100 = vmatmul.bf16.gmra.mxu0 %v2008
        %v2101 = vpop.f32.mrf.mxu0
        %v2102 = vadd.f32 0.0, %v2101
        %v2103 = vpop.f32.mrf.mxu0
        %v2104 = vadd.f32 0.0, %v2103
        %2105 = vdwg.mxu0
        %2106 = vmatpush.bf16.msra.mxu0 0
        %2107 = vmatpush.bf16.msra.mxu0 0
        %2108 = vmatpush.bf16.msra.mxu0 0
        %2109 = vmatpush.bf16.msra.mxu0 0
        %2110 = vmatpush.bf16.msra.mxu0 0
        %2111 = vmatpush.bf16.msra.mxu0 0
        %2112 = vmatpush.bf16.msra.mxu0 0
        %2113 = vmatpush.bf16.msra.mxu0 %v1984
        %2114 = vmatmul.bf16.gmra.mxu0 %v2002
        %v2115 = vpop.f32.mrf.mxu0
        %v2116 = vadd.f32 0.0, %v2115
        %v2117 = vpop.f32.mrf.mxu0
        %v2118 = vadd.f32 0.0, %v2117
        %2119 = vmatmul.bf16.gmra.mxu0 %v2005
        %v2120 = vpop.f32.mrf.mxu0
        %v2121 = vadd.f32 0.0, %v2120
        %v2122 = vpop.f32.mrf.mxu0
        %v2123 = vadd.f32 0.0, %v2122
        %2124 = vmatmul.bf16.gmra.mxu0 %v2008
        %v2125 = vpop.f32.mrf.mxu0
        %v2126 = vadd.f32 0.0, %v2125
        %v2127 = vpop.f32.mrf.mxu0
        %v2128 = vadd.f32 0.0, %v2127
        %2129 = vdwg.mxu0
        %2130 = vmatpush.bf16.msra.mxu0 0
        %2131 = vmatpush.bf16.msra.mxu0 0
        %2132 = vmatpush.bf16.msra.mxu0 0
        %2133 = vmatpush.bf16.msra.mxu0 0
        %2134 = vmatpush.bf16.msra.mxu0 0
        %2135 = vmatpush.bf16.msra.mxu0 0
        %2136 = vmatpush.bf16.msra.mxu0 0
        %2137 = vmatpush.bf16.msra.mxu0 %v1985
        %2138 = vmatmul.bf16.gmra.mxu0 %v2002
        %v2139 = vpop.f32.mrf.mxu0
        %v2140 = vadd.f32 0.0, %v2139
        %v2141 = vpop.f32.mrf.mxu0
        %v2142 = vadd.f32 0.0, %v2141
        %2143 = vmatmul.bf16.gmra.mxu0 %v2005
        %v2144 = vpop.f32.mrf.mxu0
        %v2145 = vadd.f32 0.0, %v2144
        %v2146 = vpop.f32.mrf.mxu0
        %v2147 = vadd.f32 0.0, %v2146
        %2148 = vmatmul.bf16.gmra.mxu0 %v2008
        %v2149 = vpop.f32.mrf.mxu0
        %v2150 = vadd.f32 0.0, %v2149
        %v2151 = vpop.f32.mrf.mxu0
        %v2152 = vadd.f32 0.0, %v2151
        %2153 = vdwg.mxu0
        %v2154 = vpack.c.bf16 %v2044, %v2020
        %v2155 = vpack.c.bf16 %v2068, %v2068
        %v2156 = vpack.c.bf16 %v2049, %v2025
        %v2157 = vpack.c.bf16 %v2073, %v2073
        %v2158 = vpack.c.bf16 %v2054, %v2030
        %v2159 = vpack.c.bf16 1.0, %v2078
        %2160 = vxpose.xlu0.c.b16.start [1/8] %v2154, 128
        %2161 = vxpose.xlu0.c.b16.cont [2/8] %v2155, 128
        %2162 = vxpose.xlu0.c.b16.cont [3/8] 0, 128
        %2163 = vxpose.xlu0.c.b16.cont [4/8] 0, 128
        %2164 = vxpose.xlu0.c.b16.cont [5/8] 0, 128
        %2165 = vxpose.xlu0.c.b16.cont [6/8] 0, 128
        %2166 = vxpose.xlu0.c.b16.cont [7/8] 0, 128
        %2167 = vxpose.xlu0.c.b16.end [8/8] 0, 128
        %v2168 = vpop.trf.xlu0
        %v2169 = vpop.trf.xlu0
        %v2170 = vpop.trf.xlu0
        %v2171 = vpop.trf.xlu0
        %v2172 = vpop.trf.xlu0
        %v2173 = vpop.trf.xlu0
        %v2174 = vpop.trf.xlu0
        %v2175 = vpop.trf.xlu0
        %v2177 = vsel %vm698, %v2168, 0
        %v2180 = vsel %vm698, %v2169, 0
        %v2183 = vsel %vm698, %v2170, 0
        %v2186 = vsel %vm698, %v2171, 0
        %v2189 = vsel %vm698, %v2172, 0
        %v2192 = vsel %vm698, %v2173, 0
        %v2195 = vsel %vm698, %v2174, 0
        %v2198 = vsel %vm698, %v2175, 0
        %v2201 = vsel %vm723, %v2157, 0
        %2203 = vmatpush.bf16.msra.mxu0 0
        %2204 = vmatpush.bf16.msra.mxu0 0
        %2205 = vmatpush.bf16.msra.mxu0 0
        %2206 = vmatpush.bf16.msra.mxu0 0
        %2207 = vmatpush.bf16.msra.mxu0 0
        %2208 = vmatpush.bf16.msra.mxu0 0
        %2209 = vmatpush.bf16.msra.mxu0 %v2201
        %2210 = vmatpush.bf16.msra.mxu0 %v2156
        %2211 = vmatmul.bf16.gmra.mxu0 %v2177
        %v2212 = vpop.f32.mrf.mxu0
        %v2213 = vadd.f32 0.0, %v2212
        %v2214 = vpop.f32.mrf.mxu0
        %v2215 = vadd.f32 0.0, %v2214
        %2216 = vmatmul.bf16.gmra.mxu0 %v2180
        %v2217 = vpop.f32.mrf.mxu0
        %v2218 = vadd.f32 0.0, %v2217
        %v2219 = vpop.f32.mrf.mxu0
        %v2220 = vadd.f32 0.0, %v2219
        %2221 = vmatmul.bf16.gmra.mxu0 %v2183
        %v2222 = vpop.f32.mrf.mxu0
        %v2223 = vadd.f32 0.0, %v2222
        %v2224 = vpop.f32.mrf.mxu0
        %v2225 = vadd.f32 0.0, %v2224
        %2226 = vmatmul.bf16.gmra.mxu0 %v2186
        %v2227 = vpop.f32.mrf.mxu0
        %v2228 = vadd.f32 0.0, %v2227
        %v2229 = vpop.f32.mrf.mxu0
        %v2230 = vadd.f32 0.0, %v2229
        %2231 = vmatmul.bf16.gmra.mxu0 %v2189
        %v2232 = vpop.f32.mrf.mxu0
        %v2233 = vadd.f32 0.0, %v2232
        %v2234 = vpop.f32.mrf.mxu0
        %v2235 = vadd.f32 0.0, %v2234
        %2236 = vmatmul.bf16.gmra.mxu0 %v2192
        %v2237 = vpop.f32.mrf.mxu0
        %v2238 = vadd.f32 0.0, %v2237
        %v2239 = vpop.f32.mrf.mxu0
        %v2240 = vadd.f32 0.0, %v2239
        %2241 = vmatmul.bf16.gmra.mxu0 %v2195
        %v2242 = vpop.f32.mrf.mxu0
        %v2243 = vadd.f32 0.0, %v2242
        %v2244 = vpop.f32.mrf.mxu0
        %v2245 = vadd.f32 0.0, %v2244
        %2246 = vmatmul.bf16.gmra.mxu0 %v2198
        %v2247 = vpop.f32.mrf.mxu0
        %v2248 = vadd.f32 0.0, %v2247
        %v2249 = vpop.f32.mrf.mxu0
        %v2250 = vadd.f32 0.0, %v2249
        %2251 = vdwg.mxu0
        %2252 = vmax.xlane.f32.xlu0 %v2213
        %v2253 = vpop.xlane.xlu0 %2252
        %2254 = vmax.xlane.f32.xlu0 %v2215
        %v2255 = vpop.xlane.xlu0 %2254
        %2256 = vmax.xlane.f32.xlu0 %v2218
        %v2257 = vpop.xlane.xlu0 %2256
        %2258 = vmax.xlane.f32.xlu0 %v2220
        %v2259 = vpop.xlane.xlu0 %2258
        %2260 = vmax.xlane.f32.xlu0 %v2223
        %v2261 = vpop.xlane.xlu0 %2260
        %2262 = vmax.xlane.f32.xlu0 %v2225
        %v2263 = vpop.xlane.xlu0 %2262
        %2264 = vmax.xlane.f32.xlu0 %v2228
        %v2265 = vpop.xlane.xlu0 %2264
        %2266 = vmax.xlane.f32.xlu0 %v2230
        %v2267 = vpop.xlane.xlu0 %2266
        %2268 = vmax.xlane.f32.xlu0 %v2233
        %v2269 = vpop.xlane.xlu0 %2268
        %2270 = vmax.xlane.f32.xlu0 %v2235
        %v2271 = vpop.xlane.xlu0 %2270
        %2272 = vmax.xlane.f32.xlu0 %v2238
        %v2273 = vpop.xlane.xlu0 %2272
        %2274 = vmax.xlane.f32.xlu0 %v2240
        %v2275 = vpop.xlane.xlu0 %2274
        %2276 = vmax.xlane.f32.xlu0 %v2243
        %v2277 = vpop.xlane.xlu0 %2276
        %2278 = vmax.xlane.f32.xlu0 %v2245
        %v2279 = vpop.xlane.xlu0 %2278
        %2280 = vmax.xlane.f32.xlu0 %v2248
        %v2281 = vpop.xlane.xlu0 %2280
        %2282 = vmax.xlane.f32.xlu0 %v2250
        %v2283 = vpop.xlane.xlu0 %2282
        %v2284 = vsub.f32 %v2213, %v2253
        %v2285 = vsub.f32 %v2215, %v2255
        %v2286 = vsub.f32 %v2218, %v2257
        %v2287 = vsub.f32 %v2220, %v2259
        %v2288 = vsub.f32 %v2223, %v2261
        %v2289 = vsub.f32 %v2225, %v2263
        %v2290 = vsub.f32 %v2228, %v2265
        %v2291 = vsub.f32 %v2230, %v2267
        %v2292 = vsub.f32 %v2233, %v2269
        %v2293 = vsub.f32 %v2235, %v2271
        %v2294 = vsub.f32 %v2238, %v2273
        %v2295 = vsub.f32 %v2240, %v2275
        %v2296 = vsub.f32 %v2243, %v2277
        %v2297 = vsub.f32 %v2245, %v2279
        %v2298 = vsub.f32 %v2248, %v2281
        %v2299 = vsub.f32 %v2250, %v2283
        %v2300 = vmul.f32 %v2284, 1.442695
        %v2301 = vpow.pop %v2300
        %v2302 = vmul.f32 %v2285, 1.442695
        %v2303 = vpow.pop %v2302
        %v2304 = vmul.f32 %v2286, 1.442695
        %v2305 = vpow.pop %v2304
        %v2306 = vmul.f32 %v2287, 1.442695
        %v2307 = vpow.pop %v2306
        %v2308 = vmul.f32 %v2288, 1.442695
        %v2309 = vpow.pop %v2308
        %v2310 = vmul.f32 %v2289, 1.442695
        %v2311 = vpow.pop %v2310
        %v2312 = vmul.f32 %v2290, 1.442695
        %v2313 = vpow.pop %v2312
        %v2314 = vmul.f32 %v2291, 1.442695
        %v2315 = vpow.pop %v2314
        %v2316 = vmul.f32 %v2292, 1.442695
        %v2317 = vpow.pop %v2316
        %v2318 = vmul.f32 %v2293, 1.442695
        %v2319 = vpow.pop %v2318
        %v2320 = vmul.f32 %v2294, 1.442695
        %v2321 = vpow.pop %v2320
        %v2322 = vmul.f32 %v2295, 1.442695
        %v2323 = vpow.pop %v2322
        %v2324 = vmul.f32 %v2296, 1.442695
        %v2325 = vpow.pop %v2324
        %v2326 = vmul.f32 %v2297, 1.442695
        %v2327 = vpow.pop %v2326
        %v2328 = vmul.f32 %v2298, 1.442695
        %v2329 = vpow.pop %v2328
        %v2330 = vmul.f32 %v2299, 1.442695
        %v2331 = vpow.pop %v2330
        %v2332 = vpack.c.bf16 %v2303, %v2301
        %v2333 = vpack.c.bf16 %v2307, %v2305
        %v2334 = vpack.c.bf16 %v2311, %v2309
        %v2335 = vpack.c.bf16 %v2315, %v2313
        %v2336 = vpack.c.bf16 %v2319, %v2317
        %v2337 = vpack.c.bf16 %v2323, %v2321
        %v2338 = vpack.c.bf16 %v2327, %v2325
        %v2339 = vpack.c.bf16 %v2331, %v2329
        %2340 = vmatpush.bf16.xpose.msra.mxu0 %v2339
        %2341 = vmatpush.bf16.xpose.msra.mxu0 %v2338
        %2342 = vmatpush.bf16.xpose.msra.mxu0 %v2337
        %2343 = vmatpush.bf16.xpose.msra.mxu0 %v2336
        %2344 = vmatpush.bf16.xpose.msra.mxu0 %v2335
        %2345 = vmatpush.bf16.xpose.msra.mxu0 %v2334
        %2346 = vmatpush.bf16.xpose.msra.mxu0 %v2333
        %2347 = vmatpush.bf16.xpose.msra.mxu0 %v2332
        %2348 = vmatmul.bf16.gmra.mxu0 %v2158
        %v2349 = vpop.f32.mrf.mxu0
        %v2350 = vadd.f32 0.0, %v2349
        %v2351 = vpop.f32.mrf.mxu0
        %v2352 = vadd.f32 0.0, %v2351
        %2353 = vmatmul.bf16.gmra.mxu0 %v2159
        %v2354 = vpop.f32.mrf.mxu0
        %v2355 = vadd.f32 0.0, %v2354
        %v2356 = vpop.f32.mrf.mxu0
        %v2357 = vadd.f32 0.0, %v2356
        %2358 = vdwg.mxu0
        %v2359 = vrcp.pop %v2357
        %v2360 = vperm.slane %v2359, 0
        %v2361 = vmul.f32 %v2350, %v2360
        %v2362 = vmul.f32 %v2352, %v2360
        %v2363 = vmul.f32 %v2355, %v2360
        %v2364 = vpack.c.bf16 %v2046, %v2022
        %v2365 = vpack.c.bf16 %v2070, %v2070
        %v2366 = vpack.c.bf16 %v2051, %v2027
        %v2367 = vpack.c.bf16 %v2075, %v2075
        %v2368 = vpack.c.bf16 %v2056, %v2032
        %v2369 = vpack.c.bf16 1.0, %v2080
        %2370 = vxpose.xlu0.c.b16.start [1/8] %v2364, 128
        %2371 = vxpose.xlu0.c.b16.cont [2/8] %v2365, 128
        %2372 = vxpose.xlu0.c.b16.cont [3/8] 0, 128
        %2373 = vxpose.xlu0.c.b16.cont [4/8] 0, 128
        %2374 = vxpose.xlu0.c.b16.cont [5/8] 0, 128
        %2375 = vxpose.xlu0.c.b16.cont [6/8] 0, 128
        %2376 = vxpose.xlu0.c.b16.cont [7/8] 0, 128
        %2377 = vxpose.xlu0.c.b16.end [8/8] 0, 128
        %v2378 = vpop.trf.xlu0
        %v2379 = vpop.trf.xlu0
        %v2380 = vpop.trf.xlu0
        %v2381 = vpop.trf.xlu0
        %v2382 = vpop.trf.xlu0
        %v2383 = vpop.trf.xlu0
        %v2384 = vpop.trf.xlu0
        %v2385 = vpop.trf.xlu0
        %v2387 = vsel %vm698, %v2378, 0
        %v2390 = vsel %vm698, %v2379, 0
        %v2393 = vsel %vm698, %v2380, 0
        %v2396 = vsel %vm698, %v2381, 0
        %v2399 = vsel %vm698, %v2382, 0
        %v2402 = vsel %vm698, %v2383, 0
        %v2405 = vsel %vm698, %v2384, 0
        %v2408 = vsel %vm698, %v2385, 0
        %v2411 = vsel %vm723, %v2367, 0
        %2413 = vmatpush.bf16.msra.mxu0 0
        %2414 = vmatpush.bf16.msra.mxu0 0
        %2415 = vmatpush.bf16.msra.mxu0 0
        %2416 = vmatpush.bf16.msra.mxu0 0
        %2417 = vmatpush.bf16.msra.mxu0 0
        %2418 = vmatpush.bf16.msra.mxu0 0
        %2419 = vmatpush.bf16.msra.mxu0 %v2411
        %2420 = vmatpush.bf16.msra.mxu0 %v2366
        %2421 = vmatmul.bf16.gmra.mxu0 %v2387
        %v2422 = vpop.f32.mrf.mxu0
        %v2423 = vadd.f32 0.0, %v2422
        %v2424 = vpop.f32.mrf.mxu0
        %v2425 = vadd.f32 0.0, %v2424
        %2426 = vmatmul.bf16.gmra.mxu0 %v2390
        %v2427 = vpop.f32.mrf.mxu0
        %v2428 = vadd.f32 0.0, %v2427
        %v2429 = vpop.f32.mrf.mxu0
        %v2430 = vadd.f32 0.0, %v2429
        %2431 = vmatmul.bf16.gmra.mxu0 %v2393
        %v2432 = vpop.f32.mrf.mxu0
        %v2433 = vadd.f32 0.0, %v2432
        %v2434 = vpop.f32.mrf.mxu0
        %v2435 = vadd.f32 0.0, %v2434
        %2436 = vmatmul.bf16.gmra.mxu0 %v2396
        %v2437 = vpop.f32.mrf.mxu0
        %v2438 = vadd.f32 0.0, %v2437
        %v2439 = vpop.f32.mrf.mxu0
        %v2440 = vadd.f32 0.0, %v2439
        %2441 = vmatmul.bf16.gmra.mxu0 %v2399
        %v2442 = vpop.f32.mrf.mxu0
        %v2443 = vadd.f32 0.0, %v2442
        %v2444 = vpop.f32.mrf.mxu0
        %v2445 = vadd.f32 0.0, %v2444
        %2446 = vmatmul.bf16.gmra.mxu0 %v2402
        %v2447 = vpop.f32.mrf.mxu0
        %v2448 = vadd.f32 0.0, %v2447
        %v2449 = vpop.f32.mrf.mxu0
        %v2450 = vadd.f32 0.0, %v2449
        %2451 = vmatmul.bf16.gmra.mxu0 %v2405
        %v2452 = vpop.f32.mrf.mxu0
        %v2453 = vadd.f32 0.0, %v2452
        %v2454 = vpop.f32.mrf.mxu0
        %v2455 = vadd.f32 0.0, %v2454
        %2456 = vmatmul.bf16.gmra.mxu0 %v2408
        %v2457 = vpop.f32.mrf.mxu0
        %v2458 = vadd.f32 0.0, %v2457
        %v2459 = vpop.f32.mrf.mxu0
        %v2460 = vadd.f32 0.0, %v2459
        %2461 = vdwg.mxu0
        %2462 = vmax.xlane.f32.xlu0 %v2423
        %v2463 = vpop.xlane.xlu0 %2462
        %2464 = vmax.xlane.f32.xlu0 %v2425
        %v2465 = vpop.xlane.xlu0 %2464
        %2466 = vmax.xlane.f32.xlu0 %v2428
        %v2467 = vpop.xlane.xlu0 %2466
        %2468 = vmax.xlane.f32.xlu0 %v2430
        %v2469 = vpop.xlane.xlu0 %2468
        %2470 = vmax.xlane.f32.xlu0 %v2433
        %v2471 = vpop.xlane.xlu0 %2470
        %2472 = vmax.xlane.f32.xlu0 %v2435
        %v2473 = vpop.xlane.xlu0 %2472
        %2474 = vmax.xlane.f32.xlu0 %v2438
        %v2475 = vpop.xlane.xlu0 %2474
        %2476 = vmax.xlane.f32.xlu0 %v2440
        %v2477 = vpop.xlane.xlu0 %2476
        %2478 = vmax.xlane.f32.xlu0 %v2443
        %v2479 = vpop.xlane.xlu0 %2478
        %2480 = vmax.xlane.f32.xlu0 %v2445
        %v2481 = vpop.xlane.xlu0 %2480
        %2482 = vmax.xlane.f32.xlu0 %v2448
        %v2483 = vpop.xlane.xlu0 %2482
        %2484 = vmax.xlane.f32.xlu0 %v2450
        %v2485 = vpop.xlane.xlu0 %2484
        %2486 = vmax.xlane.f32.xlu0 %v2453
        %v2487 = vpop.xlane.xlu0 %2486
        %2488 = vmax.xlane.f32.xlu0 %v2455
        %v2489 = vpop.xlane.xlu0 %2488
        %2490 = vmax.xlane.f32.xlu0 %v2458
        %v2491 = vpop.xlane.xlu0 %2490
        %2492 = vmax.xlane.f32.xlu0 %v2460
        %v2493 = vpop.xlane.xlu0 %2492
        %v2494 = vsub.f32 %v2423, %v2463
        %v2495 = vsub.f32 %v2425, %v2465
        %v2496 = vsub.f32 %v2428, %v2467
        %v2497 = vsub.f32 %v2430, %v2469
        %v2498 = vsub.f32 %v2433, %v2471
        %v2499 = vsub.f32 %v2435, %v2473
        %v2500 = vsub.f32 %v2438, %v2475
        %v2501 = vsub.f32 %v2440, %v2477
        %v2502 = vsub.f32 %v2443, %v2479
        %v2503 = vsub.f32 %v2445, %v2481
        %v2504 = vsub.f32 %v2448, %v2483
        %v2505 = vsub.f32 %v2450, %v2485
        %v2506 = vsub.f32 %v2453, %v2487
        %v2507 = vsub.f32 %v2455, %v2489
        %v2508 = vsub.f32 %v2458, %v2491
        %v2509 = vsub.f32 %v2460, %v2493
        %v2510 = vmul.f32 %v2494, 1.442695
        %v2511 = vpow.pop %v2510
        %v2512 = vmul.f32 %v2495, 1.442695
        %v2513 = vpow.pop %v2512
        %v2514 = vmul.f32 %v2496, 1.442695
        %v2515 = vpow.pop %v2514
        %v2516 = vmul.f32 %v2497, 1.442695
        %v2517 = vpow.pop %v2516
        %v2518 = vmul.f32 %v2498, 1.442695
        %v2519 = vpow.pop %v2518
        %v2520 = vmul.f32 %v2499, 1.442695
        %v2521 = vpow.pop %v2520
        %v2522 = vmul.f32 %v2500, 1.442695
        %v2523 = vpow.pop %v2522
        %v2524 = vmul.f32 %v2501, 1.442695
        %v2525 = vpow.pop %v2524
        %v2526 = vmul.f32 %v2502, 1.442695
        %v2527 = vpow.pop %v2526
        %v2528 = vmul.f32 %v2503, 1.442695
        %v2529 = vpow.pop %v2528
        %v2530 = vmul.f32 %v2504, 1.442695
        %v2531 = vpow.pop %v2530
        %v2532 = vmul.f32 %v2505, 1.442695
        %v2533 = vpow.pop %v2532
        %v2534 = vmul.f32 %v2506, 1.442695
        %v2535 = vpow.pop %v2534
        %v2536 = vmul.f32 %v2507, 1.442695
        %v2537 = vpow.pop %v2536
        %v2538 = vmul.f32 %v2508, 1.442695
        %v2539 = vpow.pop %v2538
        %v2540 = vmul.f32 %v2509, 1.442695
        %v2541 = vpow.pop %v2540
        %v2542 = vpack.c.bf16 %v2513, %v2511
        %v2543 = vpack.c.bf16 %v2517, %v2515
        %v2544 = vpack.c.bf16 %v2521, %v2519
        %v2545 = vpack.c.bf16 %v2525, %v2523
        %v2546 = vpack.c.bf16 %v2529, %v2527
        %v2547 = vpack.c.bf16 %v2533, %v2531
        %v2548 = vpack.c.bf16 %v2537, %v2535
        %v2549 = vpack.c.bf16 %v2541, %v2539
        %2550 = vmatpush.bf16.xpose.msra.mxu0 %v2549
        %2551 = vmatpush.bf16.xpose.msra.mxu0 %v2548
        %2552 = vmatpush.bf16.xpose.msra.mxu0 %v2547
        %2553 = vmatpush.bf16.xpose.msra.mxu0 %v2546
        %2554 = vmatpush.bf16.xpose.msra.mxu0 %v2545
        %2555 = vmatpush.bf16.xpose.msra.mxu0 %v2544
        %2556 = vmatpush.bf16.xpose.msra.mxu0 %v2543
        %2557 = vmatpush.bf16.xpose.msra.mxu0 %v2542
        %2558 = vmatmul.bf16.gmra.mxu0 %v2368
        %v2559 = vpop.f32.mrf.mxu0
        %v2560 = vadd.f32 0.0, %v2559
        %v2561 = vpop.f32.mrf.mxu0
        %v2562 = vadd.f32 0.0, %v2561
        %2563 = vmatmul.bf16.gmra.mxu0 %v2369
        %v2564 = vpop.f32.mrf.mxu0
        %v2565 = vadd.f32 0.0, %v2564
        %v2566 = vpop.f32.mrf.mxu0
        %v2567 = vadd.f32 0.0, %v2566
        %2568 = vdwg.mxu0
        %v2569 = vrcp.pop %v2567
        %v2570 = vperm.slane %v2569, 0
        %v2571 = vmul.f32 %v2560, %v2570
        %v2572 = vmul.f32 %v2562, %v2570
        %v2573 = vmul.f32 %v2565, %v2570
        %v2574 = vpack.c.bf16 %v2116, %v2092
        %v2575 = vpack.c.bf16 %v2140, %v2140
        %v2576 = vpack.c.bf16 %v2121, %v2097
        %v2577 = vpack.c.bf16 %v2145, %v2145
        %v2578 = vpack.c.bf16 %v2126, %v2102
        %v2579 = vpack.c.bf16 1.0, %v2150
        %2580 = vxpose.xlu0.c.b16.start [1/8] %v2574, 128
        %2581 = vxpose.xlu0.c.b16.cont [2/8] %v2575, 128
        %2582 = vxpose.xlu0.c.b16.cont [3/8] 0, 128
        %2583 = vxpose.xlu0.c.b16.cont [4/8] 0, 128
        %2584 = vxpose.xlu0.c.b16.cont [5/8] 0, 128
        %2585 = vxpose.xlu0.c.b16.cont [6/8] 0, 128
        %2586 = vxpose.xlu0.c.b16.cont [7/8] 0, 128
        %2587 = vxpose.xlu0.c.b16.end [8/8] 0, 128
        %v2588 = vpop.trf.xlu0
        %v2589 = vpop.trf.xlu0
        %v2590 = vpop.trf.xlu0
        %v2591 = vpop.trf.xlu0
        %v2592 = vpop.trf.xlu0
        %v2593 = vpop.trf.xlu0
        %v2594 = vpop.trf.xlu0
        %v2595 = vpop.trf.xlu0
        %v2597 = vsel %vm698, %v2588, 0
        %v2600 = vsel %vm698, %v2589, 0
        %v2603 = vsel %vm698, %v2590, 0
        %v2606 = vsel %vm698, %v2591, 0
        %v2609 = vsel %vm698, %v2592, 0
        %v2612 = vsel %vm698, %v2593, 0
        %v2615 = vsel %vm698, %v2594, 0
        %v2618 = vsel %vm698, %v2595, 0
        %v2621 = vsel %vm723, %v2577, 0
        %2623 = vmatpush.bf16.msra.mxu0 0
        %2624 = vmatpush.bf16.msra.mxu0 0
        %2625 = vmatpush.bf16.msra.mxu0 0
        %2626 = vmatpush.bf16.msra.mxu0 0
        %2627 = vmatpush.bf16.msra.mxu0 0
        %2628 = vmatpush.bf16.msra.mxu0 0
        %2629 = vmatpush.bf16.msra.mxu0 %v2621
        %2630 = vmatpush.bf16.msra.mxu0 %v2576
        %2631 = vmatmul.bf16.gmra.mxu0 %v2597
        %v2632 = vpop.f32.mrf.mxu0
        %v2633 = vadd.f32 0.0, %v2632
        %v2634 = vpop.f32.mrf.mxu0
        %v2635 = vadd.f32 0.0, %v2634
        %2636 = vmatmul.bf16.gmra.mxu0 %v2600
        %v2637 = vpop.f32.mrf.mxu0
        %v2638 = vadd.f32 0.0, %v2637
        %v2639 = vpop.f32.mrf.mxu0
        %v2640 = vadd.f32 0.0, %v2639
        %2641 = vmatmul.bf16.gmra.mxu0 %v2603
        %v2642 = vpop.f32.mrf.mxu0
        %v2643 = vadd.f32 0.0, %v2642
        %v2644 = vpop.f32.mrf.mxu0
        %v2645 = vadd.f32 0.0, %v2644
        %2646 = vmatmul.bf16.gmra.mxu0 %v2606
        %v2647 = vpop.f32.mrf.mxu0
        %v2648 = vadd.f32 0.0, %v2647
        %v2649 = vpop.f32.mrf.mxu0
        %v2650 = vadd.f32 0.0, %v2649
        %2651 = vmatmul.bf16.gmra.mxu0 %v2609
        %v2652 = vpop.f32.mrf.mxu0
        %v2653 = vadd.f32 0.0, %v2652
        %v2654 = vpop.f32.mrf.mxu0
        %v2655 = vadd.f32 0.0, %v2654
        %2656 = vmatmul.bf16.gmra.mxu0 %v2612
        %v2657 = vpop.f32.mrf.mxu0
        %v2658 = vadd.f32 0.0, %v2657
        %v2659 = vpop.f32.mrf.mxu0
        %v2660 = vadd.f32 0.0, %v2659
        %2661 = vmatmul.bf16.gmra.mxu0 %v2615
        %v2662 = vpop.f32.mrf.mxu0
        %v2663 = vadd.f32 0.0, %v2662
        %v2664 = vpop.f32.mrf.mxu0
        %v2665 = vadd.f32 0.0, %v2664
        %2666 = vmatmul.bf16.gmra.mxu0 %v2618
        %v2667 = vpop.f32.mrf.mxu0
        %v2668 = vadd.f32 0.0, %v2667
        %v2669 = vpop.f32.mrf.mxu0
        %v2670 = vadd.f32 0.0, %v2669
        %2671 = vdwg.mxu0
        %2672 = vmax.xlane.f32.xlu0 %v2633
        %v2673 = vpop.xlane.xlu0 %2672
        %2674 = vmax.xlane.f32.xlu0 %v2635
        %v2675 = vpop.xlane.xlu0 %2674
        %2676 = vmax.xlane.f32.xlu0 %v2638
        %v2677 = vpop.xlane.xlu0 %2676
        %2678 = vmax.xlane.f32.xlu0 %v2640
        %v2679 = vpop.xlane.xlu0 %2678
        %2680 = vmax.xlane.f32.xlu0 %v2643
        %v2681 = vpop.xlane.xlu0 %2680
        %2682 = vmax.xlane.f32.xlu0 %v2645
        %v2683 = vpop.xlane.xlu0 %2682
        %2684 = vmax.xlane.f32.xlu0 %v2648
        %v2685 = vpop.xlane.xlu0 %2684
        %2686 = vmax.xlane.f32.xlu0 %v2650
        %v2687 = vpop.xlane.xlu0 %2686
        %2688 = vmax.xlane.f32.xlu0 %v2653
        %v2689 = vpop.xlane.xlu0 %2688
        %2690 = vmax.xlane.f32.xlu0 %v2655
        %v2691 = vpop.xlane.xlu0 %2690
        %2692 = vmax.xlane.f32.xlu0 %v2658
        %v2693 = vpop.xlane.xlu0 %2692
        %2694 = vmax.xlane.f32.xlu0 %v2660
        %v2695 = vpop.xlane.xlu0 %2694
        %2696 = vmax.xlane.f32.xlu0 %v2663
        %v2697 = vpop.xlane.xlu0 %2696
        %2698 = vmax.xlane.f32.xlu0 %v2665
        %v2699 = vpop.xlane.xlu0 %2698
        %2700 = vmax.xlane.f32.xlu0 %v2668
        %v2701 = vpop.xlane.xlu0 %2700
        %2702 = vmax.xlane.f32.xlu0 %v2670
        %v2703 = vpop.xlane.xlu0 %2702
        %v2704 = vsub.f32 %v2633, %v2673
        %v2705 = vsub.f32 %v2635, %v2675
        %v2706 = vsub.f32 %v2638, %v2677
        %v2707 = vsub.f32 %v2640, %v2679
        %v2708 = vsub.f32 %v2643, %v2681
        %v2709 = vsub.f32 %v2645, %v2683
        %v2710 = vsub.f32 %v2648, %v2685
        %v2711 = vsub.f32 %v2650, %v2687
        %v2712 = vsub.f32 %v2653, %v2689
        %v2713 = vsub.f32 %v2655, %v2691
        %v2714 = vsub.f32 %v2658, %v2693
        %v2715 = vsub.f32 %v2660, %v2695
        %v2716 = vsub.f32 %v2663, %v2697
        %v2717 = vsub.f32 %v2665, %v2699
        %v2718 = vsub.f32 %v2668, %v2701
        %v2719 = vsub.f32 %v2670, %v2703
        %v2720 = vmul.f32 %v2704, 1.442695
        %v2721 = vpow.pop %v2720
        %v2722 = vmul.f32 %v2705, 1.442695
        %v2723 = vpow.pop %v2722
        %v2724 = vmul.f32 %v2706, 1.442695
        %v2725 = vpow.pop %v2724
        %v2726 = vmul.f32 %v2707, 1.442695
        %v2727 = vpow.pop %v2726
        %v2728 = vmul.f32 %v2708, 1.442695
        %v2729 = vpow.pop %v2728
        %v2730 = vmul.f32 %v2709, 1.442695
        %v2731 = vpow.pop %v2730
        %v2732 = vmul.f32 %v2710, 1.442695
        %v2733 = vpow.pop %v2732
        %v2734 = vmul.f32 %v2711, 1.442695
        %v2735 = vpow.pop %v2734
        %v2736 = vmul.f32 %v2712, 1.442695
        %v2737 = vpow.pop %v2736
        %v2738 = vmul.f32 %v2713, 1.442695
        %v2739 = vpow.pop %v2738
        %v2740 = vmul.f32 %v2714, 1.442695
        %v2741 = vpow.pop %v2740
        %v2742 = vmul.f32 %v2715, 1.442695
        %v2743 = vpow.pop %v2742
        %v2744 = vmul.f32 %v2716, 1.442695
        %v2745 = vpow.pop %v2744
        %v2746 = vmul.f32 %v2717, 1.442695
        %v2747 = vpow.pop %v2746
        %v2748 = vmul.f32 %v2718, 1.442695
        %v2749 = vpow.pop %v2748
        %v2750 = vmul.f32 %v2719, 1.442695
        %v2751 = vpow.pop %v2750
        %v2752 = vpack.c.bf16 %v2723, %v2721
        %v2753 = vpack.c.bf16 %v2727, %v2725
        %v2754 = vpack.c.bf16 %v2731, %v2729
        %v2755 = vpack.c.bf16 %v2735, %v2733
        %v2756 = vpack.c.bf16 %v2739, %v2737
        %v2757 = vpack.c.bf16 %v2743, %v2741
        %v2758 = vpack.c.bf16 %v2747, %v2745
        %v2759 = vpack.c.bf16 %v2751, %v2749
        %2760 = vmatpush.bf16.xpose.msra.mxu0 %v2759
        %2761 = vmatpush.bf16.xpose.msra.mxu0 %v2758
        %2762 = vmatpush.bf16.xpose.msra.mxu0 %v2757
        %2763 = vmatpush.bf16.xpose.msra.mxu0 %v2756
        %2764 = vmatpush.bf16.xpose.msra.mxu0 %v2755
        %2765 = vmatpush.bf16.xpose.msra.mxu0 %v2754
        %2766 = vmatpush.bf16.xpose.msra.mxu0 %v2753
        %2767 = vmatpush.bf16.xpose.msra.mxu0 %v2752
        %2768 = vmatmul.bf16.gmra.mxu0 %v2578
        %v2769 = vpop.f32.mrf.mxu0
        %v2770 = vadd.f32 0.0, %v2769
        %v2771 = vpop.f32.mrf.mxu0
        %v2772 = vadd.f32 0.0, %v2771
        %2773 = vmatmul.bf16.gmra.mxu0 %v2579
        %v2774 = vpop.f32.mrf.mxu0
        %v2775 = vadd.f32 0.0, %v2774
        %v2776 = vpop.f32.mrf.mxu0
        %v2777 = vadd.f32 0.0, %v2776
        %2778 = vdwg.mxu0
        %v2779 = vrcp.pop %v2777
        %v2780 = vperm.slane %v2779, 0
        %v2781 = vmul.f32 %v2770, %v2780
        %v2782 = vmul.f32 %v2772, %v2780
        %v2783 = vmul.f32 %v2775, %v2780
        %v2784 = vpack.c.bf16 %v2118, %v2094
        %v2785 = vpack.c.bf16 %v2142, %v2142
        %v2786 = vpack.c.bf16 %v2123, %v2099
        %v2787 = vpack.c.bf16 %v2147, %v2147
        %v2788 = vpack.c.bf16 %v2128, %v2104
        %v2789 = vpack.c.bf16 1.0, %v2152
        %2790 = vxpose.xlu0.c.b16.start [1/8] %v2784, 128
        %2791 = vxpose.xlu0.c.b16.cont [2/8] %v2785, 128
        %2792 = vxpose.xlu0.c.b16.cont [3/8] 0, 128
        %2793 = vxpose.xlu0.c.b16.cont [4/8] 0, 128
        %2794 = vxpose.xlu0.c.b16.cont [5/8] 0, 128
        %2795 = vxpose.xlu0.c.b16.cont [6/8] 0, 128
        %2796 = vxpose.xlu0.c.b16.cont [7/8] 0, 128
        %2797 = vxpose.xlu0.c.b16.end [8/8] 0, 128
        %v2798 = vpop.trf.xlu0
        %v2799 = vpop.trf.xlu0
        %v2800 = vpop.trf.xlu0
        %v2801 = vpop.trf.xlu0
        %v2802 = vpop.trf.xlu0
        %v2803 = vpop.trf.xlu0
        %v2804 = vpop.trf.xlu0
        %v2805 = vpop.trf.xlu0
        %v2807 = vsel %vm698, %v2798, 0
        %v2810 = vsel %vm698, %v2799, 0
        %v2813 = vsel %vm698, %v2800, 0
        %v2816 = vsel %vm698, %v2801, 0
        %v2819 = vsel %vm698, %v2802, 0
        %v2822 = vsel %vm698, %v2803, 0
        %v2825 = vsel %vm698, %v2804, 0
        %v2828 = vsel %vm698, %v2805, 0
        %v2831 = vsel %vm723, %v2787, 0
        %2833 = vmatpush.bf16.msra.mxu0 0
        %2834 = vmatpush.bf16.msra.mxu0 0
        %2835 = vmatpush.bf16.msra.mxu0 0
        %2836 = vmatpush.bf16.msra.mxu0 0
        %2837 = vmatpush.bf16.msra.mxu0 0
        %2838 = vmatpush.bf16.msra.mxu0 0
        %2839 = vmatpush.bf16.msra.mxu0 %v2831
        %2840 = vmatpush.bf16.msra.mxu0 %v2786
        %2841 = vmatmul.bf16.gmra.mxu0 %v2807
        %v2842 = vpop.f32.mrf.mxu0
        %v2843 = vadd.f32 0.0, %v2842
        %v2844 = vpop.f32.mrf.mxu0
        %v2845 = vadd.f32 0.0, %v2844
        %2846 = vmatmul.bf16.gmra.mxu0 %v2810
        %v2847 = vpop.f32.mrf.mxu0
        %v2848 = vadd.f32 0.0, %v2847
        %v2849 = vpop.f32.mrf.mxu0
        %v2850 = vadd.f32 0.0, %v2849
        %2851 = vmatmul.bf16.gmra.mxu0 %v2813
        %v2852 = vpop.f32.mrf.mxu0
        %v2853 = vadd.f32 0.0, %v2852
        %v2854 = vpop.f32.mrf.mxu0
        %v2855 = vadd.f32 0.0, %v2854
        %2856 = vmatmul.bf16.gmra.mxu0 %v2816
        %v2857 = vpop.f32.mrf.mxu0
        %v2858 = vadd.f32 0.0, %v2857
        %v2859 = vpop.f32.mrf.mxu0
        %v2860 = vadd.f32 0.0, %v2859
        %2861 = vmatmul.bf16.gmra.mxu0 %v2819
        %v2862 = vpop.f32.mrf.mxu0
        %v2863 = vadd.f32 0.0, %v2862
        %v2864 = vpop.f32.mrf.mxu0
        %v2865 = vadd.f32 0.0, %v2864
        %2866 = vmatmul.bf16.gmra.mxu0 %v2822
        %v2867 = vpop.f32.mrf.mxu0
        %v2868 = vadd.f32 0.0, %v2867
        %v2869 = vpop.f32.mrf.mxu0
        %v2870 = vadd.f32 0.0, %v2869
        %2871 = vmatmul.bf16.gmra.mxu0 %v2825
        %v2872 = vpop.f32.mrf.mxu0
        %v2873 = vadd.f32 0.0, %v2872
        %v2874 = vpop.f32.mrf.mxu0
        %v2875 = vadd.f32 0.0, %v2874
        %2876 = vmatmul.bf16.gmra.mxu0 %v2828
        %v2877 = vpop.f32.mrf.mxu0
        %v2878 = vadd.f32 0.0, %v2877
        %v2879 = vpop.f32.mrf.mxu0
        %v2880 = vadd.f32 0.0, %v2879
        %2881 = vdwg.mxu0
        %2882 = vmax.xlane.f32.xlu0 %v2843
        %v2883 = vpop.xlane.xlu0 %2882
        %2884 = vmax.xlane.f32.xlu0 %v2845
        %v2885 = vpop.xlane.xlu0 %2884
        %2886 = vmax.xlane.f32.xlu0 %v2848
        %v2887 = vpop.xlane.xlu0 %2886
        %2888 = vmax.xlane.f32.xlu0 %v2850
        %v2889 = vpop.xlane.xlu0 %2888
        %2890 = vmax.xlane.f32.xlu0 %v2853
        %v2891 = vpop.xlane.xlu0 %2890
        %2892 = vmax.xlane.f32.xlu0 %v2855
        %v2893 = vpop.xlane.xlu0 %2892
        %2894 = vmax.xlane.f32.xlu0 %v2858
        %v2895 = vpop.xlane.xlu0 %2894
        %2896 = vmax.xlane.f32.xlu0 %v2860
        %v2897 = vpop.xlane.xlu0 %2896
        %2898 = vmax.xlane.f32.xlu0 %v2863
        %v2899 = vpop.xlane.xlu0 %2898
        %2900 = vmax.xlane.f32.xlu0 %v2865
        %v2901 = vpop.xlane.xlu0 %2900
        %2902 = vmax.xlane.f32.xlu0 %v2868
        %v2903 = vpop.xlane.xlu0 %2902
        %2904 = vmax.xlane.f32.xlu0 %v2870
        %v2905 = vpop.xlane.xlu0 %2904
        %2906 = vmax.xlane.f32.xlu0 %v2873
        %v2907 = vpop.xlane.xlu0 %2906
        %2908 = vmax.xlane.f32.xlu0 %v2875
        %v2909 = vpop.xlane.xlu0 %2908
        %2910 = vmax.xlane.f32.xlu0 %v2878
        %v2911 = vpop.xlane.xlu0 %2910
        %2912 = vmax.xlane.f32.xlu0 %v2880
        %v2913 = vpop.xlane.xlu0 %2912
        %v2914 = vsub.f32 %v2843, %v2883
        %v2915 = vsub.f32 %v2845, %v2885
        %v2916 = vsub.f32 %v2848, %v2887
        %v2917 = vsub.f32 %v2850, %v2889
        %v2918 = vsub.f32 %v2853, %v2891
        %v2919 = vsub.f32 %v2855, %v2893
        %v2920 = vsub.f32 %v2858, %v2895
        %v2921 = vsub.f32 %v2860, %v2897
        %v2922 = vsub.f32 %v2863, %v2899
        %v2923 = vsub.f32 %v2865, %v2901
        %v2924 = vsub.f32 %v2868, %v2903
        %v2925 = vsub.f32 %v2870, %v2905
        %v2926 = vsub.f32 %v2873, %v2907
        %v2927 = vsub.f32 %v2875, %v2909
        %v2928 = vsub.f32 %v2878, %v2911
        %v2929 = vsub.f32 %v2880, %v2913
        %v2930 = vmul.f32 %v2914, 1.442695
        %v2931 = vpow.pop %v2930
        %v2932 = vmul.f32 %v2915, 1.442695
        %v2933 = vpow.pop %v2932
        %v2934 = vmul.f32 %v2916, 1.442695
        %v2935 = vpow.pop %v2934
        %v2936 = vmul.f32 %v2917, 1.442695
        %v2937 = vpow.pop %v2936
        %v2938 = vmul.f32 %v2918, 1.442695
        %v2939 = vpow.pop %v2938
        %v2940 = vmul.f32 %v2919, 1.442695
        %v2941 = vpow.pop %v2940
        %v2942 = vmul.f32 %v2920, 1.442695
        %v2943 = vpow.pop %v2942
        %v2944 = vmul.f32 %v2921, 1.442695
        %v2945 = vpow.pop %v2944
        %v2946 = vmul.f32 %v2922, 1.442695
        %v2947 = vpow.pop %v2946
        %v2948 = vmul.f32 %v2923, 1.442695
        %v2949 = vpow.pop %v2948
        %v2950 = vmul.f32 %v2924, 1.442695
        %v2951 = vpow.pop %v2950
        %v2952 = vmul.f32 %v2925, 1.442695
        %v2953 = vpow.pop %v2952
        %v2954 = vmul.f32 %v2926, 1.442695
        %v2955 = vpow.pop %v2954
        %v2956 = vmul.f32 %v2927, 1.442695
        %v2957 = vpow.pop %v2956
        %v2958 = vmul.f32 %v2928, 1.442695
        %v2959 = vpow.pop %v2958
        %v2960 = vmul.f32 %v2929, 1.442695
        %v2961 = vpow.pop %v2960
        %v2962 = vpack.c.bf16 %v2933, %v2931
        %v2963 = vpack.c.bf16 %v2937, %v2935
        %v2964 = vpack.c.bf16 %v2941, %v2939
        %v2965 = vpack.c.bf16 %v2945, %v2943
        %v2966 = vpack.c.bf16 %v2949, %v2947
        %v2967 = vpack.c.bf16 %v2953, %v2951
        %v2968 = vpack.c.bf16 %v2957, %v2955
        %v2969 = vpack.c.bf16 %v2961, %v2959
        %2970 = vmatpush.bf16.xpose.msra.mxu0 %v2969
        %2971 = vmatpush.bf16.xpose.msra.mxu0 %v2968
        %2972 = vmatpush.bf16.xpose.msra.mxu0 %v2967
        %2973 = vmatpush.bf16.xpose.msra.mxu0 %v2966
        %2974 = vmatpush.bf16.xpose.msra.mxu0 %v2965
        %2975 = vmatpush.bf16.xpose.msra.mxu0 %v2964
        %2976 = vmatpush.bf16.xpose.msra.mxu0 %v2963
        %2977 = vmatpush.bf16.xpose.msra.mxu0 %v2962
        %2978 = vmatmul.bf16.gmra.mxu0 %v2788
        %v2979 = vpop.f32.mrf.mxu0
        %v2980 = vadd.f32 0.0, %v2979
        %v2981 = vpop.f32.mrf.mxu0
        %v2982 = vadd.f32 0.0, %v2981
        %2983 = vmatmul.bf16.gmra.mxu0 %v2789
        %v2984 = vpop.f32.mrf.mxu0
        %v2985 = vadd.f32 0.0, %v2984
        %v2986 = vpop.f32.mrf.mxu0
        %v2987 = vadd.f32 0.0, %v2986
        %2988 = vdwg.mxu0
        %v2989 = vrcp.pop %v2987
        %v2990 = vperm.slane %v2989, 0
        %v2991 = vmul.f32 %v2980, %v2990
        %v2992 = vmul.f32 %v2982, %v2990
        %v2993 = vmul.f32 %v2985, %v2990
        %v2994 = vpack.c.bf16 %v2571, %v2361
        %v2995 = vpack.c.bf16 %v2572, %v2362
        %v2996 = vpack.c.bf16 %v2573, %v2363
        %v2997 = vpack.c.bf16 %v2991, %v2781
        %v2998 = vpack.c.bf16 %v2992, %v2782
        %v2999 = vpack.c.bf16 %v2993, %v2783
        %v3002 = vunpack.c.l.b16 %v1970
        %v3003 = vunpack.c.l.b16 %v1971
        %v3004 = vpack.c.b16 %v3003, %v3002
        %v3006 = vsel %vm522, %v3004, 0
        %3008 = vmatpush.bf16.msra.mxu0 0
        %3009 = vmatpush.bf16.msra.mxu0 0
        %3010 = vmatpush.bf16.msra.mxu0 0
        %3011 = vmatpush.bf16.msra.mxu0 0
        %3012 = vmatpush.bf16.msra.mxu0 0
        %3013 = vmatpush.bf16.msra.mxu0 0
        %3014 = vmatpush.bf16.msra.mxu0 0
        %3015 = vmatpush.bf16.msra.mxu0 %v2994
        %3016 = vmatmul.bf16.gmra.mxu0 %v3006
        %v3017 = vpop.f32.mrf.mxu0
        %v3018 = vadd.f32 0.0, %v3017
        %v3019 = vpop.f32.mrf.mxu0
        %v3020 = vadd.f32 0.0, %v3019
        %3021 = vdwg.mxu0
        %3022 = vmatpush.bf16.msra.mxu0 0
        %3023 = vmatpush.bf16.msra.mxu0 0
        %3024 = vmatpush.bf16.msra.mxu0 0
        %3025 = vmatpush.bf16.msra.mxu0 0
        %3026 = vmatpush.bf16.msra.mxu0 0
        %3027 = vmatpush.bf16.msra.mxu0 0
        %3028 = vmatpush.bf16.msra.mxu0 0
        %3029 = vmatpush.bf16.msra.mxu0 %v2995
        %3030 = vmatmul.bf16.gmra.mxu0 %v3006
        %v3031 = vpop.f32.mrf.mxu0
        %v3032 = vadd.f32 0.0, %v3031
        %v3033 = vpop.f32.mrf.mxu0
        %v3034 = vadd.f32 0.0, %v3033
        %3035 = vdwg.mxu0
        %3036 = vmatpush.bf16.msra.mxu0 0
        %3037 = vmatpush.bf16.msra.mxu0 0
        %3038 = vmatpush.bf16.msra.mxu0 0
        %3039 = vmatpush.bf16.msra.mxu0 0
        %3040 = vmatpush.bf16.msra.mxu0 0
        %3041 = vmatpush.bf16.msra.mxu0 0
        %3042 = vmatpush.bf16.msra.mxu0 0
        %3043 = vmatpush.bf16.msra.mxu0 %v2996
        %3044 = vmatmul.bf16.gmra.mxu0 %v3006
        %v3045 = vpop.f32.mrf.mxu0
        %v3046 = vadd.f32 0.0, %v3045
        %v3047 = vpop.f32.mrf.mxu0
        %v3048 = vadd.f32 0.0, %v3047
        %3049 = vdwg.mxu0
        %3050 = vmatpush.bf16.msra.mxu0 0
        %3051 = vmatpush.bf16.msra.mxu0 0
        %3052 = vmatpush.bf16.msra.mxu0 0
        %3053 = vmatpush.bf16.msra.mxu0 0
        %3054 = vmatpush.bf16.msra.mxu0 0
        %3055 = vmatpush.bf16.msra.mxu0 0
        %3056 = vmatpush.bf16.msra.mxu0 0
        %3057 = vmatpush.bf16.msra.mxu0 %v2997
        %3058 = vmatmul.bf16.gmra.mxu0 %v3006
        %v3059 = vpop.f32.mrf.mxu0
        %v3060 = vadd.f32 0.0, %v3059
        %v3061 = vpop.f32.mrf.mxu0
        %v3062 = vadd.f32 0.0, %v3061
        %3063 = vdwg.mxu0
        %3064 = vmatpush.bf16.msra.mxu0 0
        %3065 = vmatpush.bf16.msra.mxu0 0
        %3066 = vmatpush.bf16.msra.mxu0 0
        %3067 = vmatpush.bf16.msra.mxu0 0
        %3068 = vmatpush.bf16.msra.mxu0 0
        %3069 = vmatpush.bf16.msra.mxu0 0
        %3070 = vmatpush.bf16.msra.mxu0 0
        %3071 = vmatpush.bf16.msra.mxu0 %v2998
        %3072 = vmatmul.bf16.gmra.mxu0 %v3006
        %v3073 = vpop.f32.mrf.mxu0
        %v3074 = vadd.f32 0.0, %v3073
        %v3075 = vpop.f32.mrf.mxu0
        %v3076 = vadd.f32 0.0, %v3075
        %3077 = vdwg.mxu0
        %3078 = vmatpush.bf16.msra.mxu0 0
        %3079 = vmatpush.bf16.msra.mxu0 0
        %3080 = vmatpush.bf16.msra.mxu0 0
        %3081 = vmatpush.bf16.msra.mxu0 0
        %3082 = vmatpush.bf16.msra.mxu0 0
        %3083 = vmatpush.bf16.msra.mxu0 0
        %3084 = vmatpush.bf16.msra.mxu0 0
        %3085 = vmatpush.bf16.msra.mxu0 %v2999
        %3086 = vmatmul.bf16.gmra.mxu0 %v3006
        %v3087 = vpop.f32.mrf.mxu0
        %v3088 = vadd.f32 0.0, %v3087
        %v3089 = vpop.f32.mrf.mxu0
        %v3090 = vadd.f32 0.0, %v3089
        %3091 = vdwg.mxu0
        %v3092 = vadd.f32 %v1950, %v3018
        %v3093 = vadd.f32 %v1951, %v3032
        %v3094 = vadd.f32 %v1952, %v3046
        %v3095 = vadd.f32 %v1953, %v3060
        %v3096 = vadd.f32 %v1954, %v3074
        %v3097 = vadd.f32 %v1955, %v3088
        %v3098 = vadd.f32 %v1956, %v3020
        %v3099 = vadd.f32 %v1957, %v3034
        %v3100 = vadd.f32 %v1958, %v3048
        %v3101 = vadd.f32 %v1959, %v3062
        %v3102 = vadd.f32 %v1960, %v3076
        %v3103 = vadd.f32 %v1961, %v3090
        %v3104 = vpack.c.bf16 %v3098, %v3092
        %v3105 = vpack.c.bf16 %v3099, %v3093
        %v3106 = vpack.c.bf16 %v3100, %v3094
        %v3107 = vpack.c.bf16 %v3101, %v3095
        %v3108 = vpack.c.bf16 %v3102, %v3096
        %v3109 = vpack.c.bf16 %v3103, %v3097
        %v3114 = vunpack.c.l.b16 %v1973
        %v3115 = vunpack.c.l.b16 %v1974
        %v3116 = vunpack.c.l.b16 %v1975
        %v3117 = vunpack.c.l.b16 %v1976
        %v3118 = vpack.c.b16 %v3115, %v3114
        %v3119 = vpack.c.b16 %v3117, %v3116
        %v3121 = vsel %vm522, %v3118, 0
        %v3124 = vsel %vm522, %v3119, 0
        %3126 = vmatpush.bf16.msra.mxu0 0
        %3127 = vmatpush.bf16.msra.mxu0 0
        %3128 = vmatpush.bf16.msra.mxu0 0
        %3129 = vmatpush.bf16.msra.mxu0 0
        %3130 = vmatpush.bf16.msra.mxu0 0
        %3131 = vmatpush.bf16.msra.mxu0 0
        %3132 = vmatpush.bf16.msra.mxu0 0
        %3133 = vmatpush.bf16.msra.mxu0 %v3104
        %3134 = vmatmul.bf16.gmra.mxu0 %v3121
        %v3135 = vpop.f32.mrf.mxu0
        %v3136 = vadd.f32 0.0, %v3135
        %v3137 = vpop.f32.mrf.mxu0
        %v3138 = vadd.f32 0.0, %v3137
        %3139 = vmatmul.bf16.gmra.mxu0 %v3124
        %v3140 = vpop.f32.mrf.mxu0
        %v3141 = vadd.f32 0.0, %v3140
        %v3142 = vpop.f32.mrf.mxu0
        %v3143 = vadd.f32 0.0, %v3142
        %3144 = vdwg.mxu0
        %3145 = vmatpush.bf16.msra.mxu0 0
        %3146 = vmatpush.bf16.msra.mxu0 0
        %3147 = vmatpush.bf16.msra.mxu0 0
        %3148 = vmatpush.bf16.msra.mxu0 0
        %3149 = vmatpush.bf16.msra.mxu0 0
        %3150 = vmatpush.bf16.msra.mxu0 0
        %3151 = vmatpush.bf16.msra.mxu0 0
        %3152 = vmatpush.bf16.msra.mxu0 %v3105
        %3153 = vmatmul.bf16.gmra.mxu0 %v3121
        %v3154 = vpop.f32.mrf.mxu0
        %v3155 = vadd.f32 0.0, %v3154
        %v3156 = vpop.f32.mrf.mxu0
        %v3157 = vadd.f32 0.0, %v3156
        %3158 = vmatmul.bf16.gmra.mxu0 %v3124
        %v3159 = vpop.f32.mrf.mxu0
        %v3160 = vadd.f32 0.0, %v3159
        %v3161 = vpop.f32.mrf.mxu0
        %v3162 = vadd.f32 0.0, %v3161
        %3163 = vdwg.mxu0
        %3164 = vmatpush.bf16.msra.mxu0 0
        %3165 = vmatpush.bf16.msra.mxu0 0
        %3166 = vmatpush.bf16.msra.mxu0 0
        %3167 = vmatpush.bf16.msra.mxu0 0
        %3168 = vmatpush.bf16.msra.mxu0 0
        %3169 = vmatpush.bf16.msra.mxu0 0
        %3170 = vmatpush.bf16.msra.mxu0 0
        %3171 = vmatpush.bf16.msra.mxu0 %v3106
        %3172 = vmatmul.bf16.gmra.mxu0 %v3121
        %v3173 = vpop.f32.mrf.mxu0
        %v3174 = vadd.f32 0.0, %v3173
        %v3175 = vpop.f32.mrf.mxu0
        %v3176 = vadd.f32 0.0, %v3175
        %3177 = vmatmul.bf16.gmra.mxu0 %v3124
        %v3178 = vpop.f32.mrf.mxu0
        %v3179 = vadd.f32 0.0, %v3178
        %v3180 = vpop.f32.mrf.mxu0
        %v3181 = vadd.f32 0.0, %v3180
        %3182 = vdwg.mxu0
        %3183 = vmatpush.bf16.msra.mxu0 0
        %3184 = vmatpush.bf16.msra.mxu0 0
        %3185 = vmatpush.bf16.msra.mxu0 0
        %3186 = vmatpush.bf16.msra.mxu0 0
        %3187 = vmatpush.bf16.msra.mxu0 0
        %3188 = vmatpush.bf16.msra.mxu0 0
        %3189 = vmatpush.bf16.msra.mxu0 0
        %3190 = vmatpush.bf16.msra.mxu0 %v3107
        %3191 = vmatmul.bf16.gmra.mxu0 %v3121
        %v3192 = vpop.f32.mrf.mxu0
        %v3193 = vadd.f32 0.0, %v3192
        %v3194 = vpop.f32.mrf.mxu0
        %v3195 = vadd.f32 0.0, %v3194
        %3196 = vmatmul.bf16.gmra.mxu0 %v3124
        %v3197 = vpop.f32.mrf.mxu0
        %v3198 = vadd.f32 0.0, %v3197
        %v3199 = vpop.f32.mrf.mxu0
        %v3200 = vadd.f32 0.0, %v3199
        %3201 = vdwg.mxu0
        %3202 = vmatpush.bf16.msra.mxu0 0
        %3203 = vmatpush.bf16.msra.mxu0 0
        %3204 = vmatpush.bf16.msra.mxu0 0
        %3205 = vmatpush.bf16.msra.mxu0 0
        %3206 = vmatpush.bf16.msra.mxu0 0
        %3207 = vmatpush.bf16.msra.mxu0 0
        %3208 = vmatpush.bf16.msra.mxu0 0
        %3209 = vmatpush.bf16.msra.mxu0 %v3108
        %3210 = vmatmul.bf16.gmra.mxu0 %v3121
        %v3211 = vpop.f32.mrf.mxu0
        %v3212 = vadd.f32 0.0, %v3211
        %v3213 = vpop.f32.mrf.mxu0
        %v3214 = vadd.f32 0.0, %v3213
        %3215 = vmatmul.bf16.gmra.mxu0 %v3124
        %v3216 = vpop.f32.mrf.mxu0
        %v3217 = vadd.f32 0.0, %v3216
        %v3218 = vpop.f32.mrf.mxu0
        %v3219 = vadd.f32 0.0, %v3218
        %3220 = vdwg.mxu0
        %3221 = vmatpush.bf16.msra.mxu0 0
        %3222 = vmatpush.bf16.msra.mxu0 0
        %3223 = vmatpush.bf16.msra.mxu0 0
        %3224 = vmatpush.bf16.msra.mxu0 0
        %3225 = vmatpush.bf16.msra.mxu0 0
        %3226 = vmatpush.bf16.msra.mxu0 0
        %3227 = vmatpush.bf16.msra.mxu0 0
        %3228 = vmatpush.bf16.msra.mxu0 %v3109
        %3229 = vmatmul.bf16.gmra.mxu0 %v3121
        %v3230 = vpop.f32.mrf.mxu0
        %v3231 = vadd.f32 0.0, %v3230
        %v3232 = vpop.f32.mrf.mxu0
        %v3233 = vadd.f32 0.0, %v3232
        %3234 = vmatmul.bf16.gmra.mxu0 %v3124
        %v3235 = vpop.f32.mrf.mxu0
        %v3236 = vadd.f32 0.0, %v3235
        %v3237 = vpop.f32.mrf.mxu0
        %v3238 = vadd.f32 0.0, %v3237
        %3239 = vdwg.mxu0
        %v3240 = vmul.f32 %v3136, %v3141
        %v3241 = vmul.f32 %v3138, %v3143
        %v3242 = vmul.f32 %v3155, %v3160
        %v3243 = vmul.f32 %v3157, %v3162
        %v3244 = vadd.f32 %v3240, %v3242
        %v3245 = vadd.f32 %v3241, %v3243
        %v3246 = vmul.f32 %v3174, %v3179
        %v3247 = vmul.f32 %v3176, %v3181
        %v3248 = vadd.f32 %v3244, %v3246
        %v3249 = vadd.f32 %v3245, %v3247
        %v3250 = vmul.f32 %v3141, %v3141
        %v3251 = vmul.f32 %v3143, %v3143
        %v3252 = vmul.f32 %v3160, %v3160
        %v3253 = vmul.f32 %v3162, %v3162
        %v3254 = vadd.f32 %v3250, %v3252
        %v3255 = vadd.f32 %v3251, %v3253
        %v3256 = vmul.f32 %v3179, %v3179
        %v3257 = vmul.f32 %v3181, %v3181
        %v3258 = vadd.f32 %v3254, %v3256
        %v3259 = vadd.f32 %v3255, %v3257
        %v3260 = vadd.f32 %v3258, 1e-06
        %v3261 = vadd.f32 %v3259, 1e-06
        %v3262 = vrcp.pop %v3260
        %v3263 = vrcp.pop %v3261
        %v3264 = vmul.f32 %v3248, %v3262
        %v3265 = vmul.f32 %v3249, %v3263
        %vm3266 = vcmp.ge.f32.partialorder %v3248, 0.0
        %vm3267 = vcmp.ge.f32.partialorder %v3249, 0.0
        %v3268 = vsel %vm3266, 0.0, %v3264
        %v3269 = vsel %vm3267, 0.0, %v3265
        %v3270 = vmul.f32 %v3268, 0.8
        %v3271 = vmul.f32 %v3269, 0.8
        %v3272 = vmul.f32 %v3270, %v3141
        %v3273 = vmul.f32 %v3270, %v3160
        %v3274 = vmul.f32 %v3270, %v3179
        %v3275 = vmul.f32 %v3271, %v3143
        %v3276 = vmul.f32 %v3271, %v3162
        %v3277 = vmul.f32 %v3271, %v3181
        %v3278 = vsub.f32 %v3136, %v3272
        %v3279 = vsub.f32 %v3155, %v3273
        %v3280 = vsub.f32 %v3174, %v3274
        %v3281 = vsub.f32 %v3138, %v3275
        %v3282 = vsub.f32 %v3157, %v3276
        %v3283 = vsub.f32 %v3176, %v3277
        %v3284 = vmul.f32 %v3193, %v3198
        %v3285 = vmul.f32 %v3195, %v3200
        %v3286 = vmul.f32 %v3212, %v3217
        %v3287 = vmul.f32 %v3214, %v3219
        %v3288 = vadd.f32 %v3284, %v3286
        %v3289 = vadd.f32 %v3285, %v3287
        %v3290 = vmul.f32 %v3231, %v3236
        %v3291 = vmul.f32 %v3233, %v3238
        %v3292 = vadd.f32 %v3288, %v3290
        %v3293 = vadd.f32 %v3289, %v3291
        %v3294 = vmul.f32 %v3198, %v3198
        %v3295 = vmul.f32 %v3200, %v3200
        %v3296 = vmul.f32 %v3217, %v3217
        %v3297 = vmul.f32 %v3219, %v3219
        %v3298 = vadd.f32 %v3294, %v3296
        %v3299 = vadd.f32 %v3295, %v3297
        %v3300 = vmul.f32 %v3236, %v3236
        %v3301 = vmul.f32 %v3238, %v3238
        %v3302 = vadd.f32 %v3298, %v3300
        %v3303 = vadd.f32 %v3299, %v3301
        %v3304 = vadd.f32 %v3302, 1e-06
        %v3305 = vadd.f32 %v3303, 1e-06
        %v3306 = vrcp.pop %v3304
        %v3307 = vrcp.pop %v3305
        %v3308 = vmul.f32 %v3292, %v3306
        %v3309 = vmul.f32 %v3293, %v3307
        %vm3310 = vcmp.ge.f32.partialorder %v3292, 0.0
        %vm3311 = vcmp.ge.f32.partialorder %v3293, 0.0
        %v3312 = vsel %vm3310, 0.0, %v3308
        %v3313 = vsel %vm3311, 0.0, %v3309
        %v3314 = vmul.f32 %v3312, 0.8
        %v3315 = vmul.f32 %v3313, 0.8
        %v3316 = vmul.f32 %v3314, %v3198
        %v3317 = vmul.f32 %v3314, %v3217
        %v3318 = vmul.f32 %v3314, %v3236
        %v3319 = vmul.f32 %v3315, %v3200
        %v3320 = vmul.f32 %v3315, %v3219
        %v3321 = vmul.f32 %v3315, %v3238
        %v3322 = vsub.f32 %v3193, %v3316
        %v3323 = vsub.f32 %v3212, %v3317
        %v3324 = vsub.f32 %v3231, %v3318
        %v3325 = vsub.f32 %v3195, %v3319
        %v3326 = vsub.f32 %v3214, %v3320
        %v3327 = vsub.f32 %v3233, %v3321
        %v3328 = vpack.c.bf16 %v3281, %v3278
        %v3329 = vpack.c.bf16 %v3282, %v3279
        %v3330 = vpack.c.bf16 %v3283, %v3280
        %v3331 = vpack.c.bf16 %v3325, %v3322
        %v3332 = vpack.c.bf16 %v3326, %v3323
        %v3333 = vpack.c.bf16 %v3327, %v3324
        %v3336 = vunpack.c.l.b16 %v1978
        %v3337 = vunpack.c.l.b16 %v1979
        %v3338 = vpack.c.b16 %v3337, %v3336
        %v3340 = vsel %vm522, %v3338, 0
        %3342 = vmatpush.bf16.msra.mxu0 0
        %3343 = vmatpush.bf16.msra.mxu0 0
        %3344 = vmatpush.bf16.msra.mxu0 0
        %3345 = vmatpush.bf16.msra.mxu0 0
        %3346 = vmatpush.bf16.msra.mxu0 0
        %3347 = vmatpush.bf16.msra.mxu0 0
        %3348 = vmatpush.bf16.msra.mxu0 0
        %3349 = vmatpush.bf16.msra.mxu0 %v3328
        %3350 = vmatmul.bf16.gmra.mxu0 %v3340
        %v3351 = vpop.f32.mrf.mxu0
        %v3352 = vadd.f32 0.0, %v3351
        %v3353 = vpop.f32.mrf.mxu0
        %v3354 = vadd.f32 0.0, %v3353
        %3355 = vdwg.mxu0
        %3356 = vmatpush.bf16.msra.mxu0 0
        %3357 = vmatpush.bf16.msra.mxu0 0
        %3358 = vmatpush.bf16.msra.mxu0 0
        %3359 = vmatpush.bf16.msra.mxu0 0
        %3360 = vmatpush.bf16.msra.mxu0 0
        %3361 = vmatpush.bf16.msra.mxu0 0
        %3362 = vmatpush.bf16.msra.mxu0 0
        %3363 = vmatpush.bf16.msra.mxu0 %v3329
        %3364 = vmatmul.bf16.gmra.mxu0 %v3340
        %v3365 = vpop.f32.mrf.mxu0
        %v3366 = vadd.f32 0.0, %v3365
        %v3367 = vpop.f32.mrf.mxu0
        %v3368 = vadd.f32 0.0, %v3367
        %3369 = vdwg.mxu0
        %3370 = vmatpush.bf16.msra.mxu0 0
        %3371 = vmatpush.bf16.msra.mxu0 0
        %3372 = vmatpush.bf16.msra.mxu0 0
        %3373 = vmatpush.bf16.msra.mxu0 0
        %3374 = vmatpush.bf16.msra.mxu0 0
        %3375 = vmatpush.bf16.msra.mxu0 0
        %3376 = vmatpush.bf16.msra.mxu0 0
        %3377 = vmatpush.bf16.msra.mxu0 %v3330
        %3378 = vmatmul.bf16.gmra.mxu0 %v3340
        %v3379 = vpop.f32.mrf.mxu0
        %v3380 = vadd.f32 0.0, %v3379
        %v3381 = vpop.f32.mrf.mxu0
        %v3382 = vadd.f32 0.0, %v3381
        %3383 = vdwg.mxu0
        %3384 = vmatpush.bf16.msra.mxu0 0
        %3385 = vmatpush.bf16.msra.mxu0 0
        %3386 = vmatpush.bf16.msra.mxu0 0
        %3387 = vmatpush.bf16.msra.mxu0 0
        %3388 = vmatpush.bf16.msra.mxu0 0
        %3389 = vmatpush.bf16.msra.mxu0 0
        %3390 = vmatpush.bf16.msra.mxu0 0
        %3391 = vmatpush.bf16.msra.mxu0 %v3331
        %3392 = vmatmul.bf16.gmra.mxu0 %v3340
        %v3393 = vpop.f32.mrf.mxu0
        %v3394 = vadd.f32 0.0, %v3393
        %v3395 = vpop.f32.mrf.mxu0
        %v3396 = vadd.f32 0.0, %v3395
        %3397 = vdwg.mxu0
        %3398 = vmatpush.bf16.msra.mxu0 0
        %3399 = vmatpush.bf16.msra.mxu0 0
        %3400 = vmatpush.bf16.msra.mxu0 0
        %3401 = vmatpush.bf16.msra.mxu0 0
        %3402 = vmatpush.bf16.msra.mxu0 0
        %3403 = vmatpush.bf16.msra.mxu0 0
        %3404 = vmatpush.bf16.msra.mxu0 0
        %3405 = vmatpush.bf16.msra.mxu0 %v3332
        %3406 = vmatmul.bf16.gmra.mxu0 %v3340
        %v3407 = vpop.f32.mrf.mxu0
        %v3408 = vadd.f32 0.0, %v3407
        %v3409 = vpop.f32.mrf.mxu0
        %v3410 = vadd.f32 0.0, %v3409
        %3411 = vdwg.mxu0
        %3412 = vmatpush.bf16.msra.mxu0 0
        %3413 = vmatpush.bf16.msra.mxu0 0
        %3414 = vmatpush.bf16.msra.mxu0 0
        %3415 = vmatpush.bf16.msra.mxu0 0
        %3416 = vmatpush.bf16.msra.mxu0 0
        %3417 = vmatpush.bf16.msra.mxu0 0
        %3418 = vmatpush.bf16.msra.mxu0 0
        %3419 = vmatpush.bf16.msra.mxu0 %v3333
        %3420 = vmatmul.bf16.gmra.mxu0 %v3340
        %v3421 = vpop.f32.mrf.mxu0
        %v3422 = vadd.f32 0.0, %v3421
        %v3423 = vpop.f32.mrf.mxu0
        %v3424 = vadd.f32 0.0, %v3423
        %3425 = vdwg.mxu0
        %v3426 = vadd.f32 %v3092, %v3352
        %v3427 = vadd.f32 %v3093, %v3366
        %v3428 = vadd.f32 %v3094, %v3380
        %v3429 = vadd.f32 %v3095, %v3394
        %v3430 = vadd.f32 %v3096, %v3408
        %v3431 = vadd.f32 %v3097, %v3422
        %v3432 = vadd.f32 %v3098, %v3354
        %v3433 = vadd.f32 %v3099, %v3368
        %v3434 = vadd.f32 %v3100, %v3382
        %v3435 = vadd.f32 %v3101, %v3396
        %v3436 = vadd.f32 %v3102, %v3410
        %v3437 = vadd.f32 %v3103, %v3424
        %v3438 = vpack.c.bf16 %v3427, %v3426
        %v3439 = vpack.c.bf16 %v3429, %v3428
        %v3440 = vpack.c.bf16 %v3431, %v3430
        %v3441 = vpack.c.bf16 %v3433, %v3432
        %v3442 = vpack.c.bf16 %v3435, %v3434
        %v3443 = vpack.c.bf16 %v3437, %v3436
        %v3444 = vld [vmem:[%s6] sm:$0x3]
        %v3451 = vunpack.c.l.b16 %v3438
        %v3452 = vunpack.c.h.b16 %v3438
        %v3453 = vunpack.c.l.b16 %v3439
        %v3454 = vunpack.c.h.b16 %v3439
        %v3455 = vunpack.c.l.b16 %v3440
        %v3456 = vunpack.c.h.b16 %v3440
        %v3457 = vunpack.c.l.b16 %v3441
        %v3458 = vunpack.c.h.b16 %v3441
        %v3459 = vunpack.c.l.b16 %v3442
        %v3460 = vunpack.c.h.b16 %v3442
        %v3461 = vunpack.c.l.b16 %v3443
        %v3462 = vunpack.c.h.b16 %v3443
        %v3463 = vpack.c.b16 %v3457, %v3451
        %v3464 = vpack.c.b16 %v3458, %v3452
        %v3465 = vpack.c.b16 %v3459, %v3453
        %v3466 = vpack.c.b16 %v3460, %v3454
        %v3467 = vpack.c.b16 %v3461, %v3455
        %v3468 = vpack.c.b16 %v3462, %v3456
        %v3476 = vsel %vm522, %v3444, 0
        %3478 = vmatpush.bf16.msra.mxu0 0
        %3479 = vmatpush.bf16.msra.mxu0 0
        %3480 = vmatpush.bf16.msra.mxu0 0
        %3481 = vmatpush.bf16.msra.mxu0 0
        %3482 = vmatpush.bf16.msra.mxu0 0
        %3483 = vmatpush.bf16.msra.mxu0 0
        %3484 = vmatpush.bf16.msra.mxu0 0
        %3485 = vmatpush.bf16.msra.mxu0 %v3463
        %3486 = vmatmul.bf16.gmra.mxu0 %v3476
        %v3487 = vpop.f32.mrf.mxu0
        %v3488 = vadd.f32 0.0, %v3487
        %v3489 = vpop.f32.mrf.mxu0
        %3490 = vdwg.mxu0
        %3491 = vmatpush.bf16.msra.mxu0 0
        %3492 = vmatpush.bf16.msra.mxu0 0
        %3493 = vmatpush.bf16.msra.mxu0 0
        %3494 = vmatpush.bf16.msra.mxu0 0
        %3495 = vmatpush.bf16.msra.mxu0 0
        %3496 = vmatpush.bf16.msra.mxu0 0
        %3497 = vmatpush.bf16.msra.mxu0 0
        %3498 = vmatpush.bf16.msra.mxu0 %v3464
        %3499 = vmatmul.bf16.gmra.mxu0 %v3476
        %v3500 = vpop.f32.mrf.mxu0
        %v3501 = vadd.f32 0.0, %v3500
        %v3502 = vpop.f32.mrf.mxu0
        %3503 = vdwg.mxu0
        %3504 = vmatpush.bf16.msra.mxu0 0
        %3505 = vmatpush.bf16.msra.mxu0 0
        %3506 = vmatpush.bf16.msra.mxu0 0
        %3507 = vmatpush.bf16.msra.mxu0 0
        %3508 = vmatpush.bf16.msra.mxu0 0
        %3509 = vmatpush.bf16.msra.mxu0 0
        %3510 = vmatpush.bf16.msra.mxu0 0
        %3511 = vmatpush.bf16.msra.mxu0 %v3465
        %3512 = vmatmul.bf16.gmra.mxu0 %v3476
        %v3513 = vpop.f32.mrf.mxu0
        %v3514 = vadd.f32 0.0, %v3513
        %v3515 = vpop.f32.mrf.mxu0
        %3516 = vdwg.mxu0
        %3517 = vmatpush.bf16.msra.mxu0 0
        %3518 = vmatpush.bf16.msra.mxu0 0
        %3519 = vmatpush.bf16.msra.mxu0 0
        %3520 = vmatpush.bf16.msra.mxu0 0
        %3521 = vmatpush.bf16.msra.mxu0 0
        %3522 = vmatpush.bf16.msra.mxu0 0
        %3523 = vmatpush.bf16.msra.mxu0 0
        %3524 = vmatpush.bf16.msra.mxu0 %v3466
        %3525 = vmatmul.bf16.gmra.mxu0 %v3476
        %v3526 = vpop.f32.mrf.mxu0
        %v3527 = vadd.f32 0.0, %v3526
        %v3528 = vpop.f32.mrf.mxu0
        %3529 = vdwg.mxu0
        %3530 = vmatpush.bf16.msra.mxu0 0
        %3531 = vmatpush.bf16.msra.mxu0 0
        %3532 = vmatpush.bf16.msra.mxu0 0
        %3533 = vmatpush.bf16.msra.mxu0 0
        %3534 = vmatpush.bf16.msra.mxu0 0
        %3535 = vmatpush.bf16.msra.mxu0 0
        %3536 = vmatpush.bf16.msra.mxu0 0
        %3537 = vmatpush.bf16.msra.mxu0 %v3467
        %3538 = vmatmul.bf16.gmra.mxu0 %v3476
        %v3539 = vpop.f32.mrf.mxu0
        %v3540 = vadd.f32 0.0, %v3539
        %v3541 = vpop.f32.mrf.mxu0
        %3542 = vdwg.mxu0
        %3543 = vmatpush.bf16.msra.mxu0 0
        %3544 = vmatpush.bf16.msra.mxu0 0
        %3545 = vmatpush.bf16.msra.mxu0 0
        %3546 = vmatpush.bf16.msra.mxu0 0
        %3547 = vmatpush.bf16.msra.mxu0 0
        %3548 = vmatpush.bf16.msra.mxu0 0
        %3549 = vmatpush.bf16.msra.mxu0 0
        %3550 = vmatpush.bf16.msra.mxu0 %v3468
        %3551 = vmatmul.bf16.gmra.mxu0 %v3476
        %v3552 = vpop.f32.mrf.mxu0
        %v3553 = vadd.f32 0.0, %v3552
        %v3554 = vpop.f32.mrf.mxu0
        %3555 = vdwg.mxu0
        %v3556 = vld [vmem:[%s7] sm:$0x3]
        %v3558 = vsel %vm522, %v3556, 0
        %3560 = vmatpush.bf16.msra.mxu0 0
        %3561 = vmatpush.bf16.msra.mxu0 0
        %3562 = vmatpush.bf16.msra.mxu0 0
        %3563 = vmatpush.bf16.msra.mxu0 0
        %3564 = vmatpush.bf16.msra.mxu0 0
        %3565 = vmatpush.bf16.msra.mxu0 0
        %3566 = vmatpush.bf16.msra.mxu0 0
        %3567 = vmatpush.bf16.msra.mxu0 %v3463
        %3568 = vmatmul.bf16.gmra.mxu0 %v3558
        %v3569 = vpop.f32.mrf.mxu0
        %v3570 = vadd.f32 0.0, %v3569
        %v3571 = vpop.f32.mrf.mxu0
        %3572 = vdwg.mxu0
        %3573 = vmatpush.bf16.msra.mxu0 0
        %3574 = vmatpush.bf16.msra.mxu0 0
        %3575 = vmatpush.bf16.msra.mxu0 0
        %3576 = vmatpush.bf16.msra.mxu0 0
        %3577 = vmatpush.bf16.msra.mxu0 0
        %3578 = vmatpush.bf16.msra.mxu0 0
        %3579 = vmatpush.bf16.msra.mxu0 0
        %3580 = vmatpush.bf16.msra.mxu0 %v3464
        %3581 = vmatmul.bf16.gmra.mxu0 %v3558
        %v3582 = vpop.f32.mrf.mxu0
        %v3583 = vadd.f32 0.0, %v3582
        %v3584 = vpop.f32.mrf.mxu0
        %3585 = vdwg.mxu0
        %3586 = vmatpush.bf16.msra.mxu0 0
        %3587 = vmatpush.bf16.msra.mxu0 0
        %3588 = vmatpush.bf16.msra.mxu0 0
        %3589 = vmatpush.bf16.msra.mxu0 0
        %3590 = vmatpush.bf16.msra.mxu0 0
        %3591 = vmatpush.bf16.msra.mxu0 0
        %3592 = vmatpush.bf16.msra.mxu0 0
        %3593 = vmatpush.bf16.msra.mxu0 %v3465
        %3594 = vmatmul.bf16.gmra.mxu0 %v3558
        %v3595 = vpop.f32.mrf.mxu0
        %v3596 = vadd.f32 0.0, %v3595
        %v3597 = vpop.f32.mrf.mxu0
        %3598 = vdwg.mxu0
        %3599 = vmatpush.bf16.msra.mxu0 0
        %3600 = vmatpush.bf16.msra.mxu0 0
        %3601 = vmatpush.bf16.msra.mxu0 0
        %3602 = vmatpush.bf16.msra.mxu0 0
        %3603 = vmatpush.bf16.msra.mxu0 0
        %3604 = vmatpush.bf16.msra.mxu0 0
        %3605 = vmatpush.bf16.msra.mxu0 0
        %3606 = vmatpush.bf16.msra.mxu0 %v3466
        %3607 = vmatmul.bf16.gmra.mxu0 %v3558
        %v3608 = vpop.f32.mrf.mxu0
        %v3609 = vadd.f32 0.0, %v3608
        %v3610 = vpop.f32.mrf.mxu0
        %3611 = vdwg.mxu0
        %3612 = vmatpush.bf16.msra.mxu0 0
        %3613 = vmatpush.bf16.msra.mxu0 0
        %3614 = vmatpush.bf16.msra.mxu0 0
        %3615 = vmatpush.bf16.msra.mxu0 0
        %3616 = vmatpush.bf16.msra.mxu0 0
        %3617 = vmatpush.bf16.msra.mxu0 0
        %3618 = vmatpush.bf16.msra.mxu0 0
        %3619 = vmatpush.bf16.msra.mxu0 %v3467
        %3620 = vmatmul.bf16.gmra.mxu0 %v3558
        %v3621 = vpop.f32.mrf.mxu0
        %v3622 = vadd.f32 0.0, %v3621
        %v3623 = vpop.f32.mrf.mxu0
        %3624 = vdwg.mxu0
        %3625 = vmatpush.bf16.msra.mxu0 0
        %3626 = vmatpush.bf16.msra.mxu0 0
        %3627 = vmatpush.bf16.msra.mxu0 0
        %3628 = vmatpush.bf16.msra.mxu0 0
        %3629 = vmatpush.bf16.msra.mxu0 0
        %3630 = vmatpush.bf16.msra.mxu0 0
        %3631 = vmatpush.bf16.msra.mxu0 0
        %3632 = vmatpush.bf16.msra.mxu0 %v3468
        %3633 = vmatmul.bf16.gmra.mxu0 %v3558
        %v3634 = vpop.f32.mrf.mxu0
        %v3635 = vadd.f32 0.0, %v3634
        %v3636 = vpop.f32.mrf.mxu0
        %3637 = vdwg.mxu0
        %v3638 = vmul.f32 %v3488, %v3570
        %v3639 = vmul.f32 %v3501, %v3583
        %v3640 = vadd.f32 %v3638, %v3639
        %v3641 = vmul.f32 %v3514, %v3596
        %v3642 = vadd.f32 %v3640, %v3641
        %v3643 = vmul.f32 %v3570, %v3570
        %v3644 = vmul.f32 %v3583, %v3583
        %v3645 = vadd.f32 %v3643, %v3644
        %v3646 = vmul.f32 %v3596, %v3596
        %v3647 = vadd.f32 %v3645, %v3646
        %v3648 = vadd.f32 %v3647, 1e-06
        %v3649 = vrcp.pop %v3648
        %v3650 = vmul.f32 %v3642, %v3649
        %vm3651 = vcmp.ge.f32.partialorder %v3642, 0.0
        %v3652 = vsel %vm3651, 0.0, %v3650
        %v3653 = vmul.f32 %v3652, 0.8
        %v3654 = vmul.f32 %v3653, %v3570
        %v3655 = vmul.f32 %v3653, %v3583
        %v3656 = vmul.f32 %v3653, %v3596
        %v3657 = vsub.f32 %v3488, %v3654
        %v3658 = vsub.f32 %v3501, %v3655
        %v3659 = vsub.f32 %v3514, %v3656
        %v3660 = vmul.f32 %v3527, %v3609
        %v3661 = vmul.f32 %v3540, %v3622
        %v3662 = vadd.f32 %v3660, %v3661
        %v3663 = vmul.f32 %v3553, %v3635
        %v3664 = vadd.f32 %v3662, %v3663
        %v3665 = vmul.f32 %v3609, %v3609
        %v3666 = vmul.f32 %v3622, %v3622
        %v3667 = vadd.f32 %v3665, %v3666
        %v3668 = vmul.f32 %v3635, %v3635
        %v3669 = vadd.f32 %v3667, %v3668
        %v3670 = vadd.f32 %v3669, 1e-06
        %v3671 = vrcp.pop %v3670
        %v3672 = vmul.f32 %v3664, %v3671
        %vm3673 = vcmp.ge.f32.partialorder %v3664, 0.0
        %v3674 = vsel %vm3673, 0.0, %v3672
        %v3675 = vmul.f32 %v3674, 0.8
        %v3676 = vmul.f32 %v3675, %v3609
        %v3677 = vmul.f32 %v3675, %v3622
        %v3678 = vmul.f32 %v3675, %v3635
        %v3679 = vsub.f32 %v3527, %v3676
        %v3680 = vsub.f32 %v3540, %v3677
        %v3681 = vsub.f32 %v3553, %v3678
        %v3682 = vpack.c.bf16 %v3658, %v3657
        %v3683 = vpack.c.bf16 %v3679, %v3659
        %v3684 = vpack.c.bf16 %v3681, %v3680
        %v3687 = vunpack.c.l.b16 %v3682
        %v3688 = vunpack.c.h.b16 %v3682
        %v3689 = vunpack.c.l.b16 %v3683
        %v3690 = vpack.c.b16 %v3687, %v3687
        %v3691 = vpack.c.b16 %v3688, %v3688
        %v3692 = vpack.c.b16 %v3689, %v3689
        %3696 = vmatpush.bf16.xpose.msra.mxu0 0
        %3697 = vmatpush.bf16.xpose.msra.mxu0 0
        %3698 = vmatpush.bf16.xpose.msra.mxu0 0
        %3699 = vmatpush.bf16.xpose.msra.mxu0 0
        %3700 = vmatpush.bf16.xpose.msra.mxu0 0
        %3701 = vmatpush.bf16.xpose.msra.mxu0 0
        %3702 = vmatpush.bf16.xpose.msra.mxu0 0
        %3703 = vmatpush.bf16.xpose.msra.mxu0 %v3463
        %3704 = vmatmul.bf16.gmra.mxu0 %v3690
        %v3705 = vpop.f32.mrf.mxu0
        %v3706 = vadd.f32 0.0, %v3705
        %v3707 = vpop.f32.mrf.mxu0
        %3708 = vdwg.mxu0
        %3709 = vmatpush.bf16.xpose.msra.mxu0 0
        %3710 = vmatpush.bf16.xpose.msra.mxu0 0
        %3711 = vmatpush.bf16.xpose.msra.mxu0 0
        %3712 = vmatpush.bf16.xpose.msra.mxu0 0
        %3713 = vmatpush.bf16.xpose.msra.mxu0 0
        %3714 = vmatpush.bf16.xpose.msra.mxu0 0
        %3715 = vmatpush.bf16.xpose.msra.mxu0 0
        %3716 = vmatpush.bf16.xpose.msra.mxu0 %v3464
        %3717 = vmatmul.bf16.gmra.mxu0 %v3691
        %v3718 = vpop.f32.mrf.mxu0
        %v3719 = vadd.f32 %v3706, %v3718
        %v3720 = vpop.f32.mrf.mxu0
        %3721 = vdwg.mxu0
        %3722 = vmatpush.bf16.xpose.msra.mxu0 0
        %3723 = vmatpush.bf16.xpose.msra.mxu0 0
        %3724 = vmatpush.bf16.xpose.msra.mxu0 0
        %3725 = vmatpush.bf16.xpose.msra.mxu0 0
        %3726 = vmatpush.bf16.xpose.msra.mxu0 0
        %3727 = vmatpush.bf16.xpose.msra.mxu0 0
        %3728 = vmatpush.bf16.xpose.msra.mxu0 0
        %3729 = vmatpush.bf16.xpose.msra.mxu0 %v3465
        %3730 = vmatmul.bf16.gmra.mxu0 %v3692
        %v3731 = vpop.f32.mrf.mxu0
        %v3732 = vadd.f32 %v3719, %v3731
        %v3733 = vpop.f32.mrf.mxu0
        %3734 = vdwg.mxu0
        %v3735 = vmul.f32 %v3732, 0.0078125
        %v3736 = vld [vmem:[%s9] sm:$0x1]
        %v3737 = vld [vmem:[%s8] sm:$0xff]
        %v3738 = vld [vmem:[%s8 + $0x8] sm:$0xff]
        %v3740 = vsel %vm522, %v3735, 0
        %3742 = vmatpush.msra.mxu0 0.0
        %3743 = vmatpush.msra.mxu0 0.0
        %3744 = vmatpush.msra.mxu0 0.0
        %3745 = vmatpush.msra.mxu0 0.0
        %3746 = vmatpush.msra.mxu0 0.0
        %3747 = vmatpush.msra.mxu0 0.0
        %3748 = vmatpush.msra.mxu0 0.0
        %3749 = vmatpush.msra.mxu0 0.0
        %3750 = vmatpush.msra.mxu0 0.0
        %3751 = vmatpush.msra.mxu0 0.0
        %3752 = vmatpush.msra.mxu0 0.0
        %3753 = vmatpush.msra.mxu0 0.0
        %3754 = vmatpush.msra.mxu0 0.0
        %3755 = vmatpush.msra.mxu0 0.0
        %3756 = vmatpush.msra.mxu0 %v3738
        %3757 = vmatpush.msra.mxu0 %v3737
        %3758 = vmatmul.f32.gmra.mxu0 %v3740
        %v3759 = vpop.f32.mrf.mxu0
        %v3760 = vadd.f32 0.0, %v3759
        %3761 = vdwg.mxu0
        %v3762 = vadd.f32 %v3736, %v3760
        %s3763 = scalar_lea.vmem %s8, 16
        %v3764 = vld [vmem:[%s3763] sm:$0xff]
        %v3765 = vld [vmem:[%s3763 + $0x8] sm:$0xff]
        %v3766 = vrot.slane %v3735, 1
        %v3767 = vsel %vm522, %v3766, 0
        %3769 = vmatpush.msra.mxu0 0.0
        %3770 = vmatpush.msra.mxu0 0.0
        %3771 = vmatpush.msra.mxu0 0.0
        %3772 = vmatpush.msra.mxu0 0.0
        %3773 = vmatpush.msra.mxu0 0.0
        %3774 = vmatpush.msra.mxu0 0.0
        %3775 = vmatpush.msra.mxu0 0.0
        %3776 = vmatpush.msra.mxu0 0.0
        %3777 = vmatpush.msra.mxu0 0.0
        %3778 = vmatpush.msra.mxu0 0.0
        %3779 = vmatpush.msra.mxu0 0.0
        %3780 = vmatpush.msra.mxu0 0.0
        %3781 = vmatpush.msra.mxu0 0.0
        %3782 = vmatpush.msra.mxu0 0.0
        %3783 = vmatpush.msra.mxu0 %v3765
        %3784 = vmatpush.msra.mxu0 %v3764
        %3785 = vmatmul.f32.gmra.mxu0 %v3767
        %v3786 = vpop.f32.mrf.mxu0
        %v3787 = vadd.f32 0.0, %v3786
        %3788 = vdwg.mxu0
        %v3789 = vadd.f32 %v3762, %v3787
        %s3790 = scalar_lea.vmem %s8, 32
        %v3791 = vld [vmem:[%s3790] sm:$0xff]
        %v3792 = vld [vmem:[%s3790 + $0x8] sm:$0xff]
        %v3793 = vrot.slane %v3735, 2
        %v3794 = vsel %vm522, %v3793, 0
        %3796 = vmatpush.msra.mxu0 0.0
        %3797 = vmatpush.msra.mxu0 0.0
        %3798 = vmatpush.msra.mxu0 0.0
        %3799 = vmatpush.msra.mxu0 0.0
        %3800 = vmatpush.msra.mxu0 0.0
        %3801 = vmatpush.msra.mxu0 0.0
        %3802 = vmatpush.msra.mxu0 0.0
        %3803 = vmatpush.msra.mxu0 0.0
        %3804 = vmatpush.msra.mxu0 0.0
        %3805 = vmatpush.msra.mxu0 0.0
        %3806 = vmatpush.msra.mxu0 0.0
        %3807 = vmatpush.msra.mxu0 0.0
        %3808 = vmatpush.msra.mxu0 0.0
        %3809 = vmatpush.msra.mxu0 0.0
        %3810 = vmatpush.msra.mxu0 %v3792
        %3811 = vmatpush.msra.mxu0 %v3791
        %3812 = vmatmul.f32.gmra.mxu0 %v3794
        %v3813 = vpop.f32.mrf.mxu0
        %v3814 = vadd.f32 0.0, %v3813
        %3815 = vdwg.mxu0
        %v3816 = vadd.f32 %v3789, %v3814
        %vm3817 = vcmp.ge.f32.partialorder %v3816, 0.0
        %v3818 = vmul.f32 %v3816, 0.01
        %v3819 = vsel %vm3817, %v3816, %v3818
        %v3820 = vld [vmem:[%s10] sm:$0xff]
        %v3821 = vld [vmem:[%s10 + $0x8] sm:$0xff]
        %v3822 = vld [vmem:[%s10 + $0x10] sm:$0xff]
        %v3823 = vld [vmem:[%s10 + $0x18] sm:$0xff]
        %v3824 = vld [vmem:[%s11] sm:$0x1]
        %vm3825 = vcmask 261120
        %v3827 = vsel %vm3825, %v3819, 0
        %3829 = vmatpush.msra.mxu0 0.0
        %3830 = vmatpush.msra.mxu0 0.0
        %3831 = vmatpush.msra.mxu0 0.0
        %3832 = vmatpush.msra.mxu0 0.0
        %3833 = vmatpush.msra.mxu0 0.0
        %3834 = vmatpush.msra.mxu0 0.0
        %3835 = vmatpush.msra.mxu0 0.0
        %3836 = vmatpush.msra.mxu0 0.0
        %3837 = vmatpush.msra.mxu0 0.0
        %3838 = vmatpush.msra.mxu0 0.0
        %3839 = vmatpush.msra.mxu0 0.0
        %3840 = vmatpush.msra.mxu0 0.0
        %3841 = vmatpush.msra.mxu0 %v3823
        %3842 = vmatpush.msra.mxu0 %v3822
        %3843 = vmatpush.msra.mxu0 %v3821
        %3844 = vmatpush.msra.mxu0 %v3820
        %3845 = vmatmul.f32.gmra.mxu0 %v3827
        %v3846 = vpop.f32.mrf.mxu0
        %v3847 = vadd.f32 %v3824, %v3846
        %3848 = vdwg.mxu0
        %v3850 = vunpack.c.h.b16 %v3683
        %v3851 = vunpack.c.l.b16 %v3684
        %v3852 = vunpack.c.h.b16 %v3684
        %v3853 = vpack.c.b16 %v3850, %v3850
        %v3854 = vpack.c.b16 %v3851, %v3851
        %v3855 = vpack.c.b16 %v3852, %v3852
        %3859 = vmatpush.bf16.xpose.msra.mxu0 0
        %3860 = vmatpush.bf16.xpose.msra.mxu0 0
        %3861 = vmatpush.bf16.xpose.msra.mxu0 0
        %3862 = vmatpush.bf16.xpose.msra.mxu0 0
        %3863 = vmatpush.bf16.xpose.msra.mxu0 0
        %3864 = vmatpush.bf16.xpose.msra.mxu0 0
        %3865 = vmatpush.bf16.xpose.msra.mxu0 0
        %3866 = vmatpush.bf16.xpose.msra.mxu0 %v3466
        %3867 = vmatmul.bf16.gmra.mxu0 %v3853
        %v3868 = vpop.f32.mrf.mxu0
        %v3869 = vadd.f32 0.0, %v3868
        %v3870 = vpop.f32.mrf.mxu0
        %3871 = vdwg.mxu0
        %3872 = vmatpush.bf16.xpose.msra.mxu0 0
        %3873 = vmatpush.bf16.xpose.msra.mxu0 0
        %3874 = vmatpush.bf16.xpose.msra.mxu0 0
        %3875 = vmatpush.bf16.xpose.msra.mxu0 0
        %3876 = vmatpush.bf16.xpose.msra.mxu0 0
        %3877 = vmatpush.bf16.xpose.msra.mxu0 0
        %3878 = vmatpush.bf16.xpose.msra.mxu0 0
        %3879 = vmatpush.bf16.xpose.msra.mxu0 %v3467
        %3880 = vmatmul.bf16.gmra.mxu0 %v3854
        %v3881 = vpop.f32.mrf.mxu0
        %v3882 = vadd.f32 %v3869, %v3881
        %v3883 = vpop.f32.mrf.mxu0
        %3884 = vdwg.mxu0
        %3885 = vmatpush.bf16.xpose.msra.mxu0 0
        %3886 = vmatpush.bf16.xpose.msra.mxu0 0
        %3887 = vmatpush.bf16.xpose.msra.mxu0 0
        %3888 = vmatpush.bf16.xpose.msra.mxu0 0
        %3889 = vmatpush.bf16.xpose.msra.mxu0 0
        %3890 = vmatpush.bf16.xpose.msra.mxu0 0
        %3891 = vmatpush.bf16.xpose.msra.mxu0 0
        %3892 = vmatpush.bf16.xpose.msra.mxu0 %v3468
        %3893 = vmatmul.bf16.gmra.mxu0 %v3855
        %v3894 = vpop.f32.mrf.mxu0
        %v3895 = vadd.f32 %v3882, %v3894
        %v3896 = vpop.f32.mrf.mxu0
        %3897 = vdwg.mxu0
        %v3898 = vmul.f32 %v3895, 0.0078125
        %v3900 = vsel %vm522, %v3898, 0
        %3902 = vmatpush.msra.mxu0 0.0
        %3903 = vmatpush.msra.mxu0 0.0
        %3904 = vmatpush.msra.mxu0 0.0
        %3905 = vmatpush.msra.mxu0 0.0
        %3906 = vmatpush.msra.mxu0 0.0
        %3907 = vmatpush.msra.mxu0 0.0
        %3908 = vmatpush.msra.mxu0 0.0
        %3909 = vmatpush.msra.mxu0 0.0
        %3910 = vmatpush.msra.mxu0 0.0
        %3911 = vmatpush.msra.mxu0 0.0
        %3912 = vmatpush.msra.mxu0 0.0
        %3913 = vmatpush.msra.mxu0 0.0
        %3914 = vmatpush.msra.mxu0 0.0
        %3915 = vmatpush.msra.mxu0 0.0
        %3916 = vmatpush.msra.mxu0 %v3738
        %3917 = vmatpush.msra.mxu0 %v3737
        %3918 = vmatmul.f32.gmra.mxu0 %v3900
        %v3919 = vpop.f32.mrf.mxu0
        %v3920 = vadd.f32 0.0, %v3919
        %3921 = vdwg.mxu0
        %v3922 = vadd.f32 %v3736, %v3920
        %v3923 = vrot.slane %v3898, 1
        %v3924 = vsel %vm522, %v3923, 0
        %3926 = vmatpush.msra.mxu0 0.0
        %3927 = vmatpush.msra.mxu0 0.0
        %3928 = vmatpush.msra.mxu0 0.0
        %3929 = vmatpush.msra.mxu0 0.0
        %3930 = vmatpush.msra.mxu0 0.0
        %3931 = vmatpush.msra.mxu0 0.0
        %3932 = vmatpush.msra.mxu0 0.0
        %3933 = vmatpush.msra.mxu0 0.0
        %3934 = vmatpush.msra.mxu0 0.0
        %3935 = vmatpush.msra.mxu0 0.0
        %3936 = vmatpush.msra.mxu0 0.0
        %3937 = vmatpush.msra.mxu0 0.0
        %3938 = vmatpush.msra.mxu0 0.0
        %3939 = vmatpush.msra.mxu0 0.0
        %3940 = vmatpush.msra.mxu0 %v3765
        %3941 = vmatpush.msra.mxu0 %v3764
        %3942 = vmatmul.f32.gmra.mxu0 %v3924
        %v3943 = vpop.f32.mrf.mxu0
        %v3944 = vadd.f32 0.0, %v3943
        %3945 = vdwg.mxu0
        %v3946 = vadd.f32 %v3922, %v3944
        %v3947 = vrot.slane %v3898, 2
        %v3948 = vsel %vm522, %v3947, 0
        %3950 = vmatpush.msra.mxu0 0.0
        %3951 = vmatpush.msra.mxu0 0.0
        %3952 = vmatpush.msra.mxu0 0.0
        %3953 = vmatpush.msra.mxu0 0.0
        %3954 = vmatpush.msra.mxu0 0.0
        %3955 = vmatpush.msra.mxu0 0.0
        %3956 = vmatpush.msra.mxu0 0.0
        %3957 = vmatpush.msra.mxu0 0.0
        %3958 = vmatpush.msra.mxu0 0.0
        %3959 = vmatpush.msra.mxu0 0.0
        %3960 = vmatpush.msra.mxu0 0.0
        %3961 = vmatpush.msra.mxu0 0.0
        %3962 = vmatpush.msra.mxu0 0.0
        %3963 = vmatpush.msra.mxu0 0.0
        %3964 = vmatpush.msra.mxu0 %v3792
        %3965 = vmatpush.msra.mxu0 %v3791
        %3966 = vmatmul.f32.gmra.mxu0 %v3948
        %v3967 = vpop.f32.mrf.mxu0
        %v3968 = vadd.f32 0.0, %v3967
        %3969 = vdwg.mxu0
        %v3970 = vadd.f32 %v3946, %v3968
        %vm3971 = vcmp.ge.f32.partialorder %v3970, 0.0
        %v3972 = vmul.f32 %v3970, 0.01
        %v3973 = vsel %vm3971, %v3970, %v3972
        %v3975 = vsel %vm3825, %v3973, 0
        %3977 = vmatpush.msra.mxu0 0.0
        %3978 = vmatpush.msra.mxu0 0.0
        %3979 = vmatpush.msra.mxu0 0.0
        %3980 = vmatpush.msra.mxu0 0.0
        %3981 = vmatpush.msra.mxu0 0.0
        %3982 = vmatpush.msra.mxu0 0.0
        %3983 = vmatpush.msra.mxu0 0.0
        %3984 = vmatpush.msra.mxu0 0.0
        %3985 = vmatpush.msra.mxu0 0.0
        %3986 = vmatpush.msra.mxu0 0.0
        %3987 = vmatpush.msra.mxu0 0.0
        %3988 = vmatpush.msra.mxu0 0.0
        %3989 = vmatpush.msra.mxu0 %v3823
        %3990 = vmatpush.msra.mxu0 %v3822
        %3991 = vmatpush.msra.mxu0 %v3821
        %3992 = vmatpush.msra.mxu0 %v3820
        %3993 = vmatmul.f32.gmra.mxu0 %v3975
        %v3994 = vpop.f32.mrf.mxu0
        %v3995 = vadd.f32 %v3824, %v3994
        %3996 = vdwg.mxu0
        %v3998 = vrot.slane %v3995, 7
        %vm4000 = vcmask 1040384
        %v4001 = vsel %vm4000, %v3847, %v3998
        %4002 = vst [vmem:[%s447] sm:$0x3] %v4001
        %s4003 = sand.u32 %s295, 1
        %s4004 = scalar_lea.sflag [#allocation4], %s4003
        %s4005 = sand.u32 %s295, 1
        %s4006 = smul.addr %s4005, 2
        %s4007 = scalar_lea.vmem [#allocation7], %s4006
        // Predicated region
        $region77: #{model_forward.1} parent=67 // pred_check
          %p4008 = pneg %p305
        $region78: #{model_forward.1} parent=67 // pred_check_branch
          %4010 = sbr.rel (%p4008) target = $region80
        $region79: #{model_forward.1} parent=67 // pred_region
          %4012 = vsyncadd %s4004, 0
          %s4013 = smul.addr %s30, 2
          %s4014 = scalar_lea.hbm %s12, %s4013
          %s4016 = sshll.u32 %s4007, 4
          %s4017 = int_to_ptr.vmem [resolvable:$true] %s4016
          %s4018 = sshll.u32 %s4014, 4
          %s4019 = int_to_ptr.hbm [resolvable:$true] %s4018
          %4021 = dma.vmem_to_hbm [thread:$0]  %s4017, 32, %s4019, %s4004
        $region80: #{model_forward.1} parent=67 // pred_fallthru
          _
      $region68: #{model_forward.1} parent=5 // pred_fallthru
        _
      %p4022 = scmp.le.s32.totalorder 2, %s25
      // Predicated region
      $region81: #{model_forward.1} parent=5 // pred_check
        %p4023 = pneg %p4022
      $region82: #{model_forward.1} parent=5 // pred_check_branch
        %4025 = sbr.rel (%p4023) target = $region84
      $region83: #{model_forward.1} parent=5 // pred_region
        %s4026 = ssub.s32 %s25, 2
        // Predicated region
        $region85: #{model_forward.1} parent=83 // pred_check
          %p4027 = pneg %p311
        $region86: #{model_forward.1} parent=83 // pred_check_branch
          %4029 = sbr.rel (%p4027) target = $region88
        $region87: #{model_forward.1} parent=83 // pred_region
          %s4030 = sand.u32 %s296, 1
          %s4031 = scalar_lea.sflag [#allocation4], %s4030
          %s4032 = sand.u32 %s296, 1
          %s4033 = smul.addr %s4032, 2
          %s4034 = scalar_lea.vmem [#allocation7], %s4033
          %4036 = dma.done %s4031, 32
        $region88: #{model_forward.1} parent=83 // pred_fallthru
          _
      $region84: #{model_forward.1} parent=5 // pred_fallthru
        _
    $region6: #{model_forward.1} parent=1 // loop_footer
      %s29 = sadd.s32 1, %s25
    $region7: #{model_forward.1} parent=1 // loop_footer_branch
      %24 = sbr.rel target = $region3
    $region8: #{model_forward.1} parent=1 // loop_exit
      _
    %4037 = vsyncpa [#allocation3], 1
    %s4038 = scalar_lea.sflag [#allocation3], 1
    %4039 = vsyncpa %s4038, 1
    %4040 = vsyncpa [#allocation6], 1
    %4041 = vsyncpa [#allocation4], 1
    %s4042 = scalar_lea.sflag [#allocation4], 1
    %4043 = vsyncpa %s4042, 1

</llo_original>
